<compile_context>
chip_gen: v7x
topology: tpu7x:2x2x1
jax: 0.10.0
libtpu: 0.0.40
codegen_flags: <defaults>
</compile_context>

<pallas_src>
import functools
import math

import jax
import jax.numpy as jnp
from jax import lax
from jax.experimental import pallas as pl
from jax.experimental.pallas import tpu as pltpu

# ---------------- config (small, consistent with the module) ----------------
EMBED_DIM = 32
VISION_WIDTH = 32
CONTEXT_LENGTH = 8
VOCAB_SIZE = 64
T_WIDTH = 32
T_HEADS = 4
T_LAYERS = 2
SSL_MLP_DIM = 64
SSL_EMB_DIM = 32          # == EMBED_DIM, so one 32-lane output slab fits all rows
IMG_C, IMG_H, IMG_W = 3, 16, 16
LN_EPS = 1e-5
BN_EPS = 1e-5


def _vmem():
    return pl.BlockSpec(memory_space=pltpu.MemorySpace.VMEM)


def _ln(v, g, b):
    mu = jnp.mean(v, axis=-1, keepdims=True)
    var = jnp.mean((v - mu) ** 2, axis=-1, keepdims=True)
    return (v - mu) * lax.rsqrt(var + LN_EPS) * g + b


# ------------------------------- fused kernel --------------------------------
def slip_kernel(eot_ref, x_text_ref,
                w_qkv_ref, b_qkv_ref, w_o_ref, vec_d_ref,
                w_fc_ref, b_fc_ref, w_proj_ref, lnf_ref, tproj_ref,
                img_ref, aug1_ref, aug2_ref,
                vw_ref, iproj_ref, w1_ref, w2_ref, w3_ref,
                vec64_ref, vec32_ref,
                o_ref, *, n_layers, n_head):
    """One kernel, two grid points.

    program 0: CLIP text tower (2 residual attention blocks, final LN,
               EOT pooling, text_projection) -> out block 0 rows [0:B].
    program 1: stand-in visual Linear, image_projection, batched SSL MLP with
               per-augmentation BatchNorm stats -> out block 1 rows
               [0:B | B:2B | 2B:3B] = image / aug1 / aug2 embeds.
    Output blocks are disjoint per grid point, so the grid axis is "parallel"
    (both v7x TensorCores can run simultaneously).
    """
    pid = pl.program_id(0)
    e_dim = o_ref.shape[-1]
    out_rows = o_ref.shape[1]

    # -------------------------- text path (program 0) ------------------------
    @pl.when(pid == 0)
    def _text():
        B, L, D = x_text_ref.shape
        hd = D // n_head

        x = x_text_ref[...].astype(jnp.float32)                  # (B, L, D)

        # Causal mask (large finite negative, never NaN), built once.
        row = lax.broadcasted_iota(jnp.int32, (L, L), 0)
        col = lax.broadcasted_iota(jnp.int32, (L, L), 1)
        mask = jnp.where(col > row, -1e30, 0.0).astype(jnp.float32)

        for layer in range(n_layers):                            # static unroll
            vd = vec_d_ref[layer]                                # (6, D) f32
            ln1_g, ln1_b = vd[0:1], vd[1:2]
            bo = vd[2:3]
            ln2_g, ln2_b = vd[3:4], vd[4:5]
            bproj = vd[5:6]

            w_qkv = w_qkv_ref[layer]                             # (D, 3D) bf16
            b_qkv = b_qkv_ref[layer]                             # (1, 3D) f32
            w_o = w_o_ref[layer]                                 # (D, D)  bf16
            w_fc = w_fc_ref[layer]                               # (D, 4D) bf16
            b_fc = b_fc_ref[layer]                               # (1, 4D) f32
            w_pj = w_proj_ref[layer]                             # (4D, D) bf16

            # ---- attention branch (fused QKV, per-head Wo accumulation) ----
            h = _ln(x, ln1_g, ln1_b).reshape(B * L, D)
            qkv = jnp.dot(h.astype(jnp.bfloat16), w_qkv,
                          preferred_element_type=jnp.float32) + b_qkv
            qkv = qkv.reshape(B, L, 3 * D)                       # q|k|v along lanes

            attn = jnp.zeros((B * L, D), jnp.float32)
            for hh in range(n_head):                             # static loop (4)
                s0 = hh * hd
                qh = qkv[:, :, s0:s0 + hd]                       # scale folded into Wq
                kh = qkv[:, :, D + s0:D + s0 + hd]
                vh = qkv[:, :, 2 * D + s0:2 * D + s0 + hd]
                sc = jnp.einsum('bqd,bkd->bqk',
                                qh.astype(jnp.bfloat16), kh.astype(jnp.bfloat16),
                                preferred_element_type=jnp.float32) + mask
                m = jnp.max(sc, axis=-1, keepdims=True)
                e = jnp.exp(sc - m)
                p = e / jnp.sum(e, axis=-1, keepdims=True)
                oh = jnp.einsum('bqk,bkd->bqd',
                                p.astype(jnp.bfloat16), vh.astype(jnp.bfloat16),
                                preferred_element_type=jnp.float32)   # (B, L, hd)
                # project this head through the matching 8-row slice of W_o
                attn = attn + jnp.dot(
                    oh.reshape(B * L, hd).astype(jnp.bfloat16),
                    w_o[s0:s0 + hd, :], preferred_element_type=jnp.float32)
            x = x + (attn + bo).reshape(B, L, D)

            # ---- MLP branch ----
            h2 = _ln(x, ln2_g, ln2_b).reshape(B * L, D)
            fc = jnp.dot(h2.astype(jnp.bfloat16), w_fc,
                         preferred_element_type=jnp.float32) + b_fc
            fc = fc * jax.nn.sigmoid(1.702 * fc)                 # QuickGELU (f32)
            mlp = jnp.dot(fc.astype(jnp.bfloat16), w_pj,
                          preferred_element_type=jnp.float32) + bproj
            x = x + mlp.reshape(B, L, D)

        lnf = lnf_ref[...]                                       # (2, D)
        xf = _ln(x, lnf[0:1], lnf[1:2])                          # (B, L, D)

        # Vectorized EOT pooling: mask built from iota vs eot ids (VMEM int32).
        eot = eot_ref[...]                                       # (B, 1) int32
        l_iota = lax.broadcasted_iota(jnp.int32, (B, L), 1)
        sel = (l_iota == eot).astype(jnp.float32)                # (B, L)
        pooled = jnp.sum(xf * sel[:, :, None], axis=1)           # (B, D)

        text_embed = jnp.dot(pooled.astype(jnp.bfloat16), tproj_ref[...],
                             preferred_element_type=jnp.float32)  # (B, E)
        pad = jnp.zeros((out_rows - B, e_dim), jnp.float32)
        o_ref[0] = jnp.concatenate([text_embed, pad], axis=0).astype(o_ref.dtype)

    # ---------------------- image + SSL path (program 1) ---------------------
    @pl.when(pid == 1)
    def _image():
        Bi = img_ref.shape[0]
        vw = vw_ref[...]                                         # (CHW, VW) bf16
        v32 = vec32_ref[...]                                     # (2, VW) f32
        vb, b3 = v32[0:1], v32[1:2]
        v64 = vec64_ref[...]                                     # (6, MLP) f32
        b1, g1, be1 = v64[0:1], v64[1:2], v64[2:3]
        b2, g2, be2 = v64[3:4], v64[4:5], v64[5:6]

        img = img_ref[...].astype(jnp.bfloat16)                  # (B, CHW)
        a1 = aug1_ref[...].astype(jnp.bfloat16)
        a2 = aug2_ref[...].astype(jnp.bfloat16)

        # image rows: visual Linear + image_projection
        feats_img = jnp.dot(img, vw, preferred_element_type=jnp.float32) + vb
        img_e = jnp.dot(feats_img.astype(jnp.bfloat16), iproj_ref[...],
                        preferred_element_type=jnp.float32)      # (B, E)

        # aug rows: visual Linear once on the stacked batch, then batched SSL MLP
        aug = jnp.concatenate([a1, a2], axis=0)                  # (2B, CHW)
        feats = jnp.dot(aug, vw, preferred_element_type=jnp.float32) + vb

        def bn_relu(h, g, be):
            # per-augmentation batch statistics (train-mode, biased variance)
            hr = h.reshape(2, Bi, h.shape[-1])
            mu = jnp.mean(hr, axis=1, keepdims=True)
            var = jnp.mean((hr - mu) ** 2, axis=1, keepdims=True)
            hn = (hr - mu) * lax.rsqrt(var + BN_EPS) * g + be
            return jnp.maximum(hn, 0.0).reshape(2 * Bi, h.shape[-1])

        h = jnp.dot(feats.astype(jnp.bfloat16), w1_ref[...],
                    preferred_element_type=jnp.float32) + b1
        h = bn_relu(h, g1, be1)
        h = jnp.dot(h.astype(jnp.bfloat16), w2_ref[...],
                    preferred_element_type=jnp.float32) + b2
        h = bn_relu(h, g2, be2)
        aug_e = jnp.dot(h.astype(jnp.bfloat16), w3_ref[...],
                        preferred_element_type=jnp.float32) + b3  # (2B, E)

        o_ref[0] = jnp.concatenate([img_e, aug_e], axis=0).astype(o_ref.dtype)


# ------------------------------ parameters ----------------------------------
def init_params(key):
    keys = iter(jax.random.split(key, 64))

    def nrm(shape, std):
        return jax.random.normal(next(keys), shape, jnp.float32) * std

    D, nl = T_WIDTH, T_LAYERS
    p = {}
    # TODO(synk): vision_model is an injected nn.Module in SLIP (not defined in
    # the module itself); use a deterministic stand-in Linear(C*H*W -> vision_width).
    vis_in = IMG_C * IMG_H * IMG_W
    p['visual_w'] = nrm((vis_in, VISION_WIDTH), vis_in ** -0.5).astype(jnp.bfloat16)

    p['token_embedding'] = nrm((VOCAB_SIZE, D), 0.02)
    p['positional_embedding'] = nrm((CONTEXT_LENGTH, D), 0.01)

    proj_std = (D ** -0.5) * ((2 * nl) ** -0.5)
    attn_std = D ** -0.5
    fc_std = (2 * D) ** -0.5
    head_scale = (D // T_HEADS) ** -0.5

    w_qkv, b_qkv, w_o, vec_d, w_fc, b_fc, w_proj = [], [], [], [], [], [], []
    for _ in range(nl):
        # torch in_proj_weight is (3D, D) row-split into Wq/Wk/Wv (out x in);
        # store transposed (in, out), fuse along lanes, fold the 1/sqrt(hd)
        # scale into the Q columns (and Q bias, zero at init).
        w_in = nrm((3 * D, D), attn_std)
        wq = w_in[:D].T * head_scale
        wk = w_in[D:2 * D].T
        wv = w_in[2 * D:].T
        w_qkv.append(jnp.concatenate([wq, wk, wv], axis=1))          # (D, 3D)
        b_qkv.append(jnp.zeros((1, 3 * D), jnp.float32))             # bq*scale|bk|bv
        w_o.append(nrm((D, D), proj_std).T)                          # (in, out)
        vec_d.append(jnp.stack([
            jnp.ones((D,), jnp.float32),    # ln1_g
            jnp.zeros((D,), jnp.float32),   # ln1_b
            jnp.zeros((D,), jnp.float32),   # bo
            jnp.ones((D,), jnp.float32),    # ln2_g
            jnp.zeros((D,), jnp.float32),   # ln2_b
            jnp.zeros((D,), jnp.float32),   # bproj
        ], axis=0))                                                  # (6, D)
        w_fc.append(nrm((4 * D, D), fc_std).T)                       # (D, 4D)
        b_fc.append(jnp.zeros((1, 4 * D), jnp.float32))
        w_proj.append(nrm((D, 4 * D), proj_std).T)                   # (4D, D)

    p['w_qkv'] = jnp.stack(w_qkv).astype(jnp.bfloat16)               # (nl, D, 3D)
    p['b_qkv'] = jnp.stack(b_qkv)                                    # (nl, 1, 3D)
    p['w_o'] = jnp.stack(w_o).astype(jnp.bfloat16)                   # (nl, D, D)
    p['vec_d'] = jnp.stack(vec_d)                                    # (nl, 6, D)
    p['w_fc'] = jnp.stack(w_fc).astype(jnp.bfloat16)                 # (nl, D, 4D)
    p['b_fc'] = jnp.stack(b_fc)                                      # (nl, 1, 4D)
    p['w_proj'] = jnp.stack(w_proj).astype(jnp.bfloat16)             # (nl, 4D, D)

    p['lnf'] = jnp.stack([jnp.ones((D,), jnp.float32),
                          jnp.zeros((D,), jnp.float32)])             # (2, D)
    p['image_projection'] = nrm((VISION_WIDTH, EMBED_DIM),
                                VISION_WIDTH ** -0.5).astype(jnp.bfloat16)
    p['text_projection'] = nrm((D, EMBED_DIM), D ** -0.5).astype(jnp.bfloat16)
    p['logit_scale'] = jnp.asarray(math.log(1.0 / 0.07), jnp.float32)

    # SSL image MLP
    p['mlp_w1'] = nrm((VISION_WIDTH, SSL_MLP_DIM),
                      VISION_WIDTH ** -0.5).astype(jnp.bfloat16)
    p['mlp_w2'] = nrm((SSL_MLP_DIM, SSL_MLP_DIM),
                      SSL_MLP_DIM ** -0.5).astype(jnp.bfloat16)
    p['mlp_w3'] = nrm((SSL_MLP_DIM, SSL_EMB_DIM),
                      SSL_MLP_DIM ** -0.5).astype(jnp.bfloat16)
    # width-64 vector slab: [b1, g1, be1, b2, g2, be2]
    p['ssl_vec64'] = jnp.stack([
        jnp.zeros((SSL_MLP_DIM,), jnp.float32), jnp.ones((SSL_MLP_DIM,), jnp.float32),
        jnp.zeros((SSL_MLP_DIM,), jnp.float32), jnp.zeros((SSL_MLP_DIM,), jnp.float32),
        jnp.ones((SSL_MLP_DIM,), jnp.float32), jnp.zeros((SSL_MLP_DIM,), jnp.float32)])
    # width-32 vector slab: [visual bias, mlp_b3]
    p['img_vec32'] = jnp.zeros((2, VISION_WIDTH), jnp.float32)
    return p


# ------------------------------- forward ------------------------------------
def slip_forward(params, image, text, aug1, aug2):
    B, L = text.shape
    # glue: token-embedding gather + positional add + EOT index (argmax of ids)
    x = jnp.take(params['token_embedding'], text, axis=0)
    x = x + params['positional_embedding'][None, :, :]
    eot = jnp.argmax(text, axis=-1).astype(jnp.int32).reshape(B, 1)

    args = (eot, x,
            params['w_qkv'], params['b_qkv'], params['w_o'], params['vec_d'],
            params['w_fc'], params['b_fc'], params['w_proj'],
            params['lnf'], params['text_projection'],
            image.reshape(B, -1), aug1.reshape(B, -1), aug2.reshape(B, -1),
            params['visual_w'], params['image_projection'],
            params['mlp_w1'], params['mlp_w2'], params['mlp_w3'],
            params['ssl_vec64'], params['img_vec32'])

    kernel = functools.partial(slip_kernel, n_layers=T_LAYERS, n_head=T_HEADS)
    out = pl.pallas_call(
        kernel,
        out_shape=jax.ShapeDtypeStruct((2, 3 * B, EMBED_DIM), jnp.float32),
        grid=(2,),
        in_specs=[_vmem() for _ in args],
        out_specs=pl.BlockSpec((1, 3 * B, EMBED_DIM), lambda i: (i, 0, 0)),
        compiler_params=pltpu.CompilerParams(dimension_semantics=("parallel",)),
    )(*args)

    text_embed = out[0, :B]
    image_embed = out[1, :B]
    aug1_embed = out[1, B:2 * B]
    aug2_embed = out[1, 2 * B:3 * B]
    return {
        'image_embed': image_embed,
        'text_embed': text_embed,
        'logit_scale': jnp.exp(params['logit_scale']),
        'aug1_embed': aug1_embed,
        'aug2_embed': aug2_embed,
    }


if __name__ == "__main__":
    key = jax.random.PRNGKey(0)
    kp, ki, kt, k1, k2 = jax.random.split(key, 5)
    params = init_params(kp)

    B = 2
    image = jax.random.normal(ki, (B, IMG_C, IMG_H, IMG_W), jnp.float32)
    aug1 = jax.random.normal(k1, (B, IMG_C, IMG_H, IMG_W), jnp.float32)
    aug2 = jax.random.normal(k2, (B, IMG_C, IMG_H, IMG_W), jnp.float32)
    text = jax.random.randint(kt, (B, CONTEXT_LENGTH), 0, VOCAB_SIZE, jnp.int32)

    out = jax.jit(slip_forward)(params, image, text, aug1, aug2)
    jax.block_until_ready(out)

    assert out['image_embed'].shape == (B, EMBED_DIM)
    assert out['text_embed'].shape == (B, EMBED_DIM)
    assert out['aug1_embed'].shape == (B, SSL_EMB_DIM)
    assert out['aug2_embed'].shape == (B, SSL_EMB_DIM)
    assert out['logit_scale'].shape == ()
    for k in ('image_embed', 'text_embed', 'aug1_embed', 'aug2_embed'):
        assert bool(jnp.all(jnp.isfinite(out[k])))
    print("KERNEL_OK")
</pallas_src>

<mosaic_0001>
module attributes {stable_mosaic.version = 11 : i64} {
  func.func @slip_kernel(%arg0: i32, %arg1: memref<2x1xi32, #tpu.memory_space<vmem>>, %arg2: memref<2x8x32xf32, #tpu.memory_space<vmem>>, %arg3: memref<2x32x96xbf16, #tpu.memory_space<vmem>>, %arg4: memref<2x1x96xf32, #tpu.memory_space<vmem>>, %arg5: memref<2x32x32xbf16, #tpu.memory_space<vmem>>, %arg6: memref<2x6x32xf32, #tpu.memory_space<vmem>>, %arg7: memref<2x32x128xbf16, #tpu.memory_space<vmem>>, %arg8: memref<2x1x128xf32, #tpu.memory_space<vmem>>, %arg9: memref<2x128x32xbf16, #tpu.memory_space<vmem>>, %arg10: memref<2x32xf32, #tpu.memory_space<vmem>>, %arg11: memref<32x32xbf16, #tpu.memory_space<vmem>>, %arg12: memref<2x768xf32, #tpu.memory_space<vmem>>, %arg13: memref<2x768xf32, #tpu.memory_space<vmem>>, %arg14: memref<2x768xf32, #tpu.memory_space<vmem>>, %arg15: memref<768x32xbf16, #tpu.memory_space<vmem>>, %arg16: memref<32x32xbf16, #tpu.memory_space<vmem>>, %arg17: memref<32x64xbf16, #tpu.memory_space<vmem>>, %arg18: memref<64x64xbf16, #tpu.memory_space<vmem>>, %arg19: memref<64x32xbf16, #tpu.memory_space<vmem>>, %arg20: memref<6x64xf32, #tpu.memory_space<vmem>>, %arg21: memref<2x32xf32, #tpu.memory_space<vmem>>, %arg22: memref<1x6x32xf32, #tpu.memory_space<vmem>>) attributes {dimension_semantics = [#tpu.dimension_semantics<parallel>], iteration_bounds = array<i64: 2>, scalar_prefetch = 0 : i64, scratch_operands = 0 : i64, tpu.core_type = #tpu.core_type<tc>, window_params = [{pipeline_mode = #tpu.pipeline_mode<synchronous>, transform_indices = @transform_0, window_bounds = array<i64: 2, 1>}, {pipeline_mode = #tpu.pipeline_mode<synchronous>, transform_indices = @transform_1, window_bounds = array<i64: 2, 8, 32>}, {pipeline_mode = #tpu.pipeline_mode<synchronous>, transform_indices = @transform_2, window_bounds = array<i64: 2, 32, 96>}, {pipeline_mode = #tpu.pipeline_mode<synchronous>, transform_indices = @transform_3, window_bounds = array<i64: 2, 1, 96>}, {pipeline_mode = #tpu.pipeline_mode<synchronous>, transform_indices = @transform_4, window_bounds = array<i64: 2, 32, 32>}, {pipeline_mode = #tpu.pipeline_mode<synchronous>, transform_indices = @transform_5, window_bounds = array<i64: 2, 6, 32>}, {pipeline_mode = #tpu.pipeline_mode<synchronous>, transform_indices = @transform_6, window_bounds = array<i64: 2, 32, 128>}, {pipeline_mode = #tpu.pipeline_mode<synchronous>, transform_indices = @transform_7, window_bounds = array<i64: 2, 1, 128>}, {pipeline_mode = #tpu.pipeline_mode<synchronous>, transform_indices = @transform_8, window_bounds = array<i64: 2, 128, 32>}, {pipeline_mode = #tpu.pipeline_mode<synchronous>, transform_indices = @transform_9, window_bounds = array<i64: 2, 32>}, {pipeline_mode = #tpu.pipeline_mode<synchronous>, transform_indices = @transform_10, window_bounds = array<i64: 32, 32>}, {pipeline_mode = #tpu.pipeline_mode<synchronous>, transform_indices = @transform_11, window_bounds = array<i64: 2, 768>}, {pipeline_mode = #tpu.pipeline_mode<synchronous>, transform_indices = @transform_12, window_bounds = array<i64: 2, 768>}, {pipeline_mode = #tpu.pipeline_mode<synchronous>, transform_indices = @transform_13, window_bounds = array<i64: 2, 768>}, {pipeline_mode = #tpu.pipeline_mode<synchronous>, transform_indices = @transform_14, window_bounds = array<i64: 768, 32>}, {pipeline_mode = #tpu.pipeline_mode<synchronous>, transform_indices = @transform_15, window_bounds = array<i64: 32, 32>}, {pipeline_mode = #tpu.pipeline_mode<synchronous>, transform_indices = @transform_16, window_bounds = array<i64: 32, 64>}, {pipeline_mode = #tpu.pipeline_mode<synchronous>, transform_indices = @transform_17, window_bounds = array<i64: 64, 64>}, {pipeline_mode = #tpu.pipeline_mode<synchronous>, transform_indices = @transform_18, window_bounds = array<i64: 64, 32>}, {pipeline_mode = #tpu.pipeline_mode<synchronous>, transform_indices = @transform_19, window_bounds = array<i64: 6, 64>}, {pipeline_mode = #tpu.pipeline_mode<synchronous>, transform_indices = @transform_20, window_bounds = array<i64: 2, 32>}, {transform_indices = @transform_21, window_bounds = array<i64: 1, 6, 32>}]} {
    %c0_i32 = arith.constant 0 : i32
    %0 = arith.cmpi eq, %arg0, %c0_i32 : i32
    %1 = arith.extui %0 : i1 to i32
    %c0_i32_0 = arith.constant 0 : i32
    %2 = arith.cmpi ne, %1, %c0_i32_0 : i32
    scf.if %2 {
      %c0 = arith.constant 0 : index
      %c0_2 = arith.constant 0 : index
      %c0_3 = arith.constant 0 : index
      %6 = vector.load %arg2[%c0, %c0_2, %c0_3] : memref<2x8x32xf32, #tpu.memory_space<vmem>>, vector<2x8x32xf32>
      %7 = tpu.iota {dimensions = array<i32: 0>} : vector<8x8xi32>
      %8 = tpu.iota {dimensions = array<i32: 1>} : vector<8x8xi32>
      %9 = arith.cmpi sgt, %8, %7 : vector<8x8xi32>
      %cst = arith.constant -1.000000e+30 : f32
      %cst_4 = arith.constant 0.000000e+00 : f32
      %10 = vector.broadcast %cst : f32 to vector<8x8xf32>
      %11 = vector.broadcast %cst_4 : f32 to vector<8x8xf32>
      %12 = arith.select %9, %10, %11 : vector<8x8xi1>, vector<8x8xf32>
      %c0_5 = arith.constant 0 : index
      %c0_6 = arith.constant 0 : index
      %c0_7 = arith.constant 0 : index
      %13 = vector.load %arg6[%c0_5, %c0_6, %c0_7] : memref<2x6x32xf32, #tpu.memory_space<vmem>>, vector<1x6x32xf32>
      %14 = vector.shape_cast %13 : vector<1x6x32xf32> to vector<6x32xf32>
      %15 = vector.extract_strided_slice %14 {offsets = [0, 0], sizes = [1, 32], strides = [1, 1]} : vector<6x32xf32> to vector<1x32xf32>
      %16 = vector.extract_strided_slice %14 {offsets = [1, 0], sizes = [1, 32], strides = [1, 1]} : vector<6x32xf32> to vector<1x32xf32>
      %17 = vector.extract_strided_slice %14 {offsets = [2, 0], sizes = [1, 32], strides = [1, 1]} : vector<6x32xf32> to vector<1x32xf32>
      %18 = vector.extract_strided_slice %14 {offsets = [3, 0], sizes = [1, 32], strides = [1, 1]} : vector<6x32xf32> to vector<1x32xf32>
      %19 = vector.extract_strided_slice %14 {offsets = [4, 0], sizes = [1, 32], strides = [1, 1]} : vector<6x32xf32> to vector<1x32xf32>
      %20 = vector.extract_strided_slice %14 {offsets = [5, 0], sizes = [1, 32], strides = [1, 1]} : vector<6x32xf32> to vector<1x32xf32>
      %c0_8 = arith.constant 0 : index
      %c0_9 = arith.constant 0 : index
      %c0_10 = arith.constant 0 : index
      %21 = vector.load %arg3[%c0_8, %c0_9, %c0_10] : memref<2x32x96xbf16, #tpu.memory_space<vmem>>, vector<1x32x96xbf16>
      %22 = vector.shape_cast %21 : vector<1x32x96xbf16> to vector<32x96xbf16>
      %c0_11 = arith.constant 0 : index
      %c0_12 = arith.constant 0 : index
      %c0_13 = arith.constant 0 : index
      %23 = vector.load %arg4[%c0_11, %c0_12, %c0_13] : memref<2x1x96xf32, #tpu.memory_space<vmem>>, vector<1x1x96xf32>
      %24 = vector.shape_cast %23 : vector<1x1x96xf32> to vector<1x96xf32>
      %c0_14 = arith.constant 0 : index
      %c0_15 = arith.constant 0 : index
      %c0_16 = arith.constant 0 : index
      %25 = vector.load %arg5[%c0_14, %c0_15, %c0_16] : memref<2x32x32xbf16, #tpu.memory_space<vmem>>, vector<1x32x32xbf16>
      %26 = vector.shape_cast %25 : vector<1x32x32xbf16> to vector<32x32xbf16>
      %c0_17 = arith.constant 0 : index
      %c0_18 = arith.constant 0 : index
      %c0_19 = arith.constant 0 : index
      %27 = vector.load %arg7[%c0_17, %c0_18, %c0_19] : memref<2x32x128xbf16, #tpu.memory_space<vmem>>, vector<1x32x128xbf16>
      %28 = vector.shape_cast %27 : vector<1x32x128xbf16> to vector<32x128xbf16>
      %c0_20 = arith.constant 0 : index
      %c0_21 = arith.constant 0 : index
      %c0_22 = arith.constant 0 : index
      %29 = vector.load %arg8[%c0_20, %c0_21, %c0_22] : memref<2x1x128xf32, #tpu.memory_space<vmem>>, vector<1x1x128xf32>
      %30 = vector.shape_cast %29 : vector<1x1x128xf32> to vector<1x128xf32>
      %c0_23 = arith.constant 0 : index
      %c0_24 = arith.constant 0 : index
      %c0_25 = arith.constant 0 : index
      %31 = vector.load %arg9[%c0_23, %c0_24, %c0_25] : memref<2x128x32xbf16, #tpu.memory_space<vmem>>, vector<1x128x32xbf16>
      %32 = vector.shape_cast %31 : vector<1x128x32xbf16> to vector<128x32xbf16>
      %cst_26 = arith.constant dense<0.000000e+00> : vector<2x8xf32>
      %33 = vector.multi_reduction <add>, %6, %cst_26 [2] : vector<2x8x32xf32> to vector<2x8xf32>
      %34 = vector.shape_cast %33 : vector<2x8xf32> to vector<2x8x1xf32>
      %cst_27 = arith.constant 3.200000e+01 : f32
      %35 = vector.broadcast %cst_27 : f32 to vector<2x8x1xf32>
      %36 = arith.divf %34, %35 : vector<2x8x1xf32>
      %37 = vector.broadcast %36 : vector<2x8x1xf32> to vector<2x8x32xf32>
      %38 = arith.subf %6, %37 : vector<2x8x32xf32>
      %39 = arith.mulf %38, %38 : vector<2x8x32xf32>
      %cst_28 = arith.constant dense<0.000000e+00> : vector<2x8xf32>
      %40 = vector.multi_reduction <add>, %39, %cst_28 [2] : vector<2x8x32xf32> to vector<2x8xf32>
      %41 = vector.shape_cast %40 : vector<2x8xf32> to vector<2x8x1xf32>
      %cst_29 = arith.constant 3.200000e+01 : f32
      %42 = vector.broadcast %cst_29 : f32 to vector<2x8x1xf32>
      %43 = arith.divf %41, %42 : vector<2x8x1xf32>
      %44 = vector.broadcast %36 : vector<2x8x1xf32> to vector<2x8x32xf32>
      %45 = arith.subf %6, %44 : vector<2x8x32xf32>
      %cst_30 = arith.constant 9.99999974E-6 : f32
      %46 = vector.broadcast %cst_30 : f32 to vector<2x8x1xf32>
      %47 = arith.addf %43, %46 : vector<2x8x1xf32>
      %48 = math.rsqrt %47 : vector<2x8x1xf32>
      %49 = vector.broadcast %48 : vector<2x8x1xf32> to vector<2x8x32xf32>
      %50 = arith.mulf %45, %49 : vector<2x8x32xf32>
      %51 = vector.shape_cast %15 : vector<1x32xf32> to vector<1x1x32xf32>
      %52 = vector.broadcast %51 : vector<1x1x32xf32> to vector<2x8x32xf32>
      %53 = arith.mulf %50, %52 : vector<2x8x32xf32>
      %54 = vector.shape_cast %16 : vector<1x32xf32> to vector<1x1x32xf32>
      %55 = vector.broadcast %54 : vector<1x1x32xf32> to vector<2x8x32xf32>
      %56 = arith.addf %53, %55 : vector<2x8x32xf32>
      %57 = vector.shape_cast %56 : vector<2x8x32xf32> to vector<16x32xf32>
      %58 = arith.truncf %57 : vector<16x32xf32> to vector<16x32xbf16>
      %cst_31 = arith.constant dense<0.000000e+00> : vector<16x96xf32>
      %59 = tpu.matmul %58, %22, %cst_31 {dimension_numbers = #tpu.dot_dimension_numbers<[1], [0], [0], [1], [0, 0, 1, 1], [], []>} : vector<16x32xbf16>, vector<32x96xbf16>, vector<16x96xf32> -> vector<16x96xf32>
      %60 = vector.broadcast %24 : vector<1x96xf32> to vector<16x96xf32>
      %61 = arith.addf %59, %60 : vector<16x96xf32>
      %62 = vector.shape_cast %61 : vector<16x96xf32> to vector<2x8x96xf32>
      %cst_32 = arith.constant 0.000000e+00 : f32
      %63 = vector.broadcast %cst_32 : f32 to vector<16x32xf32>
      %64 = vector.extract_strided_slice %62 {offsets = [0, 0, 0], sizes = [2, 8, 8], strides = [1, 1, 1]} : vector<2x8x96xf32> to vector<2x8x8xf32>
      %65 = vector.extract_strided_slice %62 {offsets = [0, 0, 32], sizes = [2, 8, 8], strides = [1, 1, 1]} : vector<2x8x96xf32> to vector<2x8x8xf32>
      %66 = vector.extract_strided_slice %62 {offsets = [0, 0, 64], sizes = [2, 8, 8], strides = [1, 1, 1]} : vector<2x8x96xf32> to vector<2x8x8xf32>
      %67 = arith.truncf %64 : vector<2x8x8xf32> to vector<2x8x8xbf16>
      %68 = arith.truncf %65 : vector<2x8x8xf32> to vector<2x8x8xbf16>
      "tpu.trace_start"() <{level = 10 : i32, message = "bqd,bkd->bqk"}> : () -> ()
      %cst_33 = arith.constant dense<0.000000e+00> : vector<2x8x8xf32>
      %69 = tpu.matmul %67, %68, %cst_33 {dimension_numbers = #tpu.dot_dimension_numbers<[2], [2], [1], [1], [0, 0, 0, 1, 1, 1], [0], [0]>} : vector<2x8x8xbf16>, vector<2x8x8xbf16>, vector<2x8x8xf32> -> vector<2x8x8xf32>
      "tpu.trace_stop"() : () -> ()
      %70 = vector.shape_cast %12 : vector<8x8xf32> to vector<1x8x8xf32>
      %71 = vector.broadcast %70 : vector<1x8x8xf32> to vector<2x8x8xf32>
      %72 = arith.addf %69, %71 : vector<2x8x8xf32>
      %cst_34 = arith.constant dense<0xFF800000> : vector<2x8xf32>
      %73 = vector.multi_reduction <maximumf>, %72, %cst_34 [2] : vector<2x8x8xf32> to vector<2x8xf32>
      %74 = vector.shape_cast %73 : vector<2x8xf32> to vector<2x8x1xf32>
      %75 = vector.broadcast %74 : vector<2x8x1xf32> to vector<2x8x8xf32>
      %76 = arith.subf %72, %75 : vector<2x8x8xf32>
      %77 = math.exp %76 : vector<2x8x8xf32>
      %cst_35 = arith.constant dense<0.000000e+00> : vector<2x8xf32>
      %78 = vector.multi_reduction <add>, %77, %cst_35 [2] : vector<2x8x8xf32> to vector<2x8xf32>
      %79 = vector.shape_cast %78 : vector<2x8xf32> to vector<2x8x1xf32>
      %80 = vector.broadcast %79 : vector<2x8x1xf32> to vector<2x8x8xf32>
      %81 = arith.divf %77, %80 : vector<2x8x8xf32>
      %82 = arith.truncf %81 : vector<2x8x8xf32> to vector<2x8x8xbf16>
      %83 = arith.truncf %66 : vector<2x8x8xf32> to vector<2x8x8xbf16>
      "tpu.trace_start"() <{level = 10 : i32, message = "bqk,bkd->bqd"}> : () -> ()
      %cst_36 = arith.constant dense<0.000000e+00> : vector<2x8x8xf32>
      %84 = tpu.matmul %82, %83, %cst_36 {dimension_numbers = #tpu.dot_dimension_numbers<[2], [1], [1], [2], [0, 0, 0, 1, 1, 2], [0], [0]>} : vector<2x8x8xbf16>, vector<2x8x8xbf16>, vector<2x8x8xf32> -> vector<2x8x8xf32>
      "tpu.trace_stop"() : () -> ()
      %85 = vector.shape_cast %84 : vector<2x8x8xf32> to vector<16x8xf32>
      %86 = arith.truncf %85 : vector<16x8xf32> to vector<16x8xbf16>
      %87 = vector.extract_strided_slice %26 {offsets = [0, 0], sizes = [8, 32], strides = [1, 1]} : vector<32x32xbf16> to vector<8x32xbf16>
      %cst_37 = arith.constant dense<0.000000e+00> : vector<16x32xf32>
      %88 = tpu.matmul %86, %87, %cst_37 {dimension_numbers = #tpu.dot_dimension_numbers<[1], [0], [0], [1], [0, 0, 1, 1], [], []>} : vector<16x8xbf16>, vector<8x32xbf16>, vector<16x32xf32> -> vector<16x32xf32>
      %89 = arith.addf %63, %88 : vector<16x32xf32>
      %90 = vector.extract_strided_slice %62 {offsets = [0, 0, 8], sizes = [2, 8, 8], strides = [1, 1, 1]} : vector<2x8x96xf32> to vector<2x8x8xf32>
      %91 = vector.extract_strided_slice %62 {offsets = [0, 0, 40], sizes = [2, 8, 8], strides = [1, 1, 1]} : vector<2x8x96xf32> to vector<2x8x8xf32>
      %92 = vector.extract_strided_slice %62 {offsets = [0, 0, 72], sizes = [2, 8, 8], strides = [1, 1, 1]} : vector<2x8x96xf32> to vector<2x8x8xf32>
      %93 = arith.truncf %90 : vector<2x8x8xf32> to vector<2x8x8xbf16>
      %94 = arith.truncf %91 : vector<2x8x8xf32> to vector<2x8x8xbf16>
      "tpu.trace_start"() <{level = 10 : i32, message = "bqd,bkd->bqk"}> : () -> ()
      %cst_38 = arith.constant dense<0.000000e+00> : vector<2x8x8xf32>
      %95 = tpu.matmul %93, %94, %cst_38 {dimension_numbers = #tpu.dot_dimension_numbers<[2], [2], [1], [1], [0, 0, 0, 1, 1, 1], [0], [0]>} : vector<2x8x8xbf16>, vector<2x8x8xbf16>, vector<2x8x8xf32> -> vector<2x8x8xf32>
      "tpu.trace_stop"() : () -> ()
      %96 = vector.shape_cast %12 : vector<8x8xf32> to vector<1x8x8xf32>
      %97 = vector.broadcast %96 : vector<1x8x8xf32> to vector<2x8x8xf32>
      %98 = arith.addf %95, %97 : vector<2x8x8xf32>
      %cst_39 = arith.constant dense<0xFF800000> : vector<2x8xf32>
      %99 = vector.multi_reduction <maximumf>, %98, %cst_39 [2] : vector<2x8x8xf32> to vector<2x8xf32>
      %100 = vector.shape_cast %99 : vector<2x8xf32> to vector<2x8x1xf32>
      %101 = vector.broadcast %100 : vector<2x8x1xf32> to vector<2x8x8xf32>
      %102 = arith.subf %98, %101 : vector<2x8x8xf32>
      %103 = math.exp %102 : vector<2x8x8xf32>
      %cst_40 = arith.constant dense<0.000000e+00> : vector<2x8xf32>
      %104 = vector.multi_reduction <add>, %103, %cst_40 [2] : vector<2x8x8xf32> to vector<2x8xf32>
      %105 = vector.shape_cast %104 : vector<2x8xf32> to vector<2x8x1xf32>
      %106 = vector.broadcast %105 : vector<2x8x1xf32> to vector<2x8x8xf32>
      %107 = arith.divf %103, %106 : vector<2x8x8xf32>
      %108 = arith.truncf %107 : vector<2x8x8xf32> to vector<2x8x8xbf16>
      %109 = arith.truncf %92 : vector<2x8x8xf32> to vector<2x8x8xbf16>
      "tpu.trace_start"() <{level = 10 : i32, message = "bqk,bkd->bqd"}> : () -> ()
      %cst_41 = arith.constant dense<0.000000e+00> : vector<2x8x8xf32>
      %110 = tpu.matmul %108, %109, %cst_41 {dimension_numbers = #tpu.dot_dimension_numbers<[2], [1], [1], [2], [0, 0, 0, 1, 1, 2], [0], [0]>} : vector<2x8x8xbf16>, vector<2x8x8xbf16>, vector<2x8x8xf32> -> vector<2x8x8xf32>
      "tpu.trace_stop"() : () -> ()
      %111 = vector.shape_cast %110 : vector<2x8x8xf32> to vector<16x8xf32>
      %112 = arith.truncf %111 : vector<16x8xf32> to vector<16x8xbf16>
      %113 = vector.extract_strided_slice %26 {offsets = [8, 0], sizes = [8, 32], strides = [1, 1]} : vector<32x32xbf16> to vector<8x32xbf16>
      %cst_42 = arith.constant dense<0.000000e+00> : vector<16x32xf32>
      %114 = tpu.matmul %112, %113, %cst_42 {dimension_numbers = #tpu.dot_dimension_numbers<[1], [0], [0], [1], [0, 0, 1, 1], [], []>} : vector<16x8xbf16>, vector<8x32xbf16>, vector<16x32xf32> -> vector<16x32xf32>
      %115 = arith.addf %89, %114 : vector<16x32xf32>
      %116 = vector.extract_strided_slice %62 {offsets = [0, 0, 16], sizes = [2, 8, 8], strides = [1, 1, 1]} : vector<2x8x96xf32> to vector<2x8x8xf32>
      %117 = vector.extract_strided_slice %62 {offsets = [0, 0, 48], sizes = [2, 8, 8], strides = [1, 1, 1]} : vector<2x8x96xf32> to vector<2x8x8xf32>
      %118 = vector.extract_strided_slice %62 {offsets = [0, 0, 80], sizes = [2, 8, 8], strides = [1, 1, 1]} : vector<2x8x96xf32> to vector<2x8x8xf32>
      %119 = arith.truncf %116 : vector<2x8x8xf32> to vector<2x8x8xbf16>
      %120 = arith.truncf %117 : vector<2x8x8xf32> to vector<2x8x8xbf16>
      "tpu.trace_start"() <{level = 10 : i32, message = "bqd,bkd->bqk"}> : () -> ()
      %cst_43 = arith.constant dense<0.000000e+00> : vector<2x8x8xf32>
      %121 = tpu.matmul %119, %120, %cst_43 {dimension_numbers = #tpu.dot_dimension_numbers<[2], [2], [1], [1], [0, 0, 0, 1, 1, 1], [0], [0]>} : vector<2x8x8xbf16>, vector<2x8x8xbf16>, vector<2x8x8xf32> -> vector<2x8x8xf32>
      "tpu.trace_stop"() : () -> ()
      %122 = vector.shape_cast %12 : vector<8x8xf32> to vector<1x8x8xf32>
      %123 = vector.broadcast %122 : vector<1x8x8xf32> to vector<2x8x8xf32>
      %124 = arith.addf %121, %123 : vector<2x8x8xf32>
      %cst_44 = arith.constant dense<0xFF800000> : vector<2x8xf32>
      %125 = vector.multi_reduction <maximumf>, %124, %cst_44 [2] : vector<2x8x8xf32> to vector<2x8xf32>
      %126 = vector.shape_cast %125 : vector<2x8xf32> to vector<2x8x1xf32>
      %127 = vector.broadcast %126 : vector<2x8x1xf32> to vector<2x8x8xf32>
      %128 = arith.subf %124, %127 : vector<2x8x8xf32>
      %129 = math.exp %128 : vector<2x8x8xf32>
      %cst_45 = arith.constant dense<0.000000e+00> : vector<2x8xf32>
      %130 = vector.multi_reduction <add>, %129, %cst_45 [2] : vector<2x8x8xf32> to vector<2x8xf32>
      %131 = vector.shape_cast %130 : vector<2x8xf32> to vector<2x8x1xf32>
      %132 = vector.broadcast %131 : vector<2x8x1xf32> to vector<2x8x8xf32>
      %133 = arith.divf %129, %132 : vector<2x8x8xf32>
      %134 = arith.truncf %133 : vector<2x8x8xf32> to vector<2x8x8xbf16>
      %135 = arith.truncf %118 : vector<2x8x8xf32> to vector<2x8x8xbf16>
      "tpu.trace_start"() <{level = 10 : i32, message = "bqk,bkd->bqd"}> : () -> ()
      %cst_46 = arith.constant dense<0.000000e+00> : vector<2x8x8xf32>
      %136 = tpu.matmul %134, %135, %cst_46 {dimension_numbers = #tpu.dot_dimension_numbers<[2], [1], [1], [2], [0, 0, 0, 1, 1, 2], [0], [0]>} : vector<2x8x8xbf16>, vector<2x8x8xbf16>, vector<2x8x8xf32> -> vector<2x8x8xf32>
      "tpu.trace_stop"() : () -> ()
      %137 = vector.shape_cast %136 : vector<2x8x8xf32> to vector<16x8xf32>
      %138 = arith.truncf %137 : vector<16x8xf32> to vector<16x8xbf16>
      %139 = vector.extract_strided_slice %26 {offsets = [16, 0], sizes = [8, 32], strides = [1, 1]} : vector<32x32xbf16> to vector<8x32xbf16>
      %cst_47 = arith.constant dense<0.000000e+00> : vector<16x32xf32>
      %140 = tpu.matmul %138, %139, %cst_47 {dimension_numbers = #tpu.dot_dimension_numbers<[1], [0], [0], [1], [0, 0, 1, 1], [], []>} : vector<16x8xbf16>, vector<8x32xbf16>, vector<16x32xf32> -> vector<16x32xf32>
      %141 = arith.addf %115, %140 : vector<16x32xf32>
      %142 = vector.extract_strided_slice %62 {offsets = [0, 0, 24], sizes = [2, 8, 8], strides = [1, 1, 1]} : vector<2x8x96xf32> to vector<2x8x8xf32>
      %143 = vector.extract_strided_slice %62 {offsets = [0, 0, 56], sizes = [2, 8, 8], strides = [1, 1, 1]} : vector<2x8x96xf32> to vector<2x8x8xf32>
      %144 = vector.extract_strided_slice %62 {offsets = [0, 0, 88], sizes = [2, 8, 8], strides = [1, 1, 1]} : vector<2x8x96xf32> to vector<2x8x8xf32>
      %145 = arith.truncf %142 : vector<2x8x8xf32> to vector<2x8x8xbf16>
      %146 = arith.truncf %143 : vector<2x8x8xf32> to vector<2x8x8xbf16>
      "tpu.trace_start"() <{level = 10 : i32, message = "bqd,bkd->bqk"}> : () -> ()
      %cst_48 = arith.constant dense<0.000000e+00> : vector<2x8x8xf32>
      %147 = tpu.matmul %145, %146, %cst_48 {dimension_numbers = #tpu.dot_dimension_numbers<[2], [2], [1], [1], [0, 0, 0, 1, 1, 1], [0], [0]>} : vector<2x8x8xbf16>, vector<2x8x8xbf16>, vector<2x8x8xf32> -> vector<2x8x8xf32>
      "tpu.trace_stop"() : () -> ()
      %148 = vector.shape_cast %12 : vector<8x8xf32> to vector<1x8x8xf32>
      %149 = vector.broadcast %148 : vector<1x8x8xf32> to vector<2x8x8xf32>
      %150 = arith.addf %147, %149 : vector<2x8x8xf32>
      %cst_49 = arith.constant dense<0xFF800000> : vector<2x8xf32>
      %151 = vector.multi_reduction <maximumf>, %150, %cst_49 [2] : vector<2x8x8xf32> to vector<2x8xf32>
      %152 = vector.shape_cast %151 : vector<2x8xf32> to vector<2x8x1xf32>
      %153 = vector.broadcast %152 : vector<2x8x1xf32> to vector<2x8x8xf32>
      %154 = arith.subf %150, %153 : vector<2x8x8xf32>
      %155 = math.exp %154 : vector<2x8x8xf32>
      %cst_50 = arith.constant dense<0.000000e+00> : vector<2x8xf32>
      %156 = vector.multi_reduction <add>, %155, %cst_50 [2] : vector<2x8x8xf32> to vector<2x8xf32>
      %157 = vector.shape_cast %156 : vector<2x8xf32> to vector<2x8x1xf32>
      %158 = vector.broadcast %157 : vector<2x8x1xf32> to vector<2x8x8xf32>
      %159 = arith.divf %155, %158 : vector<2x8x8xf32>
      %160 = arith.truncf %159 : vector<2x8x8xf32> to vector<2x8x8xbf16>
      %161 = arith.truncf %144 : vector<2x8x8xf32> to vector<2x8x8xbf16>
      "tpu.trace_start"() <{level = 10 : i32, message = "bqk,bkd->bqd"}> : () -> ()
      %cst_51 = arith.constant dense<0.000000e+00> : vector<2x8x8xf32>
      %162 = tpu.matmul %160, %161, %cst_51 {dimension_numbers = #tpu.dot_dimension_numbers<[2], [1], [1], [2], [0, 0, 0, 1, 1, 2], [0], [0]>} : vector<2x8x8xbf16>, vector<2x8x8xbf16>, vector<2x8x8xf32> -> vector<2x8x8xf32>
      "tpu.trace_stop"() : () -> ()
      %163 = vector.shape_cast %162 : vector<2x8x8xf32> to vector<16x8xf32>
      %164 = arith.truncf %163 : vector<16x8xf32> to vector<16x8xbf16>
      %165 = vector.extract_strided_slice %26 {offsets = [24, 0], sizes = [8, 32], strides = [1, 1]} : vector<32x32xbf16> to vector<8x32xbf16>
      %cst_52 = arith.constant dense<0.000000e+00> : vector<16x32xf32>
      %166 = tpu.matmul %164, %165, %cst_52 {dimension_numbers = #tpu.dot_dimension_numbers<[1], [0], [0], [1], [0, 0, 1, 1], [], []>} : vector<16x8xbf16>, vector<8x32xbf16>, vector<16x32xf32> -> vector<16x32xf32>
      %167 = arith.addf %141, %166 : vector<16x32xf32>
      %168 = vector.broadcast %17 : vector<1x32xf32> to vector<16x32xf32>
      %169 = arith.addf %167, %168 : vector<16x32xf32>
      %170 = vector.shape_cast %169 : vector<16x32xf32> to vector<2x8x32xf32>
      %171 = arith.addf %6, %170 : vector<2x8x32xf32>
      %cst_53 = arith.constant dense<0.000000e+00> : vector<2x8xf32>
      %172 = vector.multi_reduction <add>, %171, %cst_53 [2] : vector<2x8x32xf32> to vector<2x8xf32>
      %173 = vector.shape_cast %172 : vector<2x8xf32> to vector<2x8x1xf32>
      %cst_54 = arith.constant 3.200000e+01 : f32
      %174 = vector.broadcast %cst_54 : f32 to vector<2x8x1xf32>
      %175 = arith.divf %173, %174 : vector<2x8x1xf32>
      %176 = vector.broadcast %175 : vector<2x8x1xf32> to vector<2x8x32xf32>
      %177 = arith.subf %171, %176 : vector<2x8x32xf32>
      %178 = arith.mulf %177, %177 : vector<2x8x32xf32>
      %cst_55 = arith.constant dense<0.000000e+00> : vector<2x8xf32>
      %179 = vector.multi_reduction <add>, %178, %cst_55 [2] : vector<2x8x32xf32> to vector<2x8xf32>
      %180 = vector.shape_cast %179 : vector<2x8xf32> to vector<2x8x1xf32>
      %cst_56 = arith.constant 3.200000e+01 : f32
      %181 = vector.broadcast %cst_56 : f32 to vector<2x8x1xf32>
      %182 = arith.divf %180, %181 : vector<2x8x1xf32>
      %183 = vector.broadcast %175 : vector<2x8x1xf32> to vector<2x8x32xf32>
      %184 = arith.subf %171, %183 : vector<2x8x32xf32>
      %cst_57 = arith.constant 9.99999974E-6 : f32
      %185 = vector.broadcast %cst_57 : f32 to vector<2x8x1xf32>
      %186 = arith.addf %182, %185 : vector<2x8x1xf32>
      %187 = math.rsqrt %186 : vector<2x8x1xf32>
      %188 = vector.broadcast %187 : vector<2x8x1xf32> to vector<2x8x32xf32>
      %189 = arith.mulf %184, %188 : vector<2x8x32xf32>
      %190 = vector.shape_cast %18 : vector<1x32xf32> to vector<1x1x32xf32>
      %191 = vector.broadcast %190 : vector<1x1x32xf32> to vector<2x8x32xf32>
      %192 = arith.mulf %189, %191 : vector<2x8x32xf32>
      %193 = vector.shape_cast %19 : vector<1x32xf32> to vector<1x1x32xf32>
      %194 = vector.broadcast %193 : vector<1x1x32xf32> to vector<2x8x32xf32>
      %195 = arith.addf %192, %194 : vector<2x8x32xf32>
      %196 = vector.shape_cast %195 : vector<2x8x32xf32> to vector<16x32xf32>
      %197 = arith.truncf %196 : vector<16x32xf32> to vector<16x32xbf16>
      %cst_58 = arith.constant dense<0.000000e+00> : vector<16x128xf32>
      %198 = tpu.matmul %197, %28, %cst_58 {dimension_numbers = #tpu.dot_dimension_numbers<[1], [0], [0], [1], [0, 0, 1, 1], [], []>} : vector<16x32xbf16>, vector<32x128xbf16>, vector<16x128xf32> -> vector<16x128xf32>
      %199 = vector.broadcast %30 : vector<1x128xf32> to vector<16x128xf32>
      %200 = arith.addf %198, %199 : vector<16x128xf32>
      %cst_59 = arith.constant 1.702000e+00 : f32
      %201 = vector.broadcast %cst_59 : f32 to vector<16x128xf32>
      %202 = arith.mulf %201, %200 : vector<16x128xf32>
      %203 = arith.negf %202 : vector<16x128xf32>
      %204 = math.exp %203 : vector<16x128xf32>
      %cst_60 = arith.constant 1.000000e+00 : f32
      %205 = vector.broadcast %cst_60 : f32 to vector<16x128xf32>
      %206 = arith.addf %205, %204 : vector<16x128xf32>
      %207 = arith.divf %205, %206 : vector<16x128xf32>
      %208 = arith.mulf %200, %207 : vector<16x128xf32>
      %209 = arith.truncf %208 : vector<16x128xf32> to vector<16x128xbf16>
      %cst_61 = arith.constant dense<0.000000e+00> : vector<16x32xf32>
      %210 = tpu.matmul %209, %32, %cst_61 {dimension_numbers = #tpu.dot_dimension_numbers<[1], [0], [0], [1], [0, 0, 1, 1], [], []>} : vector<16x128xbf16>, vector<128x32xbf16>, vector<16x32xf32> -> vector<16x32xf32>
      %211 = vector.broadcast %20 : vector<1x32xf32> to vector<16x32xf32>
      %212 = arith.addf %210, %211 : vector<16x32xf32>
      %213 = vector.shape_cast %212 : vector<16x32xf32> to vector<2x8x32xf32>
      %214 = arith.addf %171, %213 : vector<2x8x32xf32>
      %c1 = arith.constant 1 : index
      %c0_62 = arith.constant 0 : index
      %c0_63 = arith.constant 0 : index
      %215 = vector.load %arg6[%c1, %c0_62, %c0_63] : memref<2x6x32xf32, #tpu.memory_space<vmem>>, vector<1x6x32xf32>
      %216 = vector.shape_cast %215 : vector<1x6x32xf32> to vector<6x32xf32>
      %217 = vector.extract_strided_slice %216 {offsets = [0, 0], sizes = [1, 32], strides = [1, 1]} : vector<6x32xf32> to vector<1x32xf32>
      %218 = vector.extract_strided_slice %216 {offsets = [1, 0], sizes = [1, 32], strides = [1, 1]} : vector<6x32xf32> to vector<1x32xf32>
      %219 = vector.extract_strided_slice %216 {offsets = [2, 0], sizes = [1, 32], strides = [1, 1]} : vector<6x32xf32> to vector<1x32xf32>
      %220 = vector.extract_strided_slice %216 {offsets = [3, 0], sizes = [1, 32], strides = [1, 1]} : vector<6x32xf32> to vector<1x32xf32>
      %221 = vector.extract_strided_slice %216 {offsets = [4, 0], sizes = [1, 32], strides = [1, 1]} : vector<6x32xf32> to vector<1x32xf32>
      %222 = vector.extract_strided_slice %216 {offsets = [5, 0], sizes = [1, 32], strides = [1, 1]} : vector<6x32xf32> to vector<1x32xf32>
      %c1_64 = arith.constant 1 : index
      %c0_65 = arith.constant 0 : index
      %c0_66 = arith.constant 0 : index
      %223 = vector.load %arg3[%c1_64, %c0_65, %c0_66] : memref<2x32x96xbf16, #tpu.memory_space<vmem>>, vector<1x32x96xbf16>
      %224 = vector.shape_cast %223 : vector<1x32x96xbf16> to vector<32x96xbf16>
      %c1_67 = arith.constant 1 : index
      %c0_68 = arith.constant 0 : index
      %c0_69 = arith.constant 0 : index
      %225 = vector.load %arg4[%c1_67, %c0_68, %c0_69] : memref<2x1x96xf32, #tpu.memory_space<vmem>>, vector<1x1x96xf32>
      %226 = vector.shape_cast %225 : vector<1x1x96xf32> to vector<1x96xf32>
      %c1_70 = arith.constant 1 : index
      %c0_71 = arith.constant 0 : index
      %c0_72 = arith.constant 0 : index
      %227 = vector.load %arg5[%c1_70, %c0_71, %c0_72] : memref<2x32x32xbf16, #tpu.memory_space<vmem>>, vector<1x32x32xbf16>
      %228 = vector.shape_cast %227 : vector<1x32x32xbf16> to vector<32x32xbf16>
      %c1_73 = arith.constant 1 : index
      %c0_74 = arith.constant 0 : index
      %c0_75 = arith.constant 0 : index
      %229 = vector.load %arg7[%c1_73, %c0_74, %c0_75] : memref<2x32x128xbf16, #tpu.memory_space<vmem>>, vector<1x32x128xbf16>
      %230 = vector.shape_cast %229 : vector<1x32x128xbf16> to vector<32x128xbf16>
      %c1_76 = arith.constant 1 : index
      %c0_77 = arith.constant 0 : index
      %c0_78 = arith.constant 0 : index
      %231 = vector.load %arg8[%c1_76, %c0_77, %c0_78] : memref<2x1x128xf32, #tpu.memory_space<vmem>>, vector<1x1x128xf32>
      %232 = vector.shape_cast %231 : vector<1x1x128xf32> to vector<1x128xf32>
      %c1_79 = arith.constant 1 : index
      %c0_80 = arith.constant 0 : index
      %c0_81 = arith.constant 0 : index
      %233 = vector.load %arg9[%c1_79, %c0_80, %c0_81] : memref<2x128x32xbf16, #tpu.memory_space<vmem>>, vector<1x128x32xbf16>
      %234 = vector.shape_cast %233 : vector<1x128x32xbf16> to vector<128x32xbf16>
      %cst_82 = arith.constant dense<0.000000e+00> : vector<2x8xf32>
      %235 = vector.multi_reduction <add>, %214, %cst_82 [2] : vector<2x8x32xf32> to vector<2x8xf32>
      %236 = vector.shape_cast %235 : vector<2x8xf32> to vector<2x8x1xf32>
      %cst_83 = arith.constant 3.200000e+01 : f32
      %237 = vector.broadcast %cst_83 : f32 to vector<2x8x1xf32>
      %238 = arith.divf %236, %237 : vector<2x8x1xf32>
      %239 = vector.broadcast %238 : vector<2x8x1xf32> to vector<2x8x32xf32>
      %240 = arith.subf %214, %239 : vector<2x8x32xf32>
      %241 = arith.mulf %240, %240 : vector<2x8x32xf32>
      %cst_84 = arith.constant dense<0.000000e+00> : vector<2x8xf32>
      %242 = vector.multi_reduction <add>, %241, %cst_84 [2] : vector<2x8x32xf32> to vector<2x8xf32>
      %243 = vector.shape_cast %242 : vector<2x8xf32> to vector<2x8x1xf32>
      %cst_85 = arith.constant 3.200000e+01 : f32
      %244 = vector.broadcast %cst_85 : f32 to vector<2x8x1xf32>
      %245 = arith.divf %243, %244 : vector<2x8x1xf32>
      %246 = vector.broadcast %238 : vector<2x8x1xf32> to vector<2x8x32xf32>
      %247 = arith.subf %214, %246 : vector<2x8x32xf32>
      %cst_86 = arith.constant 9.99999974E-6 : f32
      %248 = vector.broadcast %cst_86 : f32 to vector<2x8x1xf32>
      %249 = arith.addf %245, %248 : vector<2x8x1xf32>
      %250 = math.rsqrt %249 : vector<2x8x1xf32>
      %251 = vector.broadcast %250 : vector<2x8x1xf32> to vector<2x8x32xf32>
      %252 = arith.mulf %247, %251 : vector<2x8x32xf32>
      %253 = vector.shape_cast %217 : vector<1x32xf32> to vector<1x1x32xf32>
      %254 = vector.broadcast %253 : vector<1x1x32xf32> to vector<2x8x32xf32>
      %255 = arith.mulf %252, %254 : vector<2x8x32xf32>
      %256 = vector.shape_cast %218 : vector<1x32xf32> to vector<1x1x32xf32>
      %257 = vector.broadcast %256 : vector<1x1x32xf32> to vector<2x8x32xf32>
      %258 = arith.addf %255, %257 : vector<2x8x32xf32>
      %259 = vector.shape_cast %258 : vector<2x8x32xf32> to vector<16x32xf32>
      %260 = arith.truncf %259 : vector<16x32xf32> to vector<16x32xbf16>
      %cst_87 = arith.constant dense<0.000000e+00> : vector<16x96xf32>
      %261 = tpu.matmul %260, %224, %cst_87 {dimension_numbers = #tpu.dot_dimension_numbers<[1], [0], [0], [1], [0, 0, 1, 1], [], []>} : vector<16x32xbf16>, vector<32x96xbf16>, vector<16x96xf32> -> vector<16x96xf32>
      %262 = vector.broadcast %226 : vector<1x96xf32> to vector<16x96xf32>
      %263 = arith.addf %261, %262 : vector<16x96xf32>
      %264 = vector.shape_cast %263 : vector<16x96xf32> to vector<2x8x96xf32>
      %cst_88 = arith.constant 0.000000e+00 : f32
      %265 = vector.broadcast %cst_88 : f32 to vector<16x32xf32>
      %266 = vector.extract_strided_slice %264 {offsets = [0, 0, 0], sizes = [2, 8, 8], strides = [1, 1, 1]} : vector<2x8x96xf32> to vector<2x8x8xf32>
      %267 = vector.extract_strided_slice %264 {offsets = [0, 0, 32], sizes = [2, 8, 8], strides = [1, 1, 1]} : vector<2x8x96xf32> to vector<2x8x8xf32>
      %268 = vector.extract_strided_slice %264 {offsets = [0, 0, 64], sizes = [2, 8, 8], strides = [1, 1, 1]} : vector<2x8x96xf32> to vector<2x8x8xf32>
      %269 = arith.truncf %266 : vector<2x8x8xf32> to vector<2x8x8xbf16>
      %270 = arith.truncf %267 : vector<2x8x8xf32> to vector<2x8x8xbf16>
      "tpu.trace_start"() <{level = 10 : i32, message = "bqd,bkd->bqk"}> : () -> ()
      %cst_89 = arith.constant dense<0.000000e+00> : vector<2x8x8xf32>
      %271 = tpu.matmul %269, %270, %cst_89 {dimension_numbers = #tpu.dot_dimension_numbers<[2], [2], [1], [1], [0, 0, 0, 1, 1, 1], [0], [0]>} : vector<2x8x8xbf16>, vector<2x8x8xbf16>, vector<2x8x8xf32> -> vector<2x8x8xf32>
      "tpu.trace_stop"() : () -> ()
      %272 = vector.shape_cast %12 : vector<8x8xf32> to vector<1x8x8xf32>
      %273 = vector.broadcast %272 : vector<1x8x8xf32> to vector<2x8x8xf32>
      %274 = arith.addf %271, %273 : vector<2x8x8xf32>
      %cst_90 = arith.constant dense<0xFF800000> : vector<2x8xf32>
      %275 = vector.multi_reduction <maximumf>, %274, %cst_90 [2] : vector<2x8x8xf32> to vector<2x8xf32>
      %276 = vector.shape_cast %275 : vector<2x8xf32> to vector<2x8x1xf32>
      %277 = vector.broadcast %276 : vector<2x8x1xf32> to vector<2x8x8xf32>
      %278 = arith.subf %274, %277 : vector<2x8x8xf32>
      %279 = math.exp %278 : vector<2x8x8xf32>
      %cst_91 = arith.constant dense<0.000000e+00> : vector<2x8xf32>
      %280 = vector.multi_reduction <add>, %279, %cst_91 [2] : vector<2x8x8xf32> to vector<2x8xf32>
      %281 = vector.shape_cast %280 : vector<2x8xf32> to vector<2x8x1xf32>
      %282 = vector.broadcast %281 : vector<2x8x1xf32> to vector<2x8x8xf32>
      %283 = arith.divf %279, %282 : vector<2x8x8xf32>
      %284 = arith.truncf %283 : vector<2x8x8xf32> to vector<2x8x8xbf16>
      %285 = arith.truncf %268 : vector<2x8x8xf32> to vector<2x8x8xbf16>
      "tpu.trace_start"() <{level = 10 : i32, message = "bqk,bkd->bqd"}> : () -> ()
      %cst_92 = arith.constant dense<0.000000e+00> : vector<2x8x8xf32>
      %286 = tpu.matmul %284, %285, %cst_92 {dimension_numbers = #tpu.dot_dimension_numbers<[2], [1], [1], [2], [0, 0, 0, 1, 1, 2], [0], [0]>} : vector<2x8x8xbf16>, vector<2x8x8xbf16>, vector<2x8x8xf32> -> vector<2x8x8xf32>
      "tpu.trace_stop"() : () -> ()
      %287 = vector.shape_cast %286 : vector<2x8x8xf32> to vector<16x8xf32>
      %288 = arith.truncf %287 : vector<16x8xf32> to vector<16x8xbf16>
      %289 = vector.extract_strided_slice %228 {offsets = [0, 0], sizes = [8, 32], strides = [1, 1]} : vector<32x32xbf16> to vector<8x32xbf16>
      %cst_93 = arith.constant dense<0.000000e+00> : vector<16x32xf32>
      %290 = tpu.matmul %288, %289, %cst_93 {dimension_numbers = #tpu.dot_dimension_numbers<[1], [0], [0], [1], [0, 0, 1, 1], [], []>} : vector<16x8xbf16>, vector<8x32xbf16>, vector<16x32xf32> -> vector<16x32xf32>
      %291 = arith.addf %265, %290 : vector<16x32xf32>
      %292 = vector.extract_strided_slice %264 {offsets = [0, 0, 8], sizes = [2, 8, 8], strides = [1, 1, 1]} : vector<2x8x96xf32> to vector<2x8x8xf32>
      %293 = vector.extract_strided_slice %264 {offsets = [0, 0, 40], sizes = [2, 8, 8], strides = [1, 1, 1]} : vector<2x8x96xf32> to vector<2x8x8xf32>
      %294 = vector.extract_strided_slice %264 {offsets = [0, 0, 72], sizes = [2, 8, 8], strides = [1, 1, 1]} : vector<2x8x96xf32> to vector<2x8x8xf32>
      %295 = arith.truncf %292 : vector<2x8x8xf32> to vector<2x8x8xbf16>
      %296 = arith.truncf %293 : vector<2x8x8xf32> to vector<2x8x8xbf16>
      "tpu.trace_start"() <{level = 10 : i32, message = "bqd,bkd->bqk"}> : () -> ()
      %cst_94 = arith.constant dense<0.000000e+00> : vector<2x8x8xf32>
      %297 = tpu.matmul %295, %296, %cst_94 {dimension_numbers = #tpu.dot_dimension_numbers<[2], [2], [1], [1], [0, 0, 0, 1, 1, 1], [0], [0]>} : vector<2x8x8xbf16>, vector<2x8x8xbf16>, vector<2x8x8xf32> -> vector<2x8x8xf32>
      "tpu.trace_stop"() : () -> ()
      %298 = vector.shape_cast %12 : vector<8x8xf32> to vector<1x8x8xf32>
      %299 = vector.broadcast %298 : vector<1x8x8xf32> to vector<2x8x8xf32>
      %300 = arith.addf %297, %299 : vector<2x8x8xf32>
      %cst_95 = arith.constant dense<0xFF800000> : vector<2x8xf32>
      %301 = vector.multi_reduction <maximumf>, %300, %cst_95 [2] : vector<2x8x8xf32> to vector<2x8xf32>
      %302 = vector.shape_cast %301 : vector<2x8xf32> to vector<2x8x1xf32>
      %303 = vector.broadcast %302 : vector<2x8x1xf32> to vector<2x8x8xf32>
      %304 = arith.subf %300, %303 : vector<2x8x8xf32>
      %305 = math.exp %304 : vector<2x8x8xf32>
      %cst_96 = arith.constant dense<0.000000e+00> : vector<2x8xf32>
      %306 = vector.multi_reduction <add>, %305, %cst_96 [2] : vector<2x8x8xf32> to vector<2x8xf32>
      %307 = vector.shape_cast %306 : vector<2x8xf32> to vector<2x8x1xf32>
      %308 = vector.broadcast %307 : vector<2x8x1xf32> to vector<2x8x8xf32>
      %309 = arith.divf %305, %308 : vector<2x8x8xf32>
      %310 = arith.truncf %309 : vector<2x8x8xf32> to vector<2x8x8xbf16>
      %311 = arith.truncf %294 : vector<2x8x8xf32> to vector<2x8x8xbf16>
      "tpu.trace_start"() <{level = 10 : i32, message = "bqk,bkd->bqd"}> : () -> ()
      %cst_97 = arith.constant dense<0.000000e+00> : vector<2x8x8xf32>
      %312 = tpu.matmul %310, %311, %cst_97 {dimension_numbers = #tpu.dot_dimension_numbers<[2], [1], [1], [2], [0, 0, 0, 1, 1, 2], [0], [0]>} : vector<2x8x8xbf16>, vector<2x8x8xbf16>, vector<2x8x8xf32> -> vector<2x8x8xf32>
      "tpu.trace_stop"() : () -> ()
      %313 = vector.shape_cast %312 : vector<2x8x8xf32> to vector<16x8xf32>
      %314 = arith.truncf %313 : vector<16x8xf32> to vector<16x8xbf16>
      %315 = vector.extract_strided_slice %228 {offsets = [8, 0], sizes = [8, 32], strides = [1, 1]} : vector<32x32xbf16> to vector<8x32xbf16>
      %cst_98 = arith.constant dense<0.000000e+00> : vector<16x32xf32>
      %316 = tpu.matmul %314, %315, %cst_98 {dimension_numbers = #tpu.dot_dimension_numbers<[1], [0], [0], [1], [0, 0, 1, 1], [], []>} : vector<16x8xbf16>, vector<8x32xbf16>, vector<16x32xf32> -> vector<16x32xf32>
      %317 = arith.addf %291, %316 : vector<16x32xf32>
      %318 = vector.extract_strided_slice %264 {offsets = [0, 0, 16], sizes = [2, 8, 8], strides = [1, 1, 1]} : vector<2x8x96xf32> to vector<2x8x8xf32>
      %319 = vector.extract_strided_slice %264 {offsets = [0, 0, 48], sizes = [2, 8, 8], strides = [1, 1, 1]} : vector<2x8x96xf32> to vector<2x8x8xf32>
      %320 = vector.extract_strided_slice %264 {offsets = [0, 0, 80], sizes = [2, 8, 8], strides = [1, 1, 1]} : vector<2x8x96xf32> to vector<2x8x8xf32>
      %321 = arith.truncf %318 : vector<2x8x8xf32> to vector<2x8x8xbf16>
      %322 = arith.truncf %319 : vector<2x8x8xf32> to vector<2x8x8xbf16>
      "tpu.trace_start"() <{level = 10 : i32, message = "bqd,bkd->bqk"}> : () -> ()
      %cst_99 = arith.constant dense<0.000000e+00> : vector<2x8x8xf32>
      %323 = tpu.matmul %321, %322, %cst_99 {dimension_numbers = #tpu.dot_dimension_numbers<[2], [2], [1], [1], [0, 0, 0, 1, 1, 1], [0], [0]>} : vector<2x8x8xbf16>, vector<2x8x8xbf16>, vector<2x8x8xf32> -> vector<2x8x8xf32>
      "tpu.trace_stop"() : () -> ()
      %324 = vector.shape_cast %12 : vector<8x8xf32> to vector<1x8x8xf32>
      %325 = vector.broadcast %324 : vector<1x8x8xf32> to vector<2x8x8xf32>
      %326 = arith.addf %323, %325 : vector<2x8x8xf32>
      %cst_100 = arith.constant dense<0xFF800000> : vector<2x8xf32>
      %327 = vector.multi_reduction <maximumf>, %326, %cst_100 [2] : vector<2x8x8xf32> to vector<2x8xf32>
      %328 = vector.shape_cast %327 : vector<2x8xf32> to vector<2x8x1xf32>
      %329 = vector.broadcast %328 : vector<2x8x1xf32> to vector<2x8x8xf32>
      %330 = arith.subf %326, %329 : vector<2x8x8xf32>
      %331 = math.exp %330 : vector<2x8x8xf32>
      %cst_101 = arith.constant dense<0.000000e+00> : vector<2x8xf32>
      %332 = vector.multi_reduction <add>, %331, %cst_101 [2] : vector<2x8x8xf32> to vector<2x8xf32>
      %333 = vector.shape_cast %332 : vector<2x8xf32> to vector<2x8x1xf32>
      %334 = vector.broadcast %333 : vector<2x8x1xf32> to vector<2x8x8xf32>
      %335 = arith.divf %331, %334 : vector<2x8x8xf32>
      %336 = arith.truncf %335 : vector<2x8x8xf32> to vector<2x8x8xbf16>
      %337 = arith.truncf %320 : vector<2x8x8xf32> to vector<2x8x8xbf16>
      "tpu.trace_start"() <{level = 10 : i32, message = "bqk,bkd->bqd"}> : () -> ()
      %cst_102 = arith.constant dense<0.000000e+00> : vector<2x8x8xf32>
      %338 = tpu.matmul %336, %337, %cst_102 {dimension_numbers = #tpu.dot_dimension_numbers<[2], [1], [1], [2], [0, 0, 0, 1, 1, 2], [0], [0]>} : vector<2x8x8xbf16>, vector<2x8x8xbf16>, vector<2x8x8xf32> -> vector<2x8x8xf32>
      "tpu.trace_stop"() : () -> ()
      %339 = vector.shape_cast %338 : vector<2x8x8xf32> to vector<16x8xf32>
      %340 = arith.truncf %339 : vector<16x8xf32> to vector<16x8xbf16>
      %341 = vector.extract_strided_slice %228 {offsets = [16, 0], sizes = [8, 32], strides = [1, 1]} : vector<32x32xbf16> to vector<8x32xbf16>
      %cst_103 = arith.constant dense<0.000000e+00> : vector<16x32xf32>
      %342 = tpu.matmul %340, %341, %cst_103 {dimension_numbers = #tpu.dot_dimension_numbers<[1], [0], [0], [1], [0, 0, 1, 1], [], []>} : vector<16x8xbf16>, vector<8x32xbf16>, vector<16x32xf32> -> vector<16x32xf32>
      %343 = arith.addf %317, %342 : vector<16x32xf32>
      %344 = vector.extract_strided_slice %264 {offsets = [0, 0, 24], sizes = [2, 8, 8], strides = [1, 1, 1]} : vector<2x8x96xf32> to vector<2x8x8xf32>
      %345 = vector.extract_strided_slice %264 {offsets = [0, 0, 56], sizes = [2, 8, 8], strides = [1, 1, 1]} : vector<2x8x96xf32> to vector<2x8x8xf32>
      %346 = vector.extract_strided_slice %264 {offsets = [0, 0, 88], sizes = [2, 8, 8], strides = [1, 1, 1]} : vector<2x8x96xf32> to vector<2x8x8xf32>
      %347 = arith.truncf %344 : vector<2x8x8xf32> to vector<2x8x8xbf16>
      %348 = arith.truncf %345 : vector<2x8x8xf32> to vector<2x8x8xbf16>
      "tpu.trace_start"() <{level = 10 : i32, message = "bqd,bkd->bqk"}> : () -> ()
      %cst_104 = arith.constant dense<0.000000e+00> : vector<2x8x8xf32>
      %349 = tpu.matmul %347, %348, %cst_104 {dimension_numbers = #tpu.dot_dimension_numbers<[2], [2], [1], [1], [0, 0, 0, 1, 1, 1], [0], [0]>} : vector<2x8x8xbf16>, vector<2x8x8xbf16>, vector<2x8x8xf32> -> vector<2x8x8xf32>
      "tpu.trace_stop"() : () -> ()
      %350 = vector.shape_cast %12 : vector<8x8xf32> to vector<1x8x8xf32>
      %351 = vector.broadcast %350 : vector<1x8x8xf32> to vector<2x8x8xf32>
      %352 = arith.addf %349, %351 : vector<2x8x8xf32>
      %cst_105 = arith.constant dense<0xFF800000> : vector<2x8xf32>
      %353 = vector.multi_reduction <maximumf>, %352, %cst_105 [2] : vector<2x8x8xf32> to vector<2x8xf32>
      %354 = vector.shape_cast %353 : vector<2x8xf32> to vector<2x8x1xf32>
      %355 = vector.broadcast %354 : vector<2x8x1xf32> to vector<2x8x8xf32>
      %356 = arith.subf %352, %355 : vector<2x8x8xf32>
      %357 = math.exp %356 : vector<2x8x8xf32>
      %cst_106 = arith.constant dense<0.000000e+00> : vector<2x8xf32>
      %358 = vector.multi_reduction <add>, %357, %cst_106 [2] : vector<2x8x8xf32> to vector<2x8xf32>
      %359 = vector.shape_cast %358 : vector<2x8xf32> to vector<2x8x1xf32>
      %360 = vector.broadcast %359 : vector<2x8x1xf32> to vector<2x8x8xf32>
      %361 = arith.divf %357, %360 : vector<2x8x8xf32>
      %362 = arith.truncf %361 : vector<2x8x8xf32> to vector<2x8x8xbf16>
      %363 = arith.truncf %346 : vector<2x8x8xf32> to vector<2x8x8xbf16>
      "tpu.trace_start"() <{level = 10 : i32, message = "bqk,bkd->bqd"}> : () -> ()
      %cst_107 = arith.constant dense<0.000000e+00> : vector<2x8x8xf32>
      %364 = tpu.matmul %362, %363, %cst_107 {dimension_numbers = #tpu.dot_dimension_numbers<[2], [1], [1], [2], [0, 0, 0, 1, 1, 2], [0], [0]>} : vector<2x8x8xbf16>, vector<2x8x8xbf16>, vector<2x8x8xf32> -> vector<2x8x8xf32>
      "tpu.trace_stop"() : () -> ()
      %365 = vector.shape_cast %364 : vector<2x8x8xf32> to vector<16x8xf32>
      %366 = arith.truncf %365 : vector<16x8xf32> to vector<16x8xbf16>
      %367 = vector.extract_strided_slice %228 {offsets = [24, 0], sizes = [8, 32], strides = [1, 1]} : vector<32x32xbf16> to vector<8x32xbf16>
      %cst_108 = arith.constant dense<0.000000e+00> : vector<16x32xf32>
      %368 = tpu.matmul %366, %367, %cst_108 {dimension_numbers = #tpu.dot_dimension_numbers<[1], [0], [0], [1], [0, 0, 1, 1], [], []>} : vector<16x8xbf16>, vector<8x32xbf16>, vector<16x32xf32> -> vector<16x32xf32>
      %369 = arith.addf %343, %368 : vector<16x32xf32>
      %370 = vector.broadcast %219 : vector<1x32xf32> to vector<16x32xf32>
      %371 = arith.addf %369, %370 : vector<16x32xf32>
      %372 = vector.shape_cast %371 : vector<16x32xf32> to vector<2x8x32xf32>
      %373 = arith.addf %214, %372 : vector<2x8x32xf32>
      %cst_109 = arith.constant dense<0.000000e+00> : vector<2x8xf32>
      %374 = vector.multi_reduction <add>, %373, %cst_109 [2] : vector<2x8x32xf32> to vector<2x8xf32>
      %375 = vector.shape_cast %374 : vector<2x8xf32> to vector<2x8x1xf32>
      %cst_110 = arith.constant 3.200000e+01 : f32
      %376 = vector.broadcast %cst_110 : f32 to vector<2x8x1xf32>
      %377 = arith.divf %375, %376 : vector<2x8x1xf32>
      %378 = vector.broadcast %377 : vector<2x8x1xf32> to vector<2x8x32xf32>
      %379 = arith.subf %373, %378 : vector<2x8x32xf32>
      %380 = arith.mulf %379, %379 : vector<2x8x32xf32>
      %cst_111 = arith.constant dense<0.000000e+00> : vector<2x8xf32>
      %381 = vector.multi_reduction <add>, %380, %cst_111 [2] : vector<2x8x32xf32> to vector<2x8xf32>
      %382 = vector.shape_cast %381 : vector<2x8xf32> to vector<2x8x1xf32>
      %cst_112 = arith.constant 3.200000e+01 : f32
      %383 = vector.broadcast %cst_112 : f32 to vector<2x8x1xf32>
      %384 = arith.divf %382, %383 : vector<2x8x1xf32>
      %385 = vector.broadcast %377 : vector<2x8x1xf32> to vector<2x8x32xf32>
      %386 = arith.subf %373, %385 : vector<2x8x32xf32>
      %cst_113 = arith.constant 9.99999974E-6 : f32
      %387 = vector.broadcast %cst_113 : f32 to vector<2x8x1xf32>
      %388 = arith.addf %384, %387 : vector<2x8x1xf32>
      %389 = math.rsqrt %388 : vector<2x8x1xf32>
      %390 = vector.broadcast %389 : vector<2x8x1xf32> to vector<2x8x32xf32>
      %391 = arith.mulf %386, %390 : vector<2x8x32xf32>
      %392 = vector.shape_cast %220 : vector<1x32xf32> to vector<1x1x32xf32>
      %393 = vector.broadcast %392 : vector<1x1x32xf32> to vector<2x8x32xf32>
      %394 = arith.mulf %391, %393 : vector<2x8x32xf32>
      %395 = vector.shape_cast %221 : vector<1x32xf32> to vector<1x1x32xf32>
      %396 = vector.broadcast %395 : vector<1x1x32xf32> to vector<2x8x32xf32>
      %397 = arith.addf %394, %396 : vector<2x8x32xf32>
      %398 = vector.shape_cast %397 : vector<2x8x32xf32> to vector<16x32xf32>
      %399 = arith.truncf %398 : vector<16x32xf32> to vector<16x32xbf16>
      %cst_114 = arith.constant dense<0.000000e+00> : vector<16x128xf32>
      %400 = tpu.matmul %399, %230, %cst_114 {dimension_numbers = #tpu.dot_dimension_numbers<[1], [0], [0], [1], [0, 0, 1, 1], [], []>} : vector<16x32xbf16>, vector<32x128xbf16>, vector<16x128xf32> -> vector<16x128xf32>
      %401 = vector.broadcast %232 : vector<1x128xf32> to vector<16x128xf32>
      %402 = arith.addf %400, %401 : vector<16x128xf32>
      %cst_115 = arith.constant 1.702000e+00 : f32
      %403 = vector.broadcast %cst_115 : f32 to vector<16x128xf32>
      %404 = arith.mulf %403, %402 : vector<16x128xf32>
      %405 = arith.negf %404 : vector<16x128xf32>
      %406 = math.exp %405 : vector<16x128xf32>
      %cst_116 = arith.constant 1.000000e+00 : f32
      %407 = vector.broadcast %cst_116 : f32 to vector<16x128xf32>
      %408 = arith.addf %407, %406 : vector<16x128xf32>
      %409 = arith.divf %407, %408 : vector<16x128xf32>
      %410 = arith.mulf %402, %409 : vector<16x128xf32>
      %411 = arith.truncf %410 : vector<16x128xf32> to vector<16x128xbf16>
      %cst_117 = arith.constant dense<0.000000e+00> : vector<16x32xf32>
      %412 = tpu.matmul %411, %234, %cst_117 {dimension_numbers = #tpu.dot_dimension_numbers<[1], [0], [0], [1], [0, 0, 1, 1], [], []>} : vector<16x128xbf16>, vector<128x32xbf16>, vector<16x32xf32> -> vector<16x32xf32>
      %413 = vector.broadcast %222 : vector<1x32xf32> to vector<16x32xf32>
      %414 = arith.addf %412, %413 : vector<16x32xf32>
      %415 = vector.shape_cast %414 : vector<16x32xf32> to vector<2x8x32xf32>
      %416 = arith.addf %373, %415 : vector<2x8x32xf32>
      %c0_118 = arith.constant 0 : index
      %c0_119 = arith.constant 0 : index
      %417 = vector.load %arg10[%c0_118, %c0_119] : memref<2x32xf32, #tpu.memory_space<vmem>>, vector<2x32xf32>
      %418 = vector.extract_strided_slice %417 {offsets = [0, 0], sizes = [1, 32], strides = [1, 1]} : vector<2x32xf32> to vector<1x32xf32>
      %419 = vector.extract_strided_slice %417 {offsets = [1, 0], sizes = [1, 32], strides = [1, 1]} : vector<2x32xf32> to vector<1x32xf32>
      %cst_120 = arith.constant dense<0.000000e+00> : vector<2x8xf32>
      %420 = vector.multi_reduction <add>, %416, %cst_120 [2] : vector<2x8x32xf32> to vector<2x8xf32>
      %421 = vector.shape_cast %420 : vector<2x8xf32> to vector<2x8x1xf32>
      %cst_121 = arith.constant 3.200000e+01 : f32
      %422 = vector.broadcast %cst_121 : f32 to vector<2x8x1xf32>
      %423 = arith.divf %421, %422 : vector<2x8x1xf32>
      %424 = vector.broadcast %423 : vector<2x8x1xf32> to vector<2x8x32xf32>
      %425 = arith.subf %416, %424 : vector<2x8x32xf32>
      %426 = arith.mulf %425, %425 : vector<2x8x32xf32>
      %cst_122 = arith.constant dense<0.000000e+00> : vector<2x8xf32>
      %427 = vector.multi_reduction <add>, %426, %cst_122 [2] : vector<2x8x32xf32> to vector<2x8xf32>
      %428 = vector.shape_cast %427 : vector<2x8xf32> to vector<2x8x1xf32>
      %cst_123 = arith.constant 3.200000e+01 : f32
      %429 = vector.broadcast %cst_123 : f32 to vector<2x8x1xf32>
      %430 = arith.divf %428, %429 : vector<2x8x1xf32>
      %431 = vector.broadcast %423 : vector<2x8x1xf32> to vector<2x8x32xf32>
      %432 = arith.subf %416, %431 : vector<2x8x32xf32>
      %cst_124 = arith.constant 9.99999974E-6 : f32
      %433 = vector.broadcast %cst_124 : f32 to vector<2x8x1xf32>
      %434 = arith.addf %430, %433 : vector<2x8x1xf32>
      %435 = math.rsqrt %434 : vector<2x8x1xf32>
      %436 = vector.broadcast %435 : vector<2x8x1xf32> to vector<2x8x32xf32>
      %437 = arith.mulf %432, %436 : vector<2x8x32xf32>
      %438 = vector.shape_cast %418 : vector<1x32xf32> to vector<1x1x32xf32>
      %439 = vector.broadcast %438 : vector<1x1x32xf32> to vector<2x8x32xf32>
      %440 = arith.mulf %437, %439 : vector<2x8x32xf32>
      %441 = vector.shape_cast %419 : vector<1x32xf32> to vector<1x1x32xf32>
      %442 = vector.broadcast %441 : vector<1x1x32xf32> to vector<2x8x32xf32>
      %443 = arith.addf %440, %442 : vector<2x8x32xf32>
      %c0_125 = arith.constant 0 : index
      %c0_126 = arith.constant 0 : index
      %444 = vector.load %arg1[%c0_125, %c0_126] : memref<2x1xi32, #tpu.memory_space<vmem>>, vector<2x1xi32>
      %445 = tpu.iota {dimensions = array<i32: 1>} : vector<2x8xi32>
      %446 = vector.broadcast %444 : vector<2x1xi32> to vector<2x8xi32>
      %447 = arith.cmpi eq, %445, %446 : vector<2x8xi32>
      %448 = arith.extui %447 : vector<2x8xi1> to vector<2x8xi32>
      %449 = arith.sitofp %448 : vector<2x8xi32> to vector<2x8xf32>
      %450 = vector.shape_cast %449 : vector<2x8xf32> to vector<2x8x1xf32>
      %451 = vector.broadcast %450 : vector<2x8x1xf32> to vector<2x8x32xf32>
      %452 = arith.mulf %443, %451 : vector<2x8x32xf32>
      %cst_127 = arith.constant dense<0.000000e+00> : vector<2x32xf32>
      %453 = vector.multi_reduction <add>, %452, %cst_127 [1] : vector<2x8x32xf32> to vector<2x32xf32>
      %454 = arith.truncf %453 : vector<2x32xf32> to vector<2x32xbf16>
      %c0_128 = arith.constant 0 : index
      %c0_129 = arith.constant 0 : index
      %455 = vector.load %arg11[%c0_128, %c0_129] : memref<32x32xbf16, #tpu.memory_space<vmem>>, vector<32x32xbf16>
      %cst_130 = arith.constant dense<0.000000e+00> : vector<2x32xf32>
      %456 = tpu.matmul %454, %455, %cst_130 {dimension_numbers = #tpu.dot_dimension_numbers<[1], [0], [0], [1], [0, 0, 1, 1], [], []>} : vector<2x32xbf16>, vector<32x32xbf16>, vector<2x32xf32> -> vector<2x32xf32>
      %cst_131 = arith.constant 0.000000e+00 : f32
      %457 = vector.broadcast %cst_131 : f32 to vector<4x32xf32>
      %458 = tpu.concatenate %456, %457 in 0 : vector<2x32xf32>, vector<4x32xf32> -> vector<6x32xf32>
      %c0_132 = arith.constant 0 : index
      %c0_133 = arith.constant 0 : index
      %c0_134 = arith.constant 0 : index
      %459 = vector.load %arg22[%c0_132, %c0_133, %c0_134] : memref<1x6x32xf32, #tpu.memory_space<vmem>>, vector<1x6x32xf32>
      %460 = vector.shape_cast %459 : vector<1x6x32xf32> to vector<6x32xf32>
      %461 = vector.shape_cast %458 : vector<6x32xf32> to vector<1x6x32xf32>
      tpu.vector_store %arg22[%c0_132, %c0_133, %c0_134], %461 {strides = array<i32>} : memref<1x6x32xf32, #tpu.memory_space<vmem>>, vector<1x6x32xf32>,
    } else {
    }
    %c1_i32 = arith.constant 1 : i32
    %3 = arith.cmpi eq, %arg0, %c1_i32 : i32
    %4 = arith.extui %3 : i1 to i32
    %c0_i32_1 = arith.constant 0 : i32
    %5 = arith.cmpi ne, %4, %c0_i32_1 : i32
    scf.if %5 {
      %c0 = arith.constant 0 : index
      %c0_2 = arith.constant 0 : index
      %6 = vector.load %arg15[%c0, %c0_2] : memref<768x32xbf16, #tpu.memory_space<vmem>>, vector<768x32xbf16>
      %c0_3 = arith.constant 0 : index
      %c0_4 = arith.constant 0 : index
      %7 = vector.load %arg21[%c0_3, %c0_4] : memref<2x32xf32, #tpu.memory_space<vmem>>, vector<2x32xf32>
      %8 = vector.extract_strided_slice %7 {offsets = [0, 0], sizes = [1, 32], strides = [1, 1]} : vector<2x32xf32> to vector<1x32xf32>
      %9 = vector.extract_strided_slice %7 {offsets = [1, 0], sizes = [1, 32], strides = [1, 1]} : vector<2x32xf32> to vector<1x32xf32>
      %c0_5 = arith.constant 0 : index
      %c0_6 = arith.constant 0 : index
      %10 = vector.load %arg20[%c0_5, %c0_6] : memref<6x64xf32, #tpu.memory_space<vmem>>, vector<6x64xf32>
      %11 = vector.extract_strided_slice %10 {offsets = [0, 0], sizes = [1, 64], strides = [1, 1]} : vector<6x64xf32> to vector<1x64xf32>
      %12 = vector.extract_strided_slice %10 {offsets = [1, 0], sizes = [1, 64], strides = [1, 1]} : vector<6x64xf32> to vector<1x64xf32>
      %13 = vector.extract_strided_slice %10 {offsets = [2, 0], sizes = [1, 64], strides = [1, 1]} : vector<6x64xf32> to vector<1x64xf32>
      %14 = vector.extract_strided_slice %10 {offsets = [3, 0], sizes = [1, 64], strides = [1, 1]} : vector<6x64xf32> to vector<1x64xf32>
      %15 = vector.extract_strided_slice %10 {offsets = [4, 0], sizes = [1, 64], strides = [1, 1]} : vector<6x64xf32> to vector<1x64xf32>
      %16 = vector.extract_strided_slice %10 {offsets = [5, 0], sizes = [1, 64], strides = [1, 1]} : vector<6x64xf32> to vector<1x64xf32>
      %c0_7 = arith.constant 0 : index
      %c0_8 = arith.constant 0 : index
      %17 = vector.load %arg12[%c0_7, %c0_8] : memref<2x768xf32, #tpu.memory_space<vmem>>, vector<2x768xf32>
      %18 = arith.truncf %17 : vector<2x768xf32> to vector<2x768xbf16>
      %c0_9 = arith.constant 0 : index
      %c0_10 = arith.constant 0 : index
      %19 = vector.load %arg13[%c0_9, %c0_10] : memref<2x768xf32, #tpu.memory_space<vmem>>, vector<2x768xf32>
      %20 = arith.truncf %19 : vector<2x768xf32> to vector<2x768xbf16>
      %c0_11 = arith.constant 0 : index
      %c0_12 = arith.constant 0 : index
      %21 = vector.load %arg14[%c0_11, %c0_12] : memref<2x768xf32, #tpu.memory_space<vmem>>, vector<2x768xf32>
      %22 = arith.truncf %21 : vector<2x768xf32> to vector<2x768xbf16>
      %cst = arith.constant dense<0.000000e+00> : vector<2x32xf32>
      %23 = tpu.matmul %18, %6, %cst {dimension_numbers = #tpu.dot_dimension_numbers<[1], [0], [0], [1], [0, 0, 1, 1], [], []>} : vector<2x768xbf16>, vector<768x32xbf16>, vector<2x32xf32> -> vector<2x32xf32>
      %24 = vector.broadcast %8 : vector<1x32xf32> to vector<2x32xf32>
      %25 = arith.addf %23, %24 : vector<2x32xf32>
      %26 = arith.truncf %25 : vector<2x32xf32> to vector<2x32xbf16>
      %c0_13 = arith.constant 0 : index
      %c0_14 = arith.constant 0 : index
      %27 = vector.load %arg16[%c0_13, %c0_14] : memref<32x32xbf16, #tpu.memory_space<vmem>>, vector<32x32xbf16>
      %cst_15 = arith.constant dense<0.000000e+00> : vector<2x32xf32>
      %28 = tpu.matmul %26, %27, %cst_15 {dimension_numbers = #tpu.dot_dimension_numbers<[1], [0], [0], [1], [0, 0, 1, 1], [], []>} : vector<2x32xbf16>, vector<32x32xbf16>, vector<2x32xf32> -> vector<2x32xf32>
      %29 = tpu.concatenate %20, %22 in 0 : vector<2x768xbf16>, vector<2x768xbf16> -> vector<4x768xbf16>
      %cst_16 = arith.constant dense<0.000000e+00> : vector<4x32xf32>
      %30 = tpu.matmul %29, %6, %cst_16 {dimension_numbers = #tpu.dot_dimension_numbers<[1], [0], [0], [1], [0, 0, 1, 1], [], []>} : vector<4x768xbf16>, vector<768x32xbf16>, vector<4x32xf32> -> vector<4x32xf32>
      %31 = vector.broadcast %8 : vector<1x32xf32> to vector<4x32xf32>
      %32 = arith.addf %30, %31 : vector<4x32xf32>
      %33 = arith.truncf %32 : vector<4x32xf32> to vector<4x32xbf16>
      %c0_17 = arith.constant 0 : index
      %c0_18 = arith.constant 0 : index
      %34 = vector.load %arg17[%c0_17, %c0_18] : memref<32x64xbf16, #tpu.memory_space<vmem>>, vector<32x64xbf16>
      %cst_19 = arith.constant dense<0.000000e+00> : vector<4x64xf32>
      %35 = tpu.matmul %33, %34, %cst_19 {dimension_numbers = #tpu.dot_dimension_numbers<[1], [0], [0], [1], [0, 0, 1, 1], [], []>} : vector<4x32xbf16>, vector<32x64xbf16>, vector<4x64xf32> -> vector<4x64xf32>
      %36 = vector.broadcast %11 : vector<1x64xf32> to vector<4x64xf32>
      %37 = arith.addf %35, %36 : vector<4x64xf32>
      %38 = vector.shape_cast %37 : vector<4x64xf32> to vector<2x2x64xf32>
      %cst_20 = arith.constant dense<0.000000e+00> : vector<2x64xf32>
      %39 = vector.multi_reduction <add>, %38, %cst_20 [1] : vector<2x2x64xf32> to vector<2x64xf32>
      %40 = vector.shape_cast %39 : vector<2x64xf32> to vector<2x1x64xf32>
      %cst_21 = arith.constant 2.000000e+00 : f32
      %41 = vector.broadcast %cst_21 : f32 to vector<2x1x64xf32>
      %42 = arith.divf %40, %41 : vector<2x1x64xf32>
      %43 = vector.broadcast %42 : vector<2x1x64xf32> to vector<2x2x64xf32>
      %44 = arith.subf %38, %43 : vector<2x2x64xf32>
      %45 = arith.mulf %44, %44 : vector<2x2x64xf32>
      %cst_22 = arith.constant dense<0.000000e+00> : vector<2x64xf32>
      %46 = vector.multi_reduction <add>, %45, %cst_22 [1] : vector<2x2x64xf32> to vector<2x64xf32>
      %47 = vector.shape_cast %46 : vector<2x64xf32> to vector<2x1x64xf32>
      %cst_23 = arith.constant 2.000000e+00 : f32
      %48 = vector.broadcast %cst_23 : f32 to vector<2x1x64xf32>
      %49 = arith.divf %47, %48 : vector<2x1x64xf32>
      %50 = vector.broadcast %42 : vector<2x1x64xf32> to vector<2x2x64xf32>
      %51 = arith.subf %38, %50 : vector<2x2x64xf32>
      %cst_24 = arith.constant 9.99999974E-6 : f32
      %52 = vector.broadcast %cst_24 : f32 to vector<2x1x64xf32>
      %53 = arith.addf %49, %52 : vector<2x1x64xf32>
      %54 = math.rsqrt %53 : vector<2x1x64xf32>
      %55 = vector.broadcast %54 : vector<2x1x64xf32> to vector<2x2x64xf32>
      %56 = arith.mulf %51, %55 : vector<2x2x64xf32>
      %57 = vector.shape_cast %12 : vector<1x64xf32> to vector<1x1x64xf32>
      %58 = vector.broadcast %57 : vector<1x1x64xf32> to vector<2x2x64xf32>
      %59 = arith.mulf %56, %58 : vector<2x2x64xf32>
      %60 = vector.shape_cast %13 : vector<1x64xf32> to vector<1x1x64xf32>
      %61 = vector.broadcast %60 : vector<1x1x64xf32> to vector<2x2x64xf32>
      %62 = arith.addf %59, %61 : vector<2x2x64xf32>
      %cst_25 = arith.constant 0.000000e+00 : f32
      %63 = vector.broadcast %cst_25 : f32 to vector<2x2x64xf32>
      %64 = arith.maximumf %62, %63 : vector<2x2x64xf32>
      %65 = vector.shape_cast %64 : vector<2x2x64xf32> to vector<4x64xf32>
      %66 = arith.truncf %65 : vector<4x64xf32> to vector<4x64xbf16>
      %c0_26 = arith.constant 0 : index
      %c0_27 = arith.constant 0 : index
      %67 = vector.load %arg18[%c0_26, %c0_27] : memref<64x64xbf16, #tpu.memory_space<vmem>>, vector<64x64xbf16>
      %cst_28 = arith.constant dense<0.000000e+00> : vector<4x64xf32>
      %68 = tpu.matmul %66, %67, %cst_28 {dimension_numbers = #tpu.dot_dimension_numbers<[1], [0], [0], [1], [0, 0, 1, 1], [], []>} : vector<4x64xbf16>, vector<64x64xbf16>, vector<4x64xf32> -> vector<4x64xf32>
      %69 = vector.broadcast %14 : vector<1x64xf32> to vector<4x64xf32>
      %70 = arith.addf %68, %69 : vector<4x64xf32>
      %71 = vector.shape_cast %70 : vector<4x64xf32> to vector<2x2x64xf32>
      %cst_29 = arith.constant dense<0.000000e+00> : vector<2x64xf32>
      %72 = vector.multi_reduction <add>, %71, %cst_29 [1] : vector<2x2x64xf32> to vector<2x64xf32>
      %73 = vector.shape_cast %72 : vector<2x64xf32> to vector<2x1x64xf32>
      %cst_30 = arith.constant 2.000000e+00 : f32
      %74 = vector.broadcast %cst_30 : f32 to vector<2x1x64xf32>
      %75 = arith.divf %73, %74 : vector<2x1x64xf32>
      %76 = vector.broadcast %75 : vector<2x1x64xf32> to vector<2x2x64xf32>
      %77 = arith.subf %71, %76 : vector<2x2x64xf32>
      %78 = arith.mulf %77, %77 : vector<2x2x64xf32>
      %cst_31 = arith.constant dense<0.000000e+00> : vector<2x64xf32>
      %79 = vector.multi_reduction <add>, %78, %cst_31 [1] : vector<2x2x64xf32> to vector<2x64xf32>
      %80 = vector.shape_cast %79 : vector<2x64xf32> to vector<2x1x64xf32>
      %cst_32 = arith.constant 2.000000e+00 : f32
      %81 = vector.broadcast %cst_32 : f32 to vector<2x1x64xf32>
      %82 = arith.divf %80, %81 : vector<2x1x64xf32>
      %83 = vector.broadcast %75 : vector<2x1x64xf32> to vector<2x2x64xf32>
      %84 = arith.subf %71, %83 : vector<2x2x64xf32>
      %cst_33 = arith.constant 9.99999974E-6 : f32
      %85 = vector.broadcast %cst_33 : f32 to vector<2x1x64xf32>
      %86 = arith.addf %82, %85 : vector<2x1x64xf32>
      %87 = math.rsqrt %86 : vector<2x1x64xf32>
      %88 = vector.broadcast %87 : vector<2x1x64xf32> to vector<2x2x64xf32>
      %89 = arith.mulf %84, %88 : vector<2x2x64xf32>
      %90 = vector.shape_cast %15 : vector<1x64xf32> to vector<1x1x64xf32>
      %91 = vector.broadcast %90 : vector<1x1x64xf32> to vector<2x2x64xf32>
      %92 = arith.mulf %89, %91 : vector<2x2x64xf32>
      %93 = vector.shape_cast %16 : vector<1x64xf32> to vector<1x1x64xf32>
      %94 = vector.broadcast %93 : vector<1x1x64xf32> to vector<2x2x64xf32>
      %95 = arith.addf %92, %94 : vector<2x2x64xf32>
      %cst_34 = arith.constant 0.000000e+00 : f32
      %96 = vector.broadcast %cst_34 : f32 to vector<2x2x64xf32>
      %97 = arith.maximumf %95, %96 : vector<2x2x64xf32>
      %98 = vector.shape_cast %97 : vector<2x2x64xf32> to vector<4x64xf32>
      %99 = arith.truncf %98 : vector<4x64xf32> to vector<4x64xbf16>
      %c0_35 = arith.constant 0 : index
      %c0_36 = arith.constant 0 : index
      %100 = vector.load %arg19[%c0_35, %c0_36] : memref<64x32xbf16, #tpu.memory_space<vmem>>, vector<64x32xbf16>
      %cst_37 = arith.constant dense<0.000000e+00> : vector<4x32xf32>
      %101 = tpu.matmul %99, %100, %cst_37 {dimension_numbers = #tpu.dot_dimension_numbers<[1], [0], [0], [1], [0, 0, 1, 1], [], []>} : vector<4x64xbf16>, vector<64x32xbf16>, vector<4x32xf32> -> vector<4x32xf32>
      %102 = vector.broadcast %9 : vector<1x32xf32> to vector<4x32xf32>
      %103 = arith.addf %101, %102 : vector<4x32xf32>
      %104 = tpu.concatenate %28, %103 in 0 : vector<2x32xf32>, vector<4x32xf32> -> vector<6x32xf32>
      %c0_38 = arith.constant 0 : index
      %c0_39 = arith.constant 0 : index
      %c0_40 = arith.constant 0 : index
      %105 = vector.load %arg22[%c0_38, %c0_39, %c0_40] : memref<1x6x32xf32, #tpu.memory_space<vmem>>, vector<1x6x32xf32>
      %106 = vector.shape_cast %105 : vector<1x6x32xf32> to vector<6x32xf32>
      %107 = vector.shape_cast %104 : vector<6x32xf32> to vector<1x6x32xf32>
      tpu.vector_store %arg22[%c0_38, %c0_39, %c0_40], %107 {strides = array<i32>} : memref<1x6x32xf32, #tpu.memory_space<vmem>>, vector<1x6x32xf32>,
    } else {
    }
    return
  }
  func.func @transform_0(%arg0: i32) -> (i32, i32) {
    %c0_i32 = arith.constant 0 : i32
    %c0_i32_0 = arith.constant 0 : i32
    %c0_i32_1 = arith.constant 0 : i32
    return %c0_i32, %c0_i32_0 : i32, i32
  }
  func.func @transform_1(%arg0: i32) -> (i32, i32, i32) {
    %c0_i32 = arith.constant 0 : i32
    %c0_i32_0 = arith.constant 0 : i32
    %c0_i32_1 = arith.constant 0 : i32
    %c0_i32_2 = arith.constant 0 : i32
    return %c0_i32, %c0_i32_0, %c0_i32_1 : i32, i32, i32
  }
  func.func @transform_2(%arg0: i32) -> (i32, i32, i32) {
    %c0_i32 = arith.constant 0 : i32
    %c0_i32_0 = arith.constant 0 : i32
    %c0_i32_1 = arith.constant 0 : i32
    %c0_i32_2 = arith.constant 0 : i32
    return %c0_i32, %c0_i32_0, %c0_i32_1 : i32, i32, i32
  }
  func.func @transform_3(%arg0: i32) -> (i32, i32, i32) {
    %c0_i32 = arith.constant 0 : i32
    %c0_i32_0 = arith.constant 0 : i32
    %c0_i32_1 = arith.constant 0 : i32
    %c0_i32_2 = arith.constant 0 : i32
    return %c0_i32, %c0_i32_0, %c0_i32_1 : i32, i32, i32
  }
  func.func @transform_4(%arg0: i32) -> (i32, i32, i32) {
    %c0_i32 = arith.constant 0 : i32
    %c0_i32_0 = arith.constant 0 : i32
    %c0_i32_1 = arith.constant 0 : i32
    %c0_i32_2 = arith.constant 0 : i32
    return %c0_i32, %c0_i32_0, %c0_i32_1 : i32, i32, i32
  }
  func.func @transform_5(%arg0: i32) -> (i32, i32, i32) {
    %c0_i32 = arith.constant 0 : i32
    %c0_i32_0 = arith.constant 0 : i32
    %c0_i32_1 = arith.constant 0 : i32
    %c0_i32_2 = arith.constant 0 : i32
    return %c0_i32, %c0_i32_0, %c0_i32_1 : i32, i32, i32
  }
  func.func @transform_6(%arg0: i32) -> (i32, i32, i32) {
    %c0_i32 = arith.constant 0 : i32
    %c0_i32_0 = arith.constant 0 : i32
    %c0_i32_1 = arith.constant 0 : i32
    %c0_i32_2 = arith.constant 0 : i32
    return %c0_i32, %c0_i32_0, %c0_i32_1 : i32, i32, i32
  }
  func.func @transform_7(%arg0: i32) -> (i32, i32, i32) {
    %c0_i32 = arith.constant 0 : i32
    %c0_i32_0 = arith.constant 0 : i32
    %c0_i32_1 = arith.constant 0 : i32
    %c0_i32_2 = arith.constant 0 : i32
    return %c0_i32, %c0_i32_0, %c0_i32_1 : i32, i32, i32
  }
  func.func @transform_8(%arg0: i32) -> (i32, i32, i32) {
    %c0_i32 = arith.constant 0 : i32
    %c0_i32_0 = arith.constant 0 : i32
    %c0_i32_1 = arith.constant 0 : i32
    %c0_i32_2 = arith.constant 0 : i32
    return %c0_i32, %c0_i32_0, %c0_i32_1 : i32, i32, i32
  }
  func.func @transform_9(%arg0: i32) -> (i32, i32) {
    %c0_i32 = arith.constant 0 : i32
    %c0_i32_0 = arith.constant 0 : i32
    %c0_i32_1 = arith.constant 0 : i32
    return %c0_i32, %c0_i32_0 : i32, i32
  }
  func.func @transform_10(%arg0: i32) -> (i32, i32) {
    %c0_i32 = arith.constant 0 : i32
    %c0_i32_0 = arith.constant 0 : i32
    %c0_i32_1 = arith.constant 0 : i32
    return %c0_i32, %c0_i32_0 : i32, i32
  }
  func.func @transform_11(%arg0: i32) -> (i32, i32) {
    %c0_i32 = arith.constant 0 : i32
    %c0_i32_0 = arith.constant 0 : i32
    %c0_i32_1 = arith.constant 0 : i32
    return %c0_i32, %c0_i32_0 : i32, i32
  }
  func.func @transform_12(%arg0: i32) -> (i32, i32) {
    %c0_i32 = arith.constant 0 : i32
    %c0_i32_0 = arith.constant 0 : i32
    %c0_i32_1 = arith.constant 0 : i32
    return %c0_i32, %c0_i32_0 : i32, i32
  }
  func.func @transform_13(%arg0: i32) -> (i32, i32) {
    %c0_i32 = arith.constant 0 : i32
    %c0_i32_0 = arith.constant 0 : i32
    %c0_i32_1 = arith.constant 0 : i32
    return %c0_i32, %c0_i32_0 : i32, i32
  }
  func.func @transform_14(%arg0: i32) -> (i32, i32) {
    %c0_i32 = arith.constant 0 : i32
    %c0_i32_0 = arith.constant 0 : i32
    %c0_i32_1 = arith.constant 0 : i32
    return %c0_i32, %c0_i32_0 : i32, i32
  }
  func.func @transform_15(%arg0: i32) -> (i32, i32) {
    %c0_i32 = arith.constant 0 : i32
    %c0_i32_0 = arith.constant 0 : i32
    %c0_i32_1 = arith.constant 0 : i32
    return %c0_i32, %c0_i32_0 : i32, i32
  }
  func.func @transform_16(%arg0: i32) -> (i32, i32) {
    %c0_i32 = arith.constant 0 : i32
    %c0_i32_0 = arith.constant 0 : i32
    %c0_i32_1 = arith.constant 0 : i32
    return %c0_i32, %c0_i32_0 : i32, i32
  }
  func.func @transform_17(%arg0: i32) -> (i32, i32) {
    %c0_i32 = arith.constant 0 : i32
    %c0_i32_0 = arith.constant 0 : i32
    %c0_i32_1 = arith.constant 0 : i32
    return %c0_i32, %c0_i32_0 : i32, i32
  }
  func.func @transform_18(%arg0: i32) -> (i32, i32) {
    %c0_i32 = arith.constant 0 : i32
    %c0_i32_0 = arith.constant 0 : i32
    %c0_i32_1 = arith.constant 0 : i32
    return %c0_i32, %c0_i32_0 : i32, i32
  }
  func.func @transform_19(%arg0: i32) -> (i32, i32) {
    %c0_i32 = arith.constant 0 : i32
    %c0_i32_0 = arith.constant 0 : i32
    %c0_i32_1 = arith.constant 0 : i32
    return %c0_i32, %c0_i32_0 : i32, i32
  }
  func.func @transform_20(%arg0: i32) -> (i32, i32) {
    %c0_i32 = arith.constant 0 : i32
    %c0_i32_0 = arith.constant 0 : i32
    %c0_i32_1 = arith.constant 0 : i32
    return %c0_i32, %c0_i32_0 : i32, i32
  }
  func.func @transform_21(%arg0: i32) -> (i32, i32, i32) {
    %c0_i32 = arith.constant 0 : i32
    %c0_i32_0 = arith.constant 0 : i32
    %c0_i32_1 = arith.constant 0 : i32
    return %arg0, %c0_i32, %c0_i32_0 : i32, i32, i32
  }
}

</mosaic_0001>

<llo_original>
// kernel: slip_forward.1
$region0: #{slip_forward.1}
  #allocation0 [shape = 'u32[]', space=smem, size = 0x4, offset = 0x4, fixed_abs, tag = 'smem constant byte address 0x4 - core index']
  #allocation1 [shape = 'u32[144,128]{1,0:T(1,128)}', space=vmem, size = 0x12000, scoped, tag = 'internal scratch']
  %s0 = inlined_call_operand.vmem [shape: s32[2,1], index: 0, kind: input, shape index: {}]
  %s1 = inlined_call_operand.vmem [shape: f32[2,8,32], index: 1, kind: input, shape index: {}]
  %s2 = inlined_call_operand.vmem [shape: bf16[2,32,96], index: 2, kind: input, shape index: {}]
  %s3 = inlined_call_operand.vmem [shape: f32[2,1,96], index: 3, kind: input, shape index: {}]
  %s4 = inlined_call_operand.vmem [shape: bf16[2,32,32], index: 4, kind: input, shape index: {}]
  %s5 = inlined_call_operand.vmem [shape: f32[2,6,32], index: 5, kind: input, shape index: {}]
  %s6 = inlined_call_operand.vmem [shape: bf16[2,32,128], index: 6, kind: input, shape index: {}]
  %s7 = inlined_call_operand.vmem [shape: f32[2,1,128], index: 7, kind: input, shape index: {}]
  %s8 = inlined_call_operand.vmem [shape: bf16[2,128,32], index: 8, kind: input, shape index: {}]
  %s9 = inlined_call_operand.vmem [shape: f32[2,32], index: 9, kind: input, shape index: {}]
  %s10 = inlined_call_operand.vmem [shape: bf16[32,32], index: 10, kind: input, shape index: {}]
  %s11 = inlined_call_operand.vmem [shape: f32[2,768], index: 11, kind: input, shape index: {}]
  %s12 = inlined_call_operand.vmem [shape: f32[2,768], index: 12, kind: input, shape index: {}]
  %s13 = inlined_call_operand.vmem [shape: f32[2,768], index: 13, kind: input, shape index: {}]
  %s14 = inlined_call_operand.vmem [shape: bf16[768,32], index: 14, kind: input, shape index: {}]
  %s15 = inlined_call_operand.vmem [shape: bf16[32,32], index: 15, kind: input, shape index: {}]
  %s16 = inlined_call_operand.vmem [shape: bf16[32,64], index: 16, kind: input, shape index: {}]
  %s17 = inlined_call_operand.vmem [shape: bf16[64,64], index: 17, kind: input, shape index: {}]
  %s18 = inlined_call_operand.vmem [shape: bf16[64,32], index: 18, kind: input, shape index: {}]
  %s19 = inlined_call_operand.vmem [shape: f32[6,64], index: 19, kind: input, shape index: {}]
  %s20 = inlined_call_operand.vmem [shape: f32[2,32], index: 20, kind: input, shape index: {}]
  %s21 = inlined_call_operand.vmem [shape: f32[2,6,32], index: 21, kind: output, shape index: {}]
  %s22 = sld [smem:[#allocation0]]
  $region125: #{slip_forward.1} parent=0
    _
  %s24 = ssub.s32 1, %s22
  %s25 = scalar_select 0, %s24, %s22
  loop: start=0, step=1, limit=4
  $region2: #{slip_forward.1} parent=0 // loop_pre_header
    _
  $region3: #{slip_forward.1} parent=0 // loop_header
    %s27 = sphi 0, %s31
    %p28 = scmp.ge.s32.totalorder %s27, 4
    %s35 = sphi 0, %s35
    %s37 = sphi 0, %s35
    %s38 = sphi 0, %s37
    %s52 = sphi 0, %s38
    %s56 = sphi 0, %s56
    %s58 = sphi 0, %s56
    %s59 = sphi 0, %s58
    %s73 = sphi 0, %s59
    %s77 = sphi 0, %s77
    %s79 = sphi 0, %s77
    %s80 = sphi 0, %s79
    %s94 = sphi 0, %s80
    %s98 = sphi 0, %s98
    %s100 = sphi 0, %s98
    %s101 = sphi 0, %s100
    %s115 = sphi 0, %s101
    %s119 = sphi 0, %s119
    %s121 = sphi 0, %s119
    %s122 = sphi 0, %s121
    %s136 = sphi 0, %s122
    %s140 = sphi 0, %s140
    %s142 = sphi 0, %s140
    %s143 = sphi 0, %s142
    %s157 = sphi 0, %s143
    %s161 = sphi 0, %s161
    %s163 = sphi 0, %s161
    %s164 = sphi 0, %s163
    %s178 = sphi 0, %s164
    %s182 = sphi 0, %s182
    %s184 = sphi 0, %s182
    %s185 = sphi 0, %s184
    %s199 = sphi 0, %s185
    %s203 = sphi 0, %s203
    %s205 = sphi 0, %s203
    %s206 = sphi 0, %s205
    %s220 = sphi 0, %s206
    %s224 = sphi 0, %s224
    %s226 = sphi 0, %s224
    %s227 = sphi 0, %s226
    %s241 = sphi 0, %s227
    %s245 = sphi 0, %s245
    %s247 = sphi 0, %s245
    %s248 = sphi 0, %s247
    %s262 = sphi 0, %s248
    %s266 = sphi 0, %s266
    %s268 = sphi 0, %s266
    %s269 = sphi 0, %s268
    %s283 = sphi 0, %s269
    %s287 = sphi 0, %s287
    %s289 = sphi 0, %s287
    %s290 = sphi 0, %s289
    %s304 = sphi 0, %s290
    %s308 = sphi 0, %s308
    %s310 = sphi 0, %s308
    %s311 = sphi 0, %s310
    %s325 = sphi 0, %s311
    %s329 = sphi 0, %s329
    %s331 = sphi 0, %s329
    %s332 = sphi 0, %s331
    %s346 = sphi 0, %s332
    %s350 = sphi 0, %s350
    %s352 = sphi 0, %s350
    %s353 = sphi 0, %s352
    %s367 = sphi 0, %s353
    %s371 = sphi 0, %s371
    %s373 = sphi 0, %s371
    %s374 = sphi 0, %s373
    %s388 = sphi 0, %s374
    %s392 = sphi 0, %s392
    %s394 = sphi 0, %s392
    %s395 = sphi 0, %s394
    %s409 = sphi 0, %s395
    %s413 = sphi 0, %s413
    %s415 = sphi 0, %s413
    %s416 = sphi 0, %s415
    %s430 = sphi 0, %s416
    %s434 = sphi 0, %s434
    %s436 = sphi 0, %s434
    %s437 = sphi 0, %s436
    %s451 = sphi 0, %s437
    %s455 = sphi 0, %s455
    %s457 = sphi 0, %s455
    %s458 = sphi 0, %s457
    %s472 = sphi 0, %s458
    %s478 = sphi 0, %s480
    %s481 = sphi 0, %s478
    %s482 = sphi 0, %s481
    %s498 = sphi 0, %s482
  $region4: #{slip_forward.1} parent=0 // loop_header_branch
    %30 = sbr.rel (%p28) target = $region8
  $region5: #{slip_forward.1} parent=0 // loop_body
    %s32 = ssub.s32 %s27, 1
    %s33 = ssub.s32 %s27, 2
    %s34 = sadd.s32 %s27, 1
    %s36 = sadd.s32 %s35, 1
    %p39 = scmp.eq.s32.totalorder %s27, 1
    %p40 = scmp.ne.s32.totalorder %s35, %s37
    %p41 = scmp.eq.s32.totalorder %s27, 0
    %p42 = por %p40, %p41
    %p43 = scmp.ne.s32.totalorder %s35, %s37
    %p44 = scmp.eq.s32.totalorder %s32, 1
    %p45 = por %p43, %p44
    %p46 = scmp.ne.s32.totalorder %s37, %s38
    %p47 = scmp.eq.s32.totalorder %s32, 0
    %p48 = por %p46, %p47
    %p49 = scmp.ne.s32.totalorder %s37, %s38
    %p50 = scmp.eq.s32.totalorder %s33, 1
    %p51 = por %p49, %p50
    %p53 = scmp.ne.s32.totalorder %s38, %s52
    %p54 = scmp.eq.s32.totalorder %s33, 0
    %p55 = por %p53, %p54
    %s57 = sadd.s32 %s56, 1
    %p60 = scmp.eq.s32.totalorder %s27, 1
    %p61 = scmp.ne.s32.totalorder %s56, %s58
    %p62 = scmp.eq.s32.totalorder %s27, 0
    %p63 = por %p61, %p62
    %p64 = scmp.ne.s32.totalorder %s56, %s58
    %p65 = scmp.eq.s32.totalorder %s32, 1
    %p66 = por %p64, %p65
    %p67 = scmp.ne.s32.totalorder %s58, %s59
    %p68 = scmp.eq.s32.totalorder %s32, 0
    %p69 = por %p67, %p68
    %p70 = scmp.ne.s32.totalorder %s58, %s59
    %p71 = scmp.eq.s32.totalorder %s33, 1
    %p72 = por %p70, %p71
    %p74 = scmp.ne.s32.totalorder %s59, %s73
    %p75 = scmp.eq.s32.totalorder %s33, 0
    %p76 = por %p74, %p75
    %s78 = sadd.s32 %s77, 1
    %p81 = scmp.eq.s32.totalorder %s27, 1
    %p82 = scmp.ne.s32.totalorder %s77, %s79
    %p83 = scmp.eq.s32.totalorder %s27, 0
    %p84 = por %p82, %p83
    %p85 = scmp.ne.s32.totalorder %s77, %s79
    %p86 = scmp.eq.s32.totalorder %s32, 1
    %p87 = por %p85, %p86
    %p88 = scmp.ne.s32.totalorder %s79, %s80
    %p89 = scmp.eq.s32.totalorder %s32, 0
    %p90 = por %p88, %p89
    %p91 = scmp.ne.s32.totalorder %s79, %s80
    %p92 = scmp.eq.s32.totalorder %s33, 1
    %p93 = por %p91, %p92
    %p95 = scmp.ne.s32.totalorder %s80, %s94
    %p96 = scmp.eq.s32.totalorder %s33, 0
    %p97 = por %p95, %p96
    %s99 = sadd.s32 %s98, 1
    %p102 = scmp.eq.s32.totalorder %s27, 1
    %p103 = scmp.ne.s32.totalorder %s98, %s100
    %p104 = scmp.eq.s32.totalorder %s27, 0
    %p105 = por %p103, %p104
    %p106 = scmp.ne.s32.totalorder %s98, %s100
    %p107 = scmp.eq.s32.totalorder %s32, 1
    %p108 = por %p106, %p107
    %p109 = scmp.ne.s32.totalorder %s100, %s101
    %p110 = scmp.eq.s32.totalorder %s32, 0
    %p111 = por %p109, %p110
    %p112 = scmp.ne.s32.totalorder %s100, %s101
    %p113 = scmp.eq.s32.totalorder %s33, 1
    %p114 = por %p112, %p113
    %p116 = scmp.ne.s32.totalorder %s101, %s115
    %p117 = scmp.eq.s32.totalorder %s33, 0
    %p118 = por %p116, %p117
    %s120 = sadd.s32 %s119, 1
    %p123 = scmp.eq.s32.totalorder %s27, 1
    %p124 = scmp.ne.s32.totalorder %s119, %s121
    %p125 = scmp.eq.s32.totalorder %s27, 0
    %p126 = por %p124, %p125
    %p127 = scmp.ne.s32.totalorder %s119, %s121
    %p128 = scmp.eq.s32.totalorder %s32, 1
    %p129 = por %p127, %p128
    %p130 = scmp.ne.s32.totalorder %s121, %s122
    %p131 = scmp.eq.s32.totalorder %s32, 0
    %p132 = por %p130, %p131
    %p133 = scmp.ne.s32.totalorder %s121, %s122
    %p134 = scmp.eq.s32.totalorder %s33, 1
    %p135 = por %p133, %p134
    %p137 = scmp.ne.s32.totalorder %s122, %s136
    %p138 = scmp.eq.s32.totalorder %s33, 0
    %p139 = por %p137, %p138
    %s141 = sadd.s32 %s140, 1
    %p144 = scmp.eq.s32.totalorder %s27, 1
    %p145 = scmp.ne.s32.totalorder %s140, %s142
    %p146 = scmp.eq.s32.totalorder %s27, 0
    %p147 = por %p145, %p146
    %p148 = scmp.ne.s32.totalorder %s140, %s142
    %p149 = scmp.eq.s32.totalorder %s32, 1
    %p150 = por %p148, %p149
    %p151 = scmp.ne.s32.totalorder %s142, %s143
    %p152 = scmp.eq.s32.totalorder %s32, 0
    %p153 = por %p151, %p152
    %p154 = scmp.ne.s32.totalorder %s142, %s143
    %p155 = scmp.eq.s32.totalorder %s33, 1
    %p156 = por %p154, %p155
    %p158 = scmp.ne.s32.totalorder %s143, %s157
    %p159 = scmp.eq.s32.totalorder %s33, 0
    %p160 = por %p158, %p159
    %s162 = sadd.s32 %s161, 1
    %p165 = scmp.eq.s32.totalorder %s27, 1
    %p166 = scmp.ne.s32.totalorder %s161, %s163
    %p167 = scmp.eq.s32.totalorder %s27, 0
    %p168 = por %p166, %p167
    %p169 = scmp.ne.s32.totalorder %s161, %s163
    %p170 = scmp.eq.s32.totalorder %s32, 1
    %p171 = por %p169, %p170
    %p172 = scmp.ne.s32.totalorder %s163, %s164
    %p173 = scmp.eq.s32.totalorder %s32, 0
    %p174 = por %p172, %p173
    %p175 = scmp.ne.s32.totalorder %s163, %s164
    %p176 = scmp.eq.s32.totalorder %s33, 1
    %p177 = por %p175, %p176
    %p179 = scmp.ne.s32.totalorder %s164, %s178
    %p180 = scmp.eq.s32.totalorder %s33, 0
    %p181 = por %p179, %p180
    %s183 = sadd.s32 %s182, 1
    %p186 = scmp.eq.s32.totalorder %s27, 1
    %p187 = scmp.ne.s32.totalorder %s182, %s184
    %p188 = scmp.eq.s32.totalorder %s27, 0
    %p189 = por %p187, %p188
    %p190 = scmp.ne.s32.totalorder %s182, %s184
    %p191 = scmp.eq.s32.totalorder %s32, 1
    %p192 = por %p190, %p191
    %p193 = scmp.ne.s32.totalorder %s184, %s185
    %p194 = scmp.eq.s32.totalorder %s32, 0
    %p195 = por %p193, %p194
    %p196 = scmp.ne.s32.totalorder %s184, %s185
    %p197 = scmp.eq.s32.totalorder %s33, 1
    %p198 = por %p196, %p197
    %p200 = scmp.ne.s32.totalorder %s185, %s199
    %p201 = scmp.eq.s32.totalorder %s33, 0
    %p202 = por %p200, %p201
    %s204 = sadd.s32 %s203, 1
    %p207 = scmp.eq.s32.totalorder %s27, 1
    %p208 = scmp.ne.s32.totalorder %s203, %s205
    %p209 = scmp.eq.s32.totalorder %s27, 0
    %p210 = por %p208, %p209
    %p211 = scmp.ne.s32.totalorder %s203, %s205
    %p212 = scmp.eq.s32.totalorder %s32, 1
    %p213 = por %p211, %p212
    %p214 = scmp.ne.s32.totalorder %s205, %s206
    %p215 = scmp.eq.s32.totalorder %s32, 0
    %p216 = por %p214, %p215
    %p217 = scmp.ne.s32.totalorder %s205, %s206
    %p218 = scmp.eq.s32.totalorder %s33, 1
    %p219 = por %p217, %p218
    %p221 = scmp.ne.s32.totalorder %s206, %s220
    %p222 = scmp.eq.s32.totalorder %s33, 0
    %p223 = por %p221, %p222
    %s225 = sadd.s32 %s224, 1
    %p228 = scmp.eq.s32.totalorder %s27, 1
    %p229 = scmp.ne.s32.totalorder %s224, %s226
    %p230 = scmp.eq.s32.totalorder %s27, 0
    %p231 = por %p229, %p230
    %p232 = scmp.ne.s32.totalorder %s224, %s226
    %p233 = scmp.eq.s32.totalorder %s32, 1
    %p234 = por %p232, %p233
    %p235 = scmp.ne.s32.totalorder %s226, %s227
    %p236 = scmp.eq.s32.totalorder %s32, 0
    %p237 = por %p235, %p236
    %p238 = scmp.ne.s32.totalorder %s226, %s227
    %p239 = scmp.eq.s32.totalorder %s33, 1
    %p240 = por %p238, %p239
    %p242 = scmp.ne.s32.totalorder %s227, %s241
    %p243 = scmp.eq.s32.totalorder %s33, 0
    %p244 = por %p242, %p243
    %s246 = sadd.s32 %s245, 1
    %p249 = scmp.eq.s32.totalorder %s27, 1
    %p250 = scmp.ne.s32.totalorder %s245, %s247
    %p251 = scmp.eq.s32.totalorder %s27, 0
    %p252 = por %p250, %p251
    %p253 = scmp.ne.s32.totalorder %s245, %s247
    %p254 = scmp.eq.s32.totalorder %s32, 1
    %p255 = por %p253, %p254
    %p256 = scmp.ne.s32.totalorder %s247, %s248
    %p257 = scmp.eq.s32.totalorder %s32, 0
    %p258 = por %p256, %p257
    %p259 = scmp.ne.s32.totalorder %s247, %s248
    %p260 = scmp.eq.s32.totalorder %s33, 1
    %p261 = por %p259, %p260
    %p263 = scmp.ne.s32.totalorder %s248, %s262
    %p264 = scmp.eq.s32.totalorder %s33, 0
    %p265 = por %p263, %p264
    %s267 = sadd.s32 %s266, 1
    %p270 = scmp.eq.s32.totalorder %s27, 1
    %p271 = scmp.ne.s32.totalorder %s266, %s268
    %p272 = scmp.eq.s32.totalorder %s27, 0
    %p273 = por %p271, %p272
    %p274 = scmp.ne.s32.totalorder %s266, %s268
    %p275 = scmp.eq.s32.totalorder %s32, 1
    %p276 = por %p274, %p275
    %p277 = scmp.ne.s32.totalorder %s268, %s269
    %p278 = scmp.eq.s32.totalorder %s32, 0
    %p279 = por %p277, %p278
    %p280 = scmp.ne.s32.totalorder %s268, %s269
    %p281 = scmp.eq.s32.totalorder %s33, 1
    %p282 = por %p280, %p281
    %p284 = scmp.ne.s32.totalorder %s269, %s283
    %p285 = scmp.eq.s32.totalorder %s33, 0
    %p286 = por %p284, %p285
    %s288 = sadd.s32 %s287, 1
    %p291 = scmp.eq.s32.totalorder %s27, 1
    %p292 = scmp.ne.s32.totalorder %s287, %s289
    %p293 = scmp.eq.s32.totalorder %s27, 0
    %p294 = por %p292, %p293
    %p295 = scmp.ne.s32.totalorder %s287, %s289
    %p296 = scmp.eq.s32.totalorder %s32, 1
    %p297 = por %p295, %p296
    %p298 = scmp.ne.s32.totalorder %s289, %s290
    %p299 = scmp.eq.s32.totalorder %s32, 0
    %p300 = por %p298, %p299
    %p301 = scmp.ne.s32.totalorder %s289, %s290
    %p302 = scmp.eq.s32.totalorder %s33, 1
    %p303 = por %p301, %p302
    %p305 = scmp.ne.s32.totalorder %s290, %s304
    %p306 = scmp.eq.s32.totalorder %s33, 0
    %p307 = por %p305, %p306
    %s309 = sadd.s32 %s308, 1
    %p312 = scmp.eq.s32.totalorder %s27, 1
    %p313 = scmp.ne.s32.totalorder %s308, %s310
    %p314 = scmp.eq.s32.totalorder %s27, 0
    %p315 = por %p313, %p314
    %p316 = scmp.ne.s32.totalorder %s308, %s310
    %p317 = scmp.eq.s32.totalorder %s32, 1
    %p318 = por %p316, %p317
    %p319 = scmp.ne.s32.totalorder %s310, %s311
    %p320 = scmp.eq.s32.totalorder %s32, 0
    %p321 = por %p319, %p320
    %p322 = scmp.ne.s32.totalorder %s310, %s311
    %p323 = scmp.eq.s32.totalorder %s33, 1
    %p324 = por %p322, %p323
    %p326 = scmp.ne.s32.totalorder %s311, %s325
    %p327 = scmp.eq.s32.totalorder %s33, 0
    %p328 = por %p326, %p327
    %s330 = sadd.s32 %s329, 1
    %p333 = scmp.eq.s32.totalorder %s27, 1
    %p334 = scmp.ne.s32.totalorder %s329, %s331
    %p335 = scmp.eq.s32.totalorder %s27, 0
    %p336 = por %p334, %p335
    %p337 = scmp.ne.s32.totalorder %s329, %s331
    %p338 = scmp.eq.s32.totalorder %s32, 1
    %p339 = por %p337, %p338
    %p340 = scmp.ne.s32.totalorder %s331, %s332
    %p341 = scmp.eq.s32.totalorder %s32, 0
    %p342 = por %p340, %p341
    %p343 = scmp.ne.s32.totalorder %s331, %s332
    %p344 = scmp.eq.s32.totalorder %s33, 1
    %p345 = por %p343, %p344
    %p347 = scmp.ne.s32.totalorder %s332, %s346
    %p348 = scmp.eq.s32.totalorder %s33, 0
    %p349 = por %p347, %p348
    %s351 = sadd.s32 %s350, 1
    %p354 = scmp.eq.s32.totalorder %s27, 1
    %p355 = scmp.ne.s32.totalorder %s350, %s352
    %p356 = scmp.eq.s32.totalorder %s27, 0
    %p357 = por %p355, %p356
    %p358 = scmp.ne.s32.totalorder %s350, %s352
    %p359 = scmp.eq.s32.totalorder %s32, 1
    %p360 = por %p358, %p359
    %p361 = scmp.ne.s32.totalorder %s352, %s353
    %p362 = scmp.eq.s32.totalorder %s32, 0
    %p363 = por %p361, %p362
    %p364 = scmp.ne.s32.totalorder %s352, %s353
    %p365 = scmp.eq.s32.totalorder %s33, 1
    %p366 = por %p364, %p365
    %p368 = scmp.ne.s32.totalorder %s353, %s367
    %p369 = scmp.eq.s32.totalorder %s33, 0
    %p370 = por %p368, %p369
    %s372 = sadd.s32 %s371, 1
    %p375 = scmp.eq.s32.totalorder %s27, 1
    %p376 = scmp.ne.s32.totalorder %s371, %s373
    %p377 = scmp.eq.s32.totalorder %s27, 0
    %p378 = por %p376, %p377
    %p379 = scmp.ne.s32.totalorder %s371, %s373
    %p380 = scmp.eq.s32.totalorder %s32, 1
    %p381 = por %p379, %p380
    %p382 = scmp.ne.s32.totalorder %s373, %s374
    %p383 = scmp.eq.s32.totalorder %s32, 0
    %p384 = por %p382, %p383
    %p385 = scmp.ne.s32.totalorder %s373, %s374
    %p386 = scmp.eq.s32.totalorder %s33, 1
    %p387 = por %p385, %p386
    %p389 = scmp.ne.s32.totalorder %s374, %s388
    %p390 = scmp.eq.s32.totalorder %s33, 0
    %p391 = por %p389, %p390
    %s393 = sadd.s32 %s392, 1
    %p396 = scmp.eq.s32.totalorder %s27, 1
    %p397 = scmp.ne.s32.totalorder %s392, %s394
    %p398 = scmp.eq.s32.totalorder %s27, 0
    %p399 = por %p397, %p398
    %p400 = scmp.ne.s32.totalorder %s392, %s394
    %p401 = scmp.eq.s32.totalorder %s32, 1
    %p402 = por %p400, %p401
    %p403 = scmp.ne.s32.totalorder %s394, %s395
    %p404 = scmp.eq.s32.totalorder %s32, 0
    %p405 = por %p403, %p404
    %p406 = scmp.ne.s32.totalorder %s394, %s395
    %p407 = scmp.eq.s32.totalorder %s33, 1
    %p408 = por %p406, %p407
    %p410 = scmp.ne.s32.totalorder %s395, %s409
    %p411 = scmp.eq.s32.totalorder %s33, 0
    %p412 = por %p410, %p411
    %s414 = sadd.s32 %s413, 1
    %p417 = scmp.eq.s32.totalorder %s27, 1
    %p418 = scmp.ne.s32.totalorder %s413, %s415
    %p419 = scmp.eq.s32.totalorder %s27, 0
    %p420 = por %p418, %p419
    %p421 = scmp.ne.s32.totalorder %s413, %s415
    %p422 = scmp.eq.s32.totalorder %s32, 1
    %p423 = por %p421, %p422
    %p424 = scmp.ne.s32.totalorder %s415, %s416
    %p425 = scmp.eq.s32.totalorder %s32, 0
    %p426 = por %p424, %p425
    %p427 = scmp.ne.s32.totalorder %s415, %s416
    %p428 = scmp.eq.s32.totalorder %s33, 1
    %p429 = por %p427, %p428
    %p431 = scmp.ne.s32.totalorder %s416, %s430
    %p432 = scmp.eq.s32.totalorder %s33, 0
    %p433 = por %p431, %p432
    %s435 = sadd.s32 %s434, 1
    %p438 = scmp.eq.s32.totalorder %s27, 1
    %p439 = scmp.ne.s32.totalorder %s434, %s436
    %p440 = scmp.eq.s32.totalorder %s27, 0
    %p441 = por %p439, %p440
    %p442 = scmp.ne.s32.totalorder %s434, %s436
    %p443 = scmp.eq.s32.totalorder %s32, 1
    %p444 = por %p442, %p443
    %p445 = scmp.ne.s32.totalorder %s436, %s437
    %p446 = scmp.eq.s32.totalorder %s32, 0
    %p447 = por %p445, %p446
    %p448 = scmp.ne.s32.totalorder %s436, %s437
    %p449 = scmp.eq.s32.totalorder %s33, 1
    %p450 = por %p448, %p449
    %p452 = scmp.ne.s32.totalorder %s437, %s451
    %p453 = scmp.eq.s32.totalorder %s33, 0
    %p454 = por %p452, %p453
    %s456 = sadd.s32 %s455, 1
    %p459 = scmp.eq.s32.totalorder %s27, 1
    %p460 = scmp.ne.s32.totalorder %s455, %s457
    %p461 = scmp.eq.s32.totalorder %s27, 0
    %p462 = por %p460, %p461
    %p463 = scmp.ne.s32.totalorder %s455, %s457
    %p464 = scmp.eq.s32.totalorder %s32, 1
    %p465 = por %p463, %p464
    %p466 = scmp.ne.s32.totalorder %s457, %s458
    %p467 = scmp.eq.s32.totalorder %s32, 0
    %p468 = por %p466, %p467
    %p469 = scmp.ne.s32.totalorder %s457, %s458
    %p470 = scmp.eq.s32.totalorder %s33, 1
    %p471 = por %p469, %p470
    %p473 = scmp.ne.s32.totalorder %s458, %s472
    %p474 = scmp.eq.s32.totalorder %s33, 0
    %p475 = por %p473, %p474
    %s476 = ssub.s32 %s27, %s34
    %p477 = scmp.eq.s32.totalorder %s476, 0
    %s479 = sadd.s32 %s478, 1
    %s480 = scalar_select %p477, %s478, %s479
    %p483 = pneg %p477
    %p484 = scmp.eq.s32.totalorder %s27, 1
    %p485 = por %p483, %p484
    %p486 = scmp.ne.s32.totalorder %s478, %s481
    %p487 = scmp.eq.s32.totalorder %s27, 0
    %p488 = por %p486, %p487
    %p489 = scmp.ne.s32.totalorder %s478, %s481
    %p490 = scmp.eq.s32.totalorder %s32, 1
    %p491 = por %p489, %p490
    %p492 = scmp.ne.s32.totalorder %s481, %s482
    %p493 = scmp.eq.s32.totalorder %s32, 0
    %p494 = por %p492, %p493
    %p495 = scmp.ne.s32.totalorder %s481, %s482
    %p496 = scmp.eq.s32.totalorder %s33, 1
    %p497 = por %p495, %p496
    %p499 = scmp.ne.s32.totalorder %s482, %s498
    %p500 = scmp.eq.s32.totalorder %s33, 0
    %p501 = por %p499, %p500
    %p502 = scmp.le.s32.totalorder 1, %s27
    %p503 = scmp.lt.s32.totalorder %s27, 3
    %p504 = pnand %p502, %p503
    %p505 = pneg %p504
    // Predicated region
    $region9: #{slip_forward.1} parent=5 // pred_check
      _
    $region10: #{slip_forward.1} parent=5 // pred_check_branch
      %507 = sbr.rel (%p504) target = $region12
    $region11: #{slip_forward.1} parent=5 // pred_region
      %s508 = ssub.s32 %s27, 1
      // Predicated region
      $region13: #{slip_forward.1} parent=11 // pred_check
        %p509 = pneg %p48
      $region14: #{slip_forward.1} parent=11 // pred_check_branch
        %511 = sbr.rel (%p509) target = $region16
      $region15: #{slip_forward.1} parent=11 // pred_region
        _
      $region16: #{slip_forward.1} parent=11 // pred_fallthru
        _
      // Predicated region
      $region17: #{slip_forward.1} parent=11 // pred_check
        %p512 = pneg %p69
      $region18: #{slip_forward.1} parent=11 // pred_check_branch
        %514 = sbr.rel (%p512) target = $region20
      $region19: #{slip_forward.1} parent=11 // pred_region
        _
      $region20: #{slip_forward.1} parent=11 // pred_fallthru
        _
      // Predicated region
      $region21: #{slip_forward.1} parent=11 // pred_check
        %p515 = pneg %p90
      $region22: #{slip_forward.1} parent=11 // pred_check_branch
        %517 = sbr.rel (%p515) target = $region24
      $region23: #{slip_forward.1} parent=11 // pred_region
        _
      $region24: #{slip_forward.1} parent=11 // pred_fallthru
        _
      // Predicated region
      $region25: #{slip_forward.1} parent=11 // pred_check
        %p518 = pneg %p111
      $region26: #{slip_forward.1} parent=11 // pred_check_branch
        %520 = sbr.rel (%p518) target = $region28
      $region27: #{slip_forward.1} parent=11 // pred_region
        _
      $region28: #{slip_forward.1} parent=11 // pred_fallthru
        _
      // Predicated region
      $region29: #{slip_forward.1} parent=11 // pred_check
        %p521 = pneg %p132
      $region30: #{slip_forward.1} parent=11 // pred_check_branch
        %523 = sbr.rel (%p521) target = $region32
      $region31: #{slip_forward.1} parent=11 // pred_region
        _
      $region32: #{slip_forward.1} parent=11 // pred_fallthru
        _
      // Predicated region
      $region33: #{slip_forward.1} parent=11 // pred_check
        %p524 = pneg %p153
      $region34: #{slip_forward.1} parent=11 // pred_check_branch
        %526 = sbr.rel (%p524) target = $region36
      $region35: #{slip_forward.1} parent=11 // pred_region
        _
      $region36: #{slip_forward.1} parent=11 // pred_fallthru
        _
      // Predicated region
      $region37: #{slip_forward.1} parent=11 // pred_check
        %p527 = pneg %p174
      $region38: #{slip_forward.1} parent=11 // pred_check_branch
        %529 = sbr.rel (%p527) target = $region40
      $region39: #{slip_forward.1} parent=11 // pred_region
        _
      $region40: #{slip_forward.1} parent=11 // pred_fallthru
        _
      // Predicated region
      $region41: #{slip_forward.1} parent=11 // pred_check
        %p530 = pneg %p195
      $region42: #{slip_forward.1} parent=11 // pred_check_branch
        %532 = sbr.rel (%p530) target = $region44
      $region43: #{slip_forward.1} parent=11 // pred_region
        _
      $region44: #{slip_forward.1} parent=11 // pred_fallthru
        _
      // Predicated region
      $region45: #{slip_forward.1} parent=11 // pred_check
        %p533 = pneg %p216
      $region46: #{slip_forward.1} parent=11 // pred_check_branch
        %535 = sbr.rel (%p533) target = $region48
      $region47: #{slip_forward.1} parent=11 // pred_region
        _
      $region48: #{slip_forward.1} parent=11 // pred_fallthru
        _
      // Predicated region
      $region49: #{slip_forward.1} parent=11 // pred_check
        %p536 = pneg %p237
      $region50: #{slip_forward.1} parent=11 // pred_check_branch
        %538 = sbr.rel (%p536) target = $region52
      $region51: #{slip_forward.1} parent=11 // pred_region
        _
      $region52: #{slip_forward.1} parent=11 // pred_fallthru
        _
      // Predicated region
      $region53: #{slip_forward.1} parent=11 // pred_check
        %p539 = pneg %p258
      $region54: #{slip_forward.1} parent=11 // pred_check_branch
        %541 = sbr.rel (%p539) target = $region56
      $region55: #{slip_forward.1} parent=11 // pred_region
        _
      $region56: #{slip_forward.1} parent=11 // pred_fallthru
        _
      // Predicated region
      $region57: #{slip_forward.1} parent=11 // pred_check
        %p542 = pneg %p279
      $region58: #{slip_forward.1} parent=11 // pred_check_branch
        %544 = sbr.rel (%p542) target = $region60
      $region59: #{slip_forward.1} parent=11 // pred_region
        _
      $region60: #{slip_forward.1} parent=11 // pred_fallthru
        _
      // Predicated region
      $region61: #{slip_forward.1} parent=11 // pred_check
        %p545 = pneg %p300
      $region62: #{slip_forward.1} parent=11 // pred_check_branch
        %547 = sbr.rel (%p545) target = $region64
      $region63: #{slip_forward.1} parent=11 // pred_region
        _
      $region64: #{slip_forward.1} parent=11 // pred_fallthru
        _
      // Predicated region
      $region65: #{slip_forward.1} parent=11 // pred_check
        %p548 = pneg %p321
      $region66: #{slip_forward.1} parent=11 // pred_check_branch
        %550 = sbr.rel (%p548) target = $region68
      $region67: #{slip_forward.1} parent=11 // pred_region
        _
      $region68: #{slip_forward.1} parent=11 // pred_fallthru
        _
      // Predicated region
      $region69: #{slip_forward.1} parent=11 // pred_check
        %p551 = pneg %p342
      $region70: #{slip_forward.1} parent=11 // pred_check_branch
        %553 = sbr.rel (%p551) target = $region72
      $region71: #{slip_forward.1} parent=11 // pred_region
        _
      $region72: #{slip_forward.1} parent=11 // pred_fallthru
        _
      // Predicated region
      $region73: #{slip_forward.1} parent=11 // pred_check
        %p554 = pneg %p363
      $region74: #{slip_forward.1} parent=11 // pred_check_branch
        %556 = sbr.rel (%p554) target = $region76
      $region75: #{slip_forward.1} parent=11 // pred_region
        _
      $region76: #{slip_forward.1} parent=11 // pred_fallthru
        _
      // Predicated region
      $region77: #{slip_forward.1} parent=11 // pred_check
        %p557 = pneg %p384
      $region78: #{slip_forward.1} parent=11 // pred_check_branch
        %559 = sbr.rel (%p557) target = $region80
      $region79: #{slip_forward.1} parent=11 // pred_region
        _
      $region80: #{slip_forward.1} parent=11 // pred_fallthru
        _
      // Predicated region
      $region81: #{slip_forward.1} parent=11 // pred_check
        %p560 = pneg %p405
      $region82: #{slip_forward.1} parent=11 // pred_check_branch
        %562 = sbr.rel (%p560) target = $region84
      $region83: #{slip_forward.1} parent=11 // pred_region
        _
      $region84: #{slip_forward.1} parent=11 // pred_fallthru
        _
      // Predicated region
      $region85: #{slip_forward.1} parent=11 // pred_check
        %p563 = pneg %p426
      $region86: #{slip_forward.1} parent=11 // pred_check_branch
        %565 = sbr.rel (%p563) target = $region88
      $region87: #{slip_forward.1} parent=11 // pred_region
        _
      $region88: #{slip_forward.1} parent=11 // pred_fallthru
        _
      // Predicated region
      $region89: #{slip_forward.1} parent=11 // pred_check
        %p566 = pneg %p447
      $region90: #{slip_forward.1} parent=11 // pred_check_branch
        %568 = sbr.rel (%p566) target = $region92
      $region91: #{slip_forward.1} parent=11 // pred_region
        _
      $region92: #{slip_forward.1} parent=11 // pred_fallthru
        _
      // Predicated region
      $region93: #{slip_forward.1} parent=11 // pred_check
        %p569 = pneg %p468
      $region94: #{slip_forward.1} parent=11 // pred_check_branch
        %571 = sbr.rel (%p569) target = $region96
      $region95: #{slip_forward.1} parent=11 // pred_region
        _
      $region96: #{slip_forward.1} parent=11 // pred_fallthru
        _
    $region12: #{slip_forward.1} parent=5 // pred_fallthru
      _
    %p572 = scmp.lt.s32.totalorder %s27, 2
    // Predicated region
    $region97: #{slip_forward.1} parent=5 // pred_check
      %p573 = pneg %p572
    $region98: #{slip_forward.1} parent=5 // pred_check_branch
      %575 = sbr.rel (%p573) target = $region100
    $region99: #{slip_forward.1} parent=5 // pred_region
      _
    $region100: #{slip_forward.1} parent=5 // pred_fallthru
      _
    %p576 = scmp.le.s32.totalorder 1, %s27
    %p577 = scmp.lt.s32.totalorder %s27, 3
    %p578 = pnand %p576, %p577
    %p579 = pneg %p578
    // Predicated region
    $region101: #{slip_forward.1} parent=5 // pred_check
      _
    $region102: #{slip_forward.1} parent=5 // pred_check_branch
      %581 = sbr.rel (%p578) target = $region104
    $region103: #{slip_forward.1} parent=5 // pred_region
      %s582 = ssub.s32 %s27, 1
      %p583 = pneg %p48
      %p584 = pneg %p45
      %p585 = pneg %p69
      %p586 = pneg %p66
      %p587 = pneg %p90
      %p588 = pneg %p87
      %p589 = pneg %p111
      %p590 = pneg %p108
      %p591 = pneg %p132
      %p592 = pneg %p129
      %p593 = pneg %p153
      %p594 = pneg %p150
      %p595 = pneg %p174
      %p596 = pneg %p171
      %p597 = pneg %p195
      %p598 = pneg %p192
      %p599 = pneg %p216
      %p600 = pneg %p213
      %p601 = pneg %p237
      %p602 = pneg %p234
      %p603 = pneg %p258
      %p604 = pneg %p255
      %p605 = pneg %p279
      %p606 = pneg %p276
      %p607 = pneg %p300
      %p608 = pneg %p297
      %p609 = pneg %p321
      %p610 = pneg %p318
      %p611 = pneg %p342
      %p612 = pneg %p339
      %p613 = pneg %p363
      %p614 = pneg %p360
      %p615 = pneg %p384
      %p616 = pneg %p381
      %p617 = pneg %p405
      %p618 = pneg %p402
      %p619 = pneg %p426
      %p620 = pneg %p423
      %p621 = pneg %p447
      %p622 = pneg %p444
      %p623 = pneg %p468
      %p624 = pneg %p465
      %p625 = pneg %p494
      %p626 = pneg %p491
      %p627 = scmp.lt.s32.totalorder %s32, 1
      %s628 = scalar_select %p627, %s32, 1
      %s629 = smul.addr %s628, 8
      %s630 = scalar_lea.vmem %s21, %s629
      %p631 = scmp.lt.s32.totalorder %s32, 1
      %s632 = scalar_select %p631, %s32, 1
      %s633 = smul.addr %s632, 8
      %s634 = scalar_lea.vmem %s21, %s633
      %p636 = scmp.eq.s32.totalorder %s32, 0
      // Predicated region
      $region105: #{slip_forward.1} parent=103 // pred_check
        %p637 = pneg %p636
      $region106: #{slip_forward.1} parent=103 // pred_check_branch
        %639 = sbr.rel (%p637) target = $region108
      $region107: #{slip_forward.1} parent=103 // pred_region
        %v640 = vld [vmem:[%s1] sm:$0xff]
        %v641 = vld [vmem:[%s1 + $0x8] sm:$0xff]
        %v642 = vlaneseq
        %v643 = vshrl.u32 %v642, 7
        %v644 = vlaneseq
        %v645 = vand.u32 %v644, 127
        %vm646 = vcmp.gt.s32.totalorder %v645, %v643
        %v647 = vsel %vm646, -1e+30, 0.0
        %v648 = vld [vmem:[%s5] sm:$0x3f]
        %v649 = vld [vmem:[%s2] sm:$0xf]
        %v650 = vld [vmem:[%s2 + $0x4] sm:$0xf]
        %v651 = vld [vmem:[%s2 + $0x8] sm:$0xf]
        %v652 = vld [vmem:[%s2 + $0xc] sm:$0xf]
        %v653 = vld [vmem:[%s3] sm:$0x1]
        %v654 = vld [vmem:[%s4] sm:$0xf]
        %v655 = vld [vmem:[%s4 + $0x4] sm:$0xf]
        %v656 = vld [vmem:[%s4 + $0x8] sm:$0xf]
        %v657 = vld [vmem:[%s4 + $0xc] sm:$0xf]
        %v658 = vld [vmem:[%s6] sm:$0xf]
        %v659 = vld [vmem:[%s6 + $0x4] sm:$0xf]
        %v660 = vld [vmem:[%s6 + $0x8] sm:$0xf]
        %v661 = vld [vmem:[%s6 + $0xc] sm:$0xf]
        %v662 = vld [vmem:[%s7] sm:$0x1]
        %v663 = vld [vmem:[%s8] sm:$0xf]
        %v664 = vld [vmem:[%s8 + $0x4] sm:$0xf]
        %v665 = vld [vmem:[%s8 + $0x8] sm:$0xf]
        %v666 = vld [vmem:[%s8 + $0xc] sm:$0xf]
        %v667 = vld [vmem:[%s8 + $0x10] sm:$0xf]
        %v668 = vld [vmem:[%s8 + $0x14] sm:$0xf]
        %v669 = vld [vmem:[%s8 + $0x18] sm:$0xf]
        %v670 = vld [vmem:[%s8 + $0x1c] sm:$0xf]
        %v671 = vld [vmem:[%s8 + $0x20] sm:$0xf]
        %v672 = vld [vmem:[%s8 + $0x24] sm:$0xf]
        %v673 = vld [vmem:[%s8 + $0x28] sm:$0xf]
        %v674 = vld [vmem:[%s8 + $0x2c] sm:$0xf]
        %v675 = vld [vmem:[%s8 + $0x30] sm:$0xf]
        %v676 = vld [vmem:[%s8 + $0x34] sm:$0xf]
        %v677 = vld [vmem:[%s8 + $0x38] sm:$0xf]
        %v678 = vld [vmem:[%s8 + $0x3c] sm:$0xf]
        %vm679 = vcmask 261120
        %v680 = vsel %vm679, %v640, 0.0
        %681 = vadd.xlane.f32.xlu0 %v680
        %v682 = vpop.xlane.xlu0 %681
        %v683 = vsel %vm679, %v641, 0.0
        %684 = vadd.xlane.f32.xlu0 %v683
        %v685 = vpop.xlane.xlu0 %684
        %v686 = vrcp.pop 32.0
        %v687 = vmul.f32 %v682, %v686
        %v688 = vmul.f32 %v685, %v686
        %v689 = vsub.f32 %v640, %v687
        %v690 = vsub.f32 %v641, %v688
        %v691 = vmul.f32 %v689, %v689
        %v692 = vmul.f32 %v690, %v690
        %v693 = vsel %vm679, %v691, 0.0
        %694 = vadd.xlane.f32.xlu0 %v693
        %v695 = vpop.xlane.xlu0 %694
        %v696 = vsel %vm679, %v692, 0.0
        %697 = vadd.xlane.f32.xlu0 %v696
        %v698 = vpop.xlane.xlu0 %697
        %v699 = vmul.f32 %v695, %v686
        %v700 = vmul.f32 %v698, %v686
        %v701 = vadd.f32 %v699, 1e-05
        %v702 = vadd.f32 %v700, 1e-05
        %v703 = vrsqrt.pop %v701
        %v704 = vrsqrt.pop %v702
        %v705 = vmul.f32 %v689, %v703
        %v706 = vmul.f32 %v690, %v704
        %v707 = vlaneseq
        %v708 = vshrl.u32 %v707, 7
        %v709 = vsub.s32 0, %v708
        %v710 = vrot.slane %v648, %v709
        %v711 = vmul.f32 %v705, %v710
        %v712 = vmul.f32 %v706, %v710
        %v713 = vlaneseq
        %v714 = vshrl.u32 %v713, 7
        %v715 = vsub.s32 1, %v714
        %v716 = vrot.slane %v648, %v715
        %v717 = vadd.f32 %v711, %v716
        %v718 = vadd.f32 %v712, %v716
        %v719 = vpack.c.bf16 %v718, %v717
        %v721 = vlaneseq
        %v722 = vshrl.u32 %v721, 7
        %v723 = vsub.s32 0, %v722
        %v724 = vrot.slane %v653, %v723
        %v730 = vunpack.c.l.b16 %v649
        %v731 = vunpack.c.l.b16 %v650
        %v732 = vunpack.c.l.b16 %v651
        %v733 = vunpack.c.l.b16 %v652
        %v734 = vpack.c.b16 %v731, %v730
        %v735 = vpack.c.b16 %v733, %v732
        %v739 = vsel %vm679, %v719, 0
        %741 = vmatprep.subr.bf16.mxu0 0
        %742 = vmatpush1.bf16.msra.mxu0 %v734
        %743 = vmatprep.subr.bf16.mxu0 0
        %744 = vmatpush1.bf16.msra.mxu0 %v735
        %745 = vmatprep.subr.bf16.mxu0 0
        %746 = vmatpush1.bf16.msra.mxu0 0
        %747 = vmatprep.subr.bf16.mxu0 0
        %748 = vmatpush1.bf16.msra.mxu0 0
        %749 = vmatprep.subr.bf16.mxu0 0
        %750 = vmatpush1.bf16.msra.mxu0 0
        %751 = vmatprep.subr.bf16.mxu0 0
        %752 = vmatpush1.bf16.msra.mxu0 0
        %753 = vmatprep.subr.bf16.mxu0 0
        %754 = vmatpush1.bf16.msra.mxu0 0
        %755 = vmatprep.subr.bf16.mxu0 0
        %756 = vmatpush1.bf16.msra.mxu0 0
        %757 = vmatprep.subr.bf16.mxu0 0
        %758 = vmatpush1.bf16.msra.mxu0 0
        %759 = vmatprep.subr.bf16.mxu0 0
        %760 = vmatpush1.bf16.msra.mxu0 0
        %761 = vmatprep.subr.bf16.mxu0 0
        %762 = vmatpush1.bf16.msra.mxu0 0
        %763 = vmatprep.subr.bf16.mxu0 0
        %764 = vmatpush1.bf16.msra.mxu0 0
        %765 = vmatprep.subr.bf16.mxu0 0
        %766 = vmatpush1.bf16.msra.mxu0 0
        %767 = vmatprep.subr.bf16.mxu0 0
        %768 = vmatpush1.bf16.msra.mxu0 0
        %769 = vmatprep.subr.bf16.mxu0 0
        %770 = vmatpush1.bf16.msra.mxu0 0
        %771 = vmatprep.subr.bf16.mxu0 0
        %772 = vmatpush1.bf16.msra.mxu0 0
        %773 = vmatprep.mubr.bf16.mxu0 0
        %774 = vmatmul.mubr.bf16.gmra.mrb[0].mxu0 %v739
        %v775 = vpop.f32.mrb[0].mxu0
        %v776 = vadd.f32 %v724, %v775
        %v777 = vpop.f32.mrb[0].mxu0
        %v778 = vpop.f32.mrb[0].mxu0
        %v779 = vadd.f32 %v724, %v778
        %v780 = vpop.f32.mrb[0].mxu0
        %781 = vdwg.mxu0
        %v782 = vpack.c.bf16 %v776, %v776
        %v783 = vpack.c.bf16 %v779, %v779
        %785 = vrot.lane.b32.xlu0 %v782, 96
        %v786 = vpop.permute.xlu0 %785
        %vm787 = vcmask 64512
        %v789 = vsel %vm787, %v782, 0
        %v792 = vsel %vm787, %v786, 0
        %794 = vmatprep.subr.bf16.mxu0 0
        %795 = vmatpush1.bf16.xpose.msra.mxu0 %v792
        %796 = vmatprep.subr.bf16.mxu0 0
        %797 = vmatpush1.bf16.xpose.msra.mxu0 0
        %798 = vmatprep.subr.bf16.mxu0 0
        %799 = vmatpush1.bf16.xpose.msra.mxu0 0
        %800 = vmatprep.subr.bf16.mxu0 0
        %801 = vmatpush1.bf16.xpose.msra.mxu0 0
        %802 = vmatprep.subr.bf16.mxu0 0
        %803 = vmatpush1.bf16.xpose.msra.mxu0 0
        %804 = vmatprep.subr.bf16.mxu0 0
        %805 = vmatpush1.bf16.xpose.msra.mxu0 0
        %806 = vmatprep.subr.bf16.mxu0 0
        %807 = vmatpush1.bf16.xpose.msra.mxu0 0
        %808 = vmatprep.subr.bf16.mxu0 0
        %809 = vmatpush1.bf16.xpose.msra.mxu0 0
        %810 = vmatprep.subr.bf16.mxu0 0
        %811 = vmatpush1.bf16.xpose.msra.mxu0 0
        %812 = vmatprep.subr.bf16.mxu0 0
        %813 = vmatpush1.bf16.xpose.msra.mxu0 0
        %814 = vmatprep.subr.bf16.mxu0 0
        %815 = vmatpush1.bf16.xpose.msra.mxu0 0
        %816 = vmatprep.subr.bf16.mxu0 0
        %817 = vmatpush1.bf16.xpose.msra.mxu0 0
        %818 = vmatprep.subr.bf16.mxu0 0
        %819 = vmatpush1.bf16.xpose.msra.mxu0 0
        %820 = vmatprep.subr.bf16.mxu0 0
        %821 = vmatpush1.bf16.xpose.msra.mxu0 0
        %822 = vmatprep.subr.bf16.mxu0 0
        %823 = vmatpush1.bf16.xpose.msra.mxu0 0
        %824 = vmatprep.subr.bf16.mxu0 0
        %825 = vmatpush1.bf16.xpose.msra.mxu0 0
        %826 = vmatprep.mubr.bf16.mxu0 0
        %827 = vmatmul.mubr.bf16.gmra.mrb[0].mxu0 %v789
        %v828 = vpop.f32.mrb[0].mxu0
        %v829 = vadd.f32 %v647, %v828
        %v830 = vpop.f32.mrb[0].mxu0
        %v831 = vpop.f32.mrb[0].mxu0
        %v832 = vpop.f32.mrb[0].mxu0
        %833 = vdwg.mxu0
        %835 = vrot.lane.b32.xlu0 %v783, 96
        %v836 = vpop.permute.xlu0 %835
        %v838 = vsel %vm787, %v783, 0
        %v841 = vsel %vm787, %v836, 0
        %843 = vmatprep.subr.bf16.mxu0 0
        %844 = vmatpush1.bf16.xpose.msra.mxu0 %v841
        %845 = vmatprep.subr.bf16.mxu0 0
        %846 = vmatpush1.bf16.xpose.msra.mxu0 0
        %847 = vmatprep.subr.bf16.mxu0 0
        %848 = vmatpush1.bf16.xpose.msra.mxu0 0
        %849 = vmatprep.subr.bf16.mxu0 0
        %850 = vmatpush1.bf16.xpose.msra.mxu0 0
        %851 = vmatprep.subr.bf16.mxu0 0
        %852 = vmatpush1.bf16.xpose.msra.mxu0 0
        %853 = vmatprep.subr.bf16.mxu0 0
        %854 = vmatpush1.bf16.xpose.msra.mxu0 0
        %855 = vmatprep.subr.bf16.mxu0 0
        %856 = vmatpush1.bf16.xpose.msra.mxu0 0
        %857 = vmatprep.subr.bf16.mxu0 0
        %858 = vmatpush1.bf16.xpose.msra.mxu0 0
        %859 = vmatprep.subr.bf16.mxu0 0
        %860 = vmatpush1.bf16.xpose.msra.mxu0 0
        %861 = vmatprep.subr.bf16.mxu0 0
        %862 = vmatpush1.bf16.xpose.msra.mxu0 0
        %863 = vmatprep.subr.bf16.mxu0 0
        %864 = vmatpush1.bf16.xpose.msra.mxu0 0
        %865 = vmatprep.subr.bf16.mxu0 0
        %866 = vmatpush1.bf16.xpose.msra.mxu0 0
        %867 = vmatprep.subr.bf16.mxu0 0
        %868 = vmatpush1.bf16.xpose.msra.mxu0 0
        %869 = vmatprep.subr.bf16.mxu0 0
        %870 = vmatpush1.bf16.xpose.msra.mxu0 0
        %871 = vmatprep.subr.bf16.mxu0 0
        %872 = vmatpush1.bf16.xpose.msra.mxu0 0
        %873 = vmatprep.subr.bf16.mxu0 0
        %874 = vmatpush1.bf16.xpose.msra.mxu0 0
        %875 = vmatprep.mubr.bf16.mxu0 0
        %876 = vmatmul.mubr.bf16.gmra.mrb[0].mxu0 %v838
        %v877 = vpop.f32.mrb[0].mxu0
        %v878 = vadd.f32 %v647, %v877
        %v879 = vpop.f32.mrb[0].mxu0
        %v880 = vpop.f32.mrb[0].mxu0
        %v881 = vpop.f32.mrb[0].mxu0
        %882 = vdwg.mxu0
        %v883 = vsel %vm787, %v829, -inf
        %884 = vmax.xlane.f32.xlu0 %v883
        %v885 = vpop.xlane.xlu0 %884
        %v886 = vsel %vm787, %v878, -inf
        %887 = vmax.xlane.f32.xlu0 %v886
        %v888 = vpop.xlane.xlu0 %887
        %v889 = vsub.f32 %v829, %v885
        %v890 = vsub.f32 %v878, %v888
        %v891 = vmul.f32 %v889, 1.442695
        %v892 = vpow.pop %v891
        %v893 = vmul.f32 %v890, 1.442695
        %v894 = vpow.pop %v893
        %v895 = vsel %vm787, %v892, 0.0
        %896 = vadd.xlane.f32.xlu0 %v895
        %v897 = vpop.xlane.xlu0 %896
        %v898 = vsel %vm787, %v894, 0.0
        %899 = vadd.xlane.f32.xlu0 %v898
        %v900 = vpop.xlane.xlu0 %899
        %v901 = vrcp.pop %v897
        %v902 = vmul.f32 %v892, %v901
        %v903 = vrcp.pop %v900
        %v904 = vmul.f32 %v894, %v903
        %v905 = vpack.c.bf16 %v902, %v902
        %v906 = vpack.c.bf16 %v904, %v904
        %907 = vrot.lane.b32.xlu0 %v782, 64
        %v908 = vpop.permute.xlu0 %907
        %v910 = vsel %vm787, %v905, 0
        %vm912 = vcmask 1043456
        %v914 = vsel %vm912, %v908, 0
        %916 = vmatprep.subr.bf16.mxu0 0
        %917 = vmatpush1.bf16.msra.mxu0 %v914
        %918 = vmatprep.subr.bf16.mxu0 0
        %919 = vmatpush1.bf16.msra.mxu0 0
        %920 = vmatprep.subr.bf16.mxu0 0
        %921 = vmatpush1.bf16.msra.mxu0 0
        %922 = vmatprep.subr.bf16.mxu0 0
        %923 = vmatpush1.bf16.msra.mxu0 0
        %924 = vmatprep.subr.bf16.mxu0 0
        %925 = vmatpush1.bf16.msra.mxu0 0
        %926 = vmatprep.subr.bf16.mxu0 0
        %927 = vmatpush1.bf16.msra.mxu0 0
        %928 = vmatprep.subr.bf16.mxu0 0
        %929 = vmatpush1.bf16.msra.mxu0 0
        %930 = vmatprep.subr.bf16.mxu0 0
        %931 = vmatpush1.bf16.msra.mxu0 0
        %932 = vmatprep.subr.bf16.mxu0 0
        %933 = vmatpush1.bf16.msra.mxu0 0
        %934 = vmatprep.subr.bf16.mxu0 0
        %935 = vmatpush1.bf16.msra.mxu0 0
        %936 = vmatprep.subr.bf16.mxu0 0
        %937 = vmatpush1.bf16.msra.mxu0 0
        %938 = vmatprep.subr.bf16.mxu0 0
        %939 = vmatpush1.bf16.msra.mxu0 0
        %940 = vmatprep.subr.bf16.mxu0 0
        %941 = vmatpush1.bf16.msra.mxu0 0
        %942 = vmatprep.subr.bf16.mxu0 0
        %943 = vmatpush1.bf16.msra.mxu0 0
        %944 = vmatprep.subr.bf16.mxu0 0
        %945 = vmatpush1.bf16.msra.mxu0 0
        %946 = vmatprep.subr.bf16.mxu0 0
        %947 = vmatpush1.bf16.msra.mxu0 0
        %948 = vmatprep.mubr.bf16.mxu0 0
        %949 = vmatmul.mubr.bf16.gmra.mrb[0].mxu0 %v910
        %v950 = vpop.f32.mrb[0].mxu0
        %v951 = vadd.f32 0.0, %v950
        %v952 = vpop.f32.mrb[0].mxu0
        %v953 = vpop.f32.mrb[0].mxu0
        %v954 = vpop.f32.mrb[0].mxu0
        %955 = vdwg.mxu0
        %956 = vrot.lane.b32.xlu0 %v783, 64
        %v957 = vpop.permute.xlu0 %956
        %v959 = vsel %vm787, %v906, 0
        %v962 = vsel %vm912, %v957, 0
        %964 = vmatprep.subr.bf16.mxu0 0
        %965 = vmatpush1.bf16.msra.mxu0 %v962
        %966 = vmatprep.subr.bf16.mxu0 0
        %967 = vmatpush1.bf16.msra.mxu0 0
        %968 = vmatprep.subr.bf16.mxu0 0
        %969 = vmatpush1.bf16.msra.mxu0 0
        %970 = vmatprep.subr.bf16.mxu0 0
        %971 = vmatpush1.bf16.msra.mxu0 0
        %972 = vmatprep.subr.bf16.mxu0 0
        %973 = vmatpush1.bf16.msra.mxu0 0
        %974 = vmatprep.subr.bf16.mxu0 0
        %975 = vmatpush1.bf16.msra.mxu0 0
        %976 = vmatprep.subr.bf16.mxu0 0
        %977 = vmatpush1.bf16.msra.mxu0 0
        %978 = vmatprep.subr.bf16.mxu0 0
        %979 = vmatpush1.bf16.msra.mxu0 0
        %980 = vmatprep.subr.bf16.mxu0 0
        %981 = vmatpush1.bf16.msra.mxu0 0
        %982 = vmatprep.subr.bf16.mxu0 0
        %983 = vmatpush1.bf16.msra.mxu0 0
        %984 = vmatprep.subr.bf16.mxu0 0
        %985 = vmatpush1.bf16.msra.mxu0 0
        %986 = vmatprep.subr.bf16.mxu0 0
        %987 = vmatpush1.bf16.msra.mxu0 0
        %988 = vmatprep.subr.bf16.mxu0 0
        %989 = vmatpush1.bf16.msra.mxu0 0
        %990 = vmatprep.subr.bf16.mxu0 0
        %991 = vmatpush1.bf16.msra.mxu0 0
        %992 = vmatprep.subr.bf16.mxu0 0
        %993 = vmatpush1.bf16.msra.mxu0 0
        %994 = vmatprep.subr.bf16.mxu0 0
        %995 = vmatpush1.bf16.msra.mxu0 0
        %996 = vmatprep.mubr.bf16.mxu0 0
        %997 = vmatmul.mubr.bf16.gmra.mrb[0].mxu0 %v959
        %v998 = vpop.f32.mrb[0].mxu0
        %v999 = vadd.f32 0.0, %v998
        %v1000 = vpop.f32.mrb[0].mxu0
        %v1001 = vpop.f32.mrb[0].mxu0
        %v1002 = vpop.f32.mrb[0].mxu0
        %1003 = vdwg.mxu0
        %v1004 = vpack.c.bf16 %v999, %v951
        %1005 = vrot.lane.b32.xlu0 %v782, 120
        %v1006 = vpop.permute.xlu0 %1005
        %1007 = vrot.lane.b32.xlu0 %v782, 88
        %v1008 = vpop.permute.xlu0 %1007
        %v1010 = vsel %vm787, %v1006, 0
        %v1013 = vsel %vm787, %v1008, 0
        %1015 = vmatprep.subr.bf16.mxu0 0
        %1016 = vmatpush1.bf16.xpose.msra.mxu0 %v1013
        %1017 = vmatprep.subr.bf16.mxu0 0
        %1018 = vmatpush1.bf16.xpose.msra.mxu0 0
        %1019 = vmatprep.subr.bf16.mxu0 0
        %1020 = vmatpush1.bf16.xpose.msra.mxu0 0
        %1021 = vmatprep.subr.bf16.mxu0 0
        %1022 = vmatpush1.bf16.xpose.msra.mxu0 0
        %1023 = vmatprep.subr.bf16.mxu0 0
        %1024 = vmatpush1.bf16.xpose.msra.mxu0 0
        %1025 = vmatprep.subr.bf16.mxu0 0
        %1026 = vmatpush1.bf16.xpose.msra.mxu0 0
        %1027 = vmatprep.subr.bf16.mxu0 0
        %1028 = vmatpush1.bf16.xpose.msra.mxu0 0
        %1029 = vmatprep.subr.bf16.mxu0 0
        %1030 = vmatpush1.bf16.xpose.msra.mxu0 0
        %1031 = vmatprep.subr.bf16.mxu0 0
        %1032 = vmatpush1.bf16.xpose.msra.mxu0 0
        %1033 = vmatprep.subr.bf16.mxu0 0
        %1034 = vmatpush1.bf16.xpose.msra.mxu0 0
        %1035 = vmatprep.subr.bf16.mxu0 0
        %1036 = vmatpush1.bf16.xpose.msra.mxu0 0
        %1037 = vmatprep.subr.bf16.mxu0 0
        %1038 = vmatpush1.bf16.xpose.msra.mxu0 0
        %1039 = vmatprep.subr.bf16.mxu0 0
        %1040 = vmatpush1.bf16.xpose.msra.mxu0 0
        %1041 = vmatprep.subr.bf16.mxu0 0
        %1042 = vmatpush1.bf16.xpose.msra.mxu0 0
        %1043 = vmatprep.subr.bf16.mxu0 0
        %1044 = vmatpush1.bf16.xpose.msra.mxu0 0
        %1045 = vmatprep.subr.bf16.mxu0 0
        %1046 = vmatpush1.bf16.xpose.msra.mxu0 0
        %1047 = vmatprep.mubr.bf16.mxu0 0
        %1048 = vmatmul.mubr.bf16.gmra.mrb[0].mxu0 %v1010
        %v1049 = vpop.f32.mrb[0].mxu0
        %v1050 = vadd.f32 %v647, %v1049
        %v1051 = vpop.f32.mrb[0].mxu0
        %v1052 = vpop.f32.mrb[0].mxu0
        %v1053 = vpop.f32.mrb[0].mxu0
        %1054 = vdwg.mxu0
        %1055 = vrot.lane.b32.xlu0 %v783, 120
        %v1056 = vpop.permute.xlu0 %1055
        %1057 = vrot.lane.b32.xlu0 %v783, 88
        %v1058 = vpop.permute.xlu0 %1057
        %v1060 = vsel %vm787, %v1056, 0
        %v1063 = vsel %vm787, %v1058, 0
        %1065 = vmatprep.subr.bf16.mxu0 0
        %1066 = vmatpush1.bf16.xpose.msra.mxu0 %v1063
        %1067 = vmatprep.subr.bf16.mxu0 0
        %1068 = vmatpush1.bf16.xpose.msra.mxu0 0
        %1069 = vmatprep.subr.bf16.mxu0 0
        %1070 = vmatpush1.bf16.xpose.msra.mxu0 0
        %1071 = vmatprep.subr.bf16.mxu0 0
        %1072 = vmatpush1.bf16.xpose.msra.mxu0 0
        %1073 = vmatprep.subr.bf16.mxu0 0
        %1074 = vmatpush1.bf16.xpose.msra.mxu0 0
        %1075 = vmatprep.subr.bf16.mxu0 0
        %1076 = vmatpush1.bf16.xpose.msra.mxu0 0
        %1077 = vmatprep.subr.bf16.mxu0 0
        %1078 = vmatpush1.bf16.xpose.msra.mxu0 0
        %1079 = vmatprep.subr.bf16.mxu0 0
        %1080 = vmatpush1.bf16.xpose.msra.mxu0 0
        %1081 = vmatprep.subr.bf16.mxu0 0
        %1082 = vmatpush1.bf16.xpose.msra.mxu0 0
        %1083 = vmatprep.subr.bf16.mxu0 0
        %1084 = vmatpush1.bf16.xpose.msra.mxu0 0
        %1085 = vmatprep.subr.bf16.mxu0 0
        %1086 = vmatpush1.bf16.xpose.msra.mxu0 0
        %1087 = vmatprep.subr.bf16.mxu0 0
        %1088 = vmatpush1.bf16.xpose.msra.mxu0 0
        %1089 = vmatprep.subr.bf16.mxu0 0
        %1090 = vmatpush1.bf16.xpose.msra.mxu0 0
        %1091 = vmatprep.subr.bf16.mxu0 0
        %1092 = vmatpush1.bf16.xpose.msra.mxu0 0
        %1093 = vmatprep.subr.bf16.mxu0 0
        %1094 = vmatpush1.bf16.xpose.msra.mxu0 0
        %1095 = vmatprep.subr.bf16.mxu0 0
        %1096 = vmatpush1.bf16.xpose.msra.mxu0 0
        %1097 = vmatprep.mubr.bf16.mxu0 0
        %1098 = vmatmul.mubr.bf16.gmra.mrb[0].mxu0 %v1060
        %v1099 = vpop.f32.mrb[0].mxu0
        %v1100 = vadd.f32 %v647, %v1099
        %v1101 = vpop.f32.mrb[0].mxu0
        %v1102 = vpop.f32.mrb[0].mxu0
        %v1103 = vpop.f32.mrb[0].mxu0
        %1104 = vdwg.mxu0
        %v1105 = vsel %vm787, %v1050, -inf
        %1106 = vmax.xlane.f32.xlu0 %v1105
        %v1107 = vpop.xlane.xlu0 %1106
        %v1108 = vsel %vm787, %v1100, -inf
        %1109 = vmax.xlane.f32.xlu0 %v1108
        %v1110 = vpop.xlane.xlu0 %1109
        %v1111 = vsub.f32 %v1050, %v1107
        %v1112 = vsub.f32 %v1100, %v1110
        %v1113 = vmul.f32 %v1111, 1.442695
        %v1114 = vpow.pop %v1113
        %v1115 = vmul.f32 %v1112, 1.442695
        %v1116 = vpow.pop %v1115
        %v1117 = vsel %vm787, %v1114, 0.0
        %1118 = vadd.xlane.f32.xlu0 %v1117
        %v1119 = vpop.xlane.xlu0 %1118
        %v1120 = vsel %vm787, %v1116, 0.0
        %1121 = vadd.xlane.f32.xlu0 %v1120
        %v1122 = vpop.xlane.xlu0 %1121
        %v1123 = vrcp.pop %v1119
        %v1124 = vmul.f32 %v1114, %v1123
        %v1125 = vrcp.pop %v1122
        %v1126 = vmul.f32 %v1116, %v1125
        %v1127 = vpack.c.bf16 %v1124, %v1124
        %v1128 = vpack.c.bf16 %v1126, %v1126
        %1129 = vrot.lane.b32.xlu0 %v782, 56
        %v1130 = vpop.permute.xlu0 %1129
        %v1132 = vsel %vm787, %v1127, 0
        %v1135 = vsel %vm912, %v1130, 0
        %1137 = vmatprep.subr.bf16.mxu0 0
        %1138 = vmatpush1.bf16.msra.mxu0 %v1135
        %1139 = vmatprep.subr.bf16.mxu0 0
        %1140 = vmatpush1.bf16.msra.mxu0 0
        %1141 = vmatprep.subr.bf16.mxu0 0
        %1142 = vmatpush1.bf16.msra.mxu0 0
        %1143 = vmatprep.subr.bf16.mxu0 0
        %1144 = vmatpush1.bf16.msra.mxu0 0
        %1145 = vmatprep.subr.bf16.mxu0 0
        %1146 = vmatpush1.bf16.msra.mxu0 0
        %1147 = vmatprep.subr.bf16.mxu0 0
        %1148 = vmatpush1.bf16.msra.mxu0 0
        %1149 = vmatprep.subr.bf16.mxu0 0
        %1150 = vmatpush1.bf16.msra.mxu0 0
        %1151 = vmatprep.subr.bf16.mxu0 0
        %1152 = vmatpush1.bf16.msra.mxu0 0
        %1153 = vmatprep.subr.bf16.mxu0 0
        %1154 = vmatpush1.bf16.msra.mxu0 0
        %1155 = vmatprep.subr.bf16.mxu0 0
        %1156 = vmatpush1.bf16.msra.mxu0 0
        %1157 = vmatprep.subr.bf16.mxu0 0
        %1158 = vmatpush1.bf16.msra.mxu0 0
        %1159 = vmatprep.subr.bf16.mxu0 0
        %1160 = vmatpush1.bf16.msra.mxu0 0
        %1161 = vmatprep.subr.bf16.mxu0 0
        %1162 = vmatpush1.bf16.msra.mxu0 0
        %1163 = vmatprep.subr.bf16.mxu0 0
        %1164 = vmatpush1.bf16.msra.mxu0 0
        %1165 = vmatprep.subr.bf16.mxu0 0
        %1166 = vmatpush1.bf16.msra.mxu0 0
        %1167 = vmatprep.subr.bf16.mxu0 0
        %1168 = vmatpush1.bf16.msra.mxu0 0
        %1169 = vmatprep.mubr.bf16.mxu0 0
        %1170 = vmatmul.mubr.bf16.gmra.mrb[0].mxu0 %v1132
        %v1171 = vpop.f32.mrb[0].mxu0
        %v1172 = vadd.f32 0.0, %v1171
        %v1173 = vpop.f32.mrb[0].mxu0
        %v1174 = vpop.f32.mrb[0].mxu0
        %v1175 = vpop.f32.mrb[0].mxu0
        %1176 = vdwg.mxu0
        %1177 = vrot.lane.b32.xlu0 %v783, 56
        %v1178 = vpop.permute.xlu0 %1177
        %v1180 = vsel %vm787, %v1128, 0
        %v1183 = vsel %vm912, %v1178, 0
        %1185 = vmatprep.subr.bf16.mxu0 0
        %1186 = vmatpush1.bf16.msra.mxu0 %v1183
        %1187 = vmatprep.subr.bf16.mxu0 0
        %1188 = vmatpush1.bf16.msra.mxu0 0
        %1189 = vmatprep.subr.bf16.mxu0 0
        %1190 = vmatpush1.bf16.msra.mxu0 0
        %1191 = vmatprep.subr.bf16.mxu0 0
        %1192 = vmatpush1.bf16.msra.mxu0 0
        %1193 = vmatprep.subr.bf16.mxu0 0
        %1194 = vmatpush1.bf16.msra.mxu0 0
        %1195 = vmatprep.subr.bf16.mxu0 0
        %1196 = vmatpush1.bf16.msra.mxu0 0
        %1197 = vmatprep.subr.bf16.mxu0 0
        %1198 = vmatpush1.bf16.msra.mxu0 0
        %1199 = vmatprep.subr.bf16.mxu0 0
        %1200 = vmatpush1.bf16.msra.mxu0 0
        %1201 = vmatprep.subr.bf16.mxu0 0
        %1202 = vmatpush1.bf16.msra.mxu0 0
        %1203 = vmatprep.subr.bf16.mxu0 0
        %1204 = vmatpush1.bf16.msra.mxu0 0
        %1205 = vmatprep.subr.bf16.mxu0 0
        %1206 = vmatpush1.bf16.msra.mxu0 0
        %1207 = vmatprep.subr.bf16.mxu0 0
        %1208 = vmatpush1.bf16.msra.mxu0 0
        %1209 = vmatprep.subr.bf16.mxu0 0
        %1210 = vmatpush1.bf16.msra.mxu0 0
        %1211 = vmatprep.subr.bf16.mxu0 0
        %1212 = vmatpush1.bf16.msra.mxu0 0
        %1213 = vmatprep.subr.bf16.mxu0 0
        %1214 = vmatpush1.bf16.msra.mxu0 0
        %1215 = vmatprep.subr.bf16.mxu0 0
        %1216 = vmatpush1.bf16.msra.mxu0 0
        %1217 = vmatprep.mubr.bf16.mxu0 0
        %1218 = vmatmul.mubr.bf16.gmra.mrb[0].mxu0 %v1180
        %v1219 = vpop.f32.mrb[0].mxu0
        %v1220 = vadd.f32 0.0, %v1219
        %v1221 = vpop.f32.mrb[0].mxu0
        %v1222 = vpop.f32.mrb[0].mxu0
        %v1223 = vpop.f32.mrb[0].mxu0
        %1224 = vdwg.mxu0
        %v1225 = vpack.c.bf16 %v1220, %v1172
        %v1227 = vsel %vm787, %v1225, 0
        %v1230 = vsel %vm912, %v655, 0
        %1232 = vmatprep.subr.bf16.mxu0 0
        %1233 = vmatpush1.bf16.msra.mxu0 %v1230
        %1234 = vmatprep.subr.bf16.mxu0 0
        %1235 = vmatpush1.bf16.msra.mxu0 0
        %1236 = vmatprep.subr.bf16.mxu0 0
        %1237 = vmatpush1.bf16.msra.mxu0 0
        %1238 = vmatprep.subr.bf16.mxu0 0
        %1239 = vmatpush1.bf16.msra.mxu0 0
        %1240 = vmatprep.subr.bf16.mxu0 0
        %1241 = vmatpush1.bf16.msra.mxu0 0
        %1242 = vmatprep.subr.bf16.mxu0 0
        %1243 = vmatpush1.bf16.msra.mxu0 0
        %1244 = vmatprep.subr.bf16.mxu0 0
        %1245 = vmatpush1.bf16.msra.mxu0 0
        %1246 = vmatprep.subr.bf16.mxu0 0
        %1247 = vmatpush1.bf16.msra.mxu0 0
        %1248 = vmatprep.subr.bf16.mxu0 0
        %1249 = vmatpush1.bf16.msra.mxu0 0
        %1250 = vmatprep.subr.bf16.mxu0 0
        %1251 = vmatpush1.bf16.msra.mxu0 0
        %1252 = vmatprep.subr.bf16.mxu0 0
        %1253 = vmatpush1.bf16.msra.mxu0 0
        %1254 = vmatprep.subr.bf16.mxu0 0
        %1255 = vmatpush1.bf16.msra.mxu0 0
        %1256 = vmatprep.subr.bf16.mxu0 0
        %1257 = vmatpush1.bf16.msra.mxu0 0
        %1258 = vmatprep.subr.bf16.mxu0 0
        %1259 = vmatpush1.bf16.msra.mxu0 0
        %1260 = vmatprep.subr.bf16.mxu0 0
        %1261 = vmatpush1.bf16.msra.mxu0 0
        %1262 = vmatprep.subr.bf16.mxu0 0
        %1263 = vmatpush1.bf16.msra.mxu0 0
        %1264 = vmatprep.mubr.bf16.mxu0 0
        %1265 = vmatmul.mubr.bf16.gmra.mrb[0].mxu0 %v1227
        %v1266 = vpop.f32.mrb[0].mxu0
        %v1267 = vadd.f32 0.0, %v1266
        %v1268 = vpop.f32.mrb[0].mxu0
        %v1269 = vpop.f32.mrb[0].mxu0
        %v1270 = vadd.f32 0.0, %v1269
        %v1271 = vpop.f32.mrb[0].mxu0
        %1272 = vdwg.mxu0
        %v1274 = vsel %vm787, %v1004, 0
        %v1277 = vsel %vm912, %v654, 0
        %1279 = vmatprep.subr.bf16.mxu0 0
        %1280 = vmatpush1.bf16.msra.mxu0 %v1277
        %1281 = vmatprep.subr.bf16.mxu0 0
        %1282 = vmatpush1.bf16.msra.mxu0 0
        %1283 = vmatprep.subr.bf16.mxu0 0
        %1284 = vmatpush1.bf16.msra.mxu0 0
        %1285 = vmatprep.subr.bf16.mxu0 0
        %1286 = vmatpush1.bf16.msra.mxu0 0
        %1287 = vmatprep.subr.bf16.mxu0 0
        %1288 = vmatpush1.bf16.msra.mxu0 0
        %1289 = vmatprep.subr.bf16.mxu0 0
        %1290 = vmatpush1.bf16.msra.mxu0 0
        %1291 = vmatprep.subr.bf16.mxu0 0
        %1292 = vmatpush1.bf16.msra.mxu0 0
        %1293 = vmatprep.subr.bf16.mxu0 0
        %1294 = vmatpush1.bf16.msra.mxu0 0
        %1295 = vmatprep.subr.bf16.mxu0 0
        %1296 = vmatpush1.bf16.msra.mxu0 0
        %1297 = vmatprep.subr.bf16.mxu0 0
        %1298 = vmatpush1.bf16.msra.mxu0 0
        %1299 = vmatprep.subr.bf16.mxu0 0
        %1300 = vmatpush1.bf16.msra.mxu0 0
        %1301 = vmatprep.subr.bf16.mxu0 0
        %1302 = vmatpush1.bf16.msra.mxu0 0
        %1303 = vmatprep.subr.bf16.mxu0 0
        %1304 = vmatpush1.bf16.msra.mxu0 0
        %1305 = vmatprep.subr.bf16.mxu0 0
        %1306 = vmatpush1.bf16.msra.mxu0 0
        %1307 = vmatprep.subr.bf16.mxu0 0
        %1308 = vmatpush1.bf16.msra.mxu0 0
        %1309 = vmatprep.subr.bf16.mxu0 0
        %1310 = vmatpush1.bf16.msra.mxu0 0
        %1311 = vmatprep.mubr.bf16.mxu0 0
        %1312 = vmatmul.mubr.bf16.gmra.mrb[0].mxu0 %v1274
        %v1313 = vpop.f32.mrb[0].mxu0
        %v1314 = vadd.f32 %v1267, %v1313
        %v1315 = vpop.f32.mrb[0].mxu0
        %v1316 = vpop.f32.mrb[0].mxu0
        %v1317 = vadd.f32 %v1270, %v1316
        %v1318 = vpop.f32.mrb[0].mxu0
        %1319 = vdwg.mxu0
        %1320 = vrot.lane.b32.xlu0 %v782, 112
        %v1321 = vpop.permute.xlu0 %1320
        %1322 = vrot.lane.b32.xlu0 %v782, 80
        %v1323 = vpop.permute.xlu0 %1322
        %v1325 = vsel %vm787, %v1321, 0
        %v1328 = vsel %vm787, %v1323, 0
        %1330 = vmatprep.subr.bf16.mxu0 0
        %1331 = vmatpush1.bf16.xpose.msra.mxu0 %v1328
        %1332 = vmatprep.subr.bf16.mxu0 0
        %1333 = vmatpush1.bf16.xpose.msra.mxu0 0
        %1334 = vmatprep.subr.bf16.mxu0 0
        %1335 = vmatpush1.bf16.xpose.msra.mxu0 0
        %1336 = vmatprep.subr.bf16.mxu0 0
        %1337 = vmatpush1.bf16.xpose.msra.mxu0 0
        %1338 = vmatprep.subr.bf16.mxu0 0
        %1339 = vmatpush1.bf16.xpose.msra.mxu0 0
        %1340 = vmatprep.subr.bf16.mxu0 0
        %1341 = vmatpush1.bf16.xpose.msra.mxu0 0
        %1342 = vmatprep.subr.bf16.mxu0 0
        %1343 = vmatpush1.bf16.xpose.msra.mxu0 0
        %1344 = vmatprep.subr.bf16.mxu0 0
        %1345 = vmatpush1.bf16.xpose.msra.mxu0 0
        %1346 = vmatprep.subr.bf16.mxu0 0
        %1347 = vmatpush1.bf16.xpose.msra.mxu0 0
        %1348 = vmatprep.subr.bf16.mxu0 0
        %1349 = vmatpush1.bf16.xpose.msra.mxu0 0
        %1350 = vmatprep.subr.bf16.mxu0 0
        %1351 = vmatpush1.bf16.xpose.msra.mxu0 0
        %1352 = vmatprep.subr.bf16.mxu0 0
        %1353 = vmatpush1.bf16.xpose.msra.mxu0 0
        %1354 = vmatprep.subr.bf16.mxu0 0
        %1355 = vmatpush1.bf16.xpose.msra.mxu0 0
        %1356 = vmatprep.subr.bf16.mxu0 0
        %1357 = vmatpush1.bf16.xpose.msra.mxu0 0
        %1358 = vmatprep.subr.bf16.mxu0 0
        %1359 = vmatpush1.bf16.xpose.msra.mxu0 0
        %1360 = vmatprep.subr.bf16.mxu0 0
        %1361 = vmatpush1.bf16.xpose.msra.mxu0 0
        %1362 = vmatprep.mubr.bf16.mxu0 0
        %1363 = vmatmul.mubr.bf16.gmra.mrb[0].mxu0 %v1325
        %v1364 = vpop.f32.mrb[0].mxu0
        %v1365 = vadd.f32 %v647, %v1364
        %v1366 = vpop.f32.mrb[0].mxu0
        %v1367 = vpop.f32.mrb[0].mxu0
        %v1368 = vpop.f32.mrb[0].mxu0
        %1369 = vdwg.mxu0
        %1370 = vrot.lane.b32.xlu0 %v783, 112
        %v1371 = vpop.permute.xlu0 %1370
        %1372 = vrot.lane.b32.xlu0 %v783, 80
        %v1373 = vpop.permute.xlu0 %1372
        %v1375 = vsel %vm787, %v1371, 0
        %v1378 = vsel %vm787, %v1373, 0
        %1380 = vmatprep.subr.bf16.mxu0 0
        %1381 = vmatpush1.bf16.xpose.msra.mxu0 %v1378
        %1382 = vmatprep.subr.bf16.mxu0 0
        %1383 = vmatpush1.bf16.xpose.msra.mxu0 0
        %1384 = vmatprep.subr.bf16.mxu0 0
        %1385 = vmatpush1.bf16.xpose.msra.mxu0 0
        %1386 = vmatprep.subr.bf16.mxu0 0
        %1387 = vmatpush1.bf16.xpose.msra.mxu0 0
        %1388 = vmatprep.subr.bf16.mxu0 0
        %1389 = vmatpush1.bf16.xpose.msra.mxu0 0
        %1390 = vmatprep.subr.bf16.mxu0 0
        %1391 = vmatpush1.bf16.xpose.msra.mxu0 0
        %1392 = vmatprep.subr.bf16.mxu0 0
        %1393 = vmatpush1.bf16.xpose.msra.mxu0 0
        %1394 = vmatprep.subr.bf16.mxu0 0
        %1395 = vmatpush1.bf16.xpose.msra.mxu0 0
        %1396 = vmatprep.subr.bf16.mxu0 0
        %1397 = vmatpush1.bf16.xpose.msra.mxu0 0
        %1398 = vmatprep.subr.bf16.mxu0 0
        %1399 = vmatpush1.bf16.xpose.msra.mxu0 0
        %1400 = vmatprep.subr.bf16.mxu0 0
        %1401 = vmatpush1.bf16.xpose.msra.mxu0 0
        %1402 = vmatprep.subr.bf16.mxu0 0
        %1403 = vmatpush1.bf16.xpose.msra.mxu0 0
        %1404 = vmatprep.subr.bf16.mxu0 0
        %1405 = vmatpush1.bf16.xpose.msra.mxu0 0
        %1406 = vmatprep.subr.bf16.mxu0 0
        %1407 = vmatpush1.bf16.xpose.msra.mxu0 0
        %1408 = vmatprep.subr.bf16.mxu0 0
        %1409 = vmatpush1.bf16.xpose.msra.mxu0 0
        %1410 = vmatprep.subr.bf16.mxu0 0
        %1411 = vmatpush1.bf16.xpose.msra.mxu0 0
        %1412 = vmatprep.mubr.bf16.mxu0 0
        %1413 = vmatmul.mubr.bf16.gmra.mrb[0].mxu0 %v1375
        %v1414 = vpop.f32.mrb[0].mxu0
        %v1415 = vadd.f32 %v647, %v1414
        %v1416 = vpop.f32.mrb[0].mxu0
        %v1417 = vpop.f32.mrb[0].mxu0
        %v1418 = vpop.f32.mrb[0].mxu0
        %1419 = vdwg.mxu0
        %v1420 = vsel %vm787, %v1365, -inf
        %1421 = vmax.xlane.f32.xlu0 %v1420
        %v1422 = vpop.xlane.xlu0 %1421
        %v1423 = vsel %vm787, %v1415, -inf
        %1424 = vmax.xlane.f32.xlu0 %v1423
        %v1425 = vpop.xlane.xlu0 %1424
        %v1426 = vsub.f32 %v1365, %v1422
        %v1427 = vsub.f32 %v1415, %v1425
        %v1428 = vmul.f32 %v1426, 1.442695
        %v1429 = vpow.pop %v1428
        %v1430 = vmul.f32 %v1427, 1.442695
        %v1431 = vpow.pop %v1430
        %v1432 = vsel %vm787, %v1429, 0.0
        %1433 = vadd.xlane.f32.xlu0 %v1432
        %v1434 = vpop.xlane.xlu0 %1433
        %v1435 = vsel %vm787, %v1431, 0.0
        %1436 = vadd.xlane.f32.xlu0 %v1435
        %v1437 = vpop.xlane.xlu0 %1436
        %v1438 = vrcp.pop %v1434
        %v1439 = vmul.f32 %v1429, %v1438
        %v1440 = vrcp.pop %v1437
        %v1441 = vmul.f32 %v1431, %v1440
        %v1442 = vpack.c.bf16 %v1439, %v1439
        %v1443 = vpack.c.bf16 %v1441, %v1441
        %1444 = vrot.lane.b32.xlu0 %v782, 48
        %v1445 = vpop.permute.xlu0 %1444
        %v1447 = vsel %vm787, %v1442, 0
        %v1450 = vsel %vm912, %v1445, 0
        %1452 = vmatprep.subr.bf16.mxu0 0
        %1453 = vmatpush1.bf16.msra.mxu0 %v1450
        %1454 = vmatprep.subr.bf16.mxu0 0
        %1455 = vmatpush1.bf16.msra.mxu0 0
        %1456 = vmatprep.subr.bf16.mxu0 0
        %1457 = vmatpush1.bf16.msra.mxu0 0
        %1458 = vmatprep.subr.bf16.mxu0 0
        %1459 = vmatpush1.bf16.msra.mxu0 0
        %1460 = vmatprep.subr.bf16.mxu0 0
        %1461 = vmatpush1.bf16.msra.mxu0 0
        %1462 = vmatprep.subr.bf16.mxu0 0
        %1463 = vmatpush1.bf16.msra.mxu0 0
        %1464 = vmatprep.subr.bf16.mxu0 0
        %1465 = vmatpush1.bf16.msra.mxu0 0
        %1466 = vmatprep.subr.bf16.mxu0 0
        %1467 = vmatpush1.bf16.msra.mxu0 0
        %1468 = vmatprep.subr.bf16.mxu0 0
        %1469 = vmatpush1.bf16.msra.mxu0 0
        %1470 = vmatprep.subr.bf16.mxu0 0
        %1471 = vmatpush1.bf16.msra.mxu0 0
        %1472 = vmatprep.subr.bf16.mxu0 0
        %1473 = vmatpush1.bf16.msra.mxu0 0
        %1474 = vmatprep.subr.bf16.mxu0 0
        %1475 = vmatpush1.bf16.msra.mxu0 0
        %1476 = vmatprep.subr.bf16.mxu0 0
        %1477 = vmatpush1.bf16.msra.mxu0 0
        %1478 = vmatprep.subr.bf16.mxu0 0
        %1479 = vmatpush1.bf16.msra.mxu0 0
        %1480 = vmatprep.subr.bf16.mxu0 0
        %1481 = vmatpush1.bf16.msra.mxu0 0
        %1482 = vmatprep.subr.bf16.mxu0 0
        %1483 = vmatpush1.bf16.msra.mxu0 0
        %1484 = vmatprep.mubr.bf16.mxu0 0
        %1485 = vmatmul.mubr.bf16.gmra.mrb[0].mxu0 %v1447
        %v1486 = vpop.f32.mrb[0].mxu0
        %v1487 = vadd.f32 0.0, %v1486
        %v1488 = vpop.f32.mrb[0].mxu0
        %v1489 = vpop.f32.mrb[0].mxu0
        %v1490 = vpop.f32.mrb[0].mxu0
        %1491 = vdwg.mxu0
        %1492 = vrot.lane.b32.xlu0 %v783, 48
        %v1493 = vpop.permute.xlu0 %1492
        %v1495 = vsel %vm787, %v1443, 0
        %v1498 = vsel %vm912, %v1493, 0
        %1500 = vmatprep.subr.bf16.mxu0 0
        %1501 = vmatpush1.bf16.msra.mxu0 %v1498
        %1502 = vmatprep.subr.bf16.mxu0 0
        %1503 = vmatpush1.bf16.msra.mxu0 0
        %1504 = vmatprep.subr.bf16.mxu0 0
        %1505 = vmatpush1.bf16.msra.mxu0 0
        %1506 = vmatprep.subr.bf16.mxu0 0
        %1507 = vmatpush1.bf16.msra.mxu0 0
        %1508 = vmatprep.subr.bf16.mxu0 0
        %1509 = vmatpush1.bf16.msra.mxu0 0
        %1510 = vmatprep.subr.bf16.mxu0 0
        %1511 = vmatpush1.bf16.msra.mxu0 0
        %1512 = vmatprep.subr.bf16.mxu0 0
        %1513 = vmatpush1.bf16.msra.mxu0 0
        %1514 = vmatprep.subr.bf16.mxu0 0
        %1515 = vmatpush1.bf16.msra.mxu0 0
        %1516 = vmatprep.subr.bf16.mxu0 0
        %1517 = vmatpush1.bf16.msra.mxu0 0
        %1518 = vmatprep.subr.bf16.mxu0 0
        %1519 = vmatpush1.bf16.msra.mxu0 0
        %1520 = vmatprep.subr.bf16.mxu0 0
        %1521 = vmatpush1.bf16.msra.mxu0 0
        %1522 = vmatprep.subr.bf16.mxu0 0
        %1523 = vmatpush1.bf16.msra.mxu0 0
        %1524 = vmatprep.subr.bf16.mxu0 0
        %1525 = vmatpush1.bf16.msra.mxu0 0
        %1526 = vmatprep.subr.bf16.mxu0 0
        %1527 = vmatpush1.bf16.msra.mxu0 0
        %1528 = vmatprep.subr.bf16.mxu0 0
        %1529 = vmatpush1.bf16.msra.mxu0 0
        %1530 = vmatprep.subr.bf16.mxu0 0
        %1531 = vmatpush1.bf16.msra.mxu0 0
        %1532 = vmatprep.mubr.bf16.mxu0 0
        %1533 = vmatmul.mubr.bf16.gmra.mrb[0].mxu0 %v1495
        %v1534 = vpop.f32.mrb[0].mxu0
        %v1535 = vadd.f32 0.0, %v1534
        %v1536 = vpop.f32.mrb[0].mxu0
        %v1537 = vpop.f32.mrb[0].mxu0
        %v1538 = vpop.f32.mrb[0].mxu0
        %1539 = vdwg.mxu0
        %v1540 = vpack.c.bf16 %v1535, %v1487
        %v1542 = vsel %vm787, %v1540, 0
        %v1545 = vsel %vm912, %v656, 0
        %1547 = vmatprep.subr.bf16.mxu0 0
        %1548 = vmatpush1.bf16.msra.mxu0 %v1545
        %1549 = vmatprep.subr.bf16.mxu0 0
        %1550 = vmatpush1.bf16.msra.mxu0 0
        %1551 = vmatprep.subr.bf16.mxu0 0
        %1552 = vmatpush1.bf16.msra.mxu0 0
        %1553 = vmatprep.subr.bf16.mxu0 0
        %1554 = vmatpush1.bf16.msra.mxu0 0
        %1555 = vmatprep.subr.bf16.mxu0 0
        %1556 = vmatpush1.bf16.msra.mxu0 0
        %1557 = vmatprep.subr.bf16.mxu0 0
        %1558 = vmatpush1.bf16.msra.mxu0 0
        %1559 = vmatprep.subr.bf16.mxu0 0
        %1560 = vmatpush1.bf16.msra.mxu0 0
        %1561 = vmatprep.subr.bf16.mxu0 0
        %1562 = vmatpush1.bf16.msra.mxu0 0
        %1563 = vmatprep.subr.bf16.mxu0 0
        %1564 = vmatpush1.bf16.msra.mxu0 0
        %1565 = vmatprep.subr.bf16.mxu0 0
        %1566 = vmatpush1.bf16.msra.mxu0 0
        %1567 = vmatprep.subr.bf16.mxu0 0
        %1568 = vmatpush1.bf16.msra.mxu0 0
        %1569 = vmatprep.subr.bf16.mxu0 0
        %1570 = vmatpush1.bf16.msra.mxu0 0
        %1571 = vmatprep.subr.bf16.mxu0 0
        %1572 = vmatpush1.bf16.msra.mxu0 0
        %1573 = vmatprep.subr.bf16.mxu0 0
        %1574 = vmatpush1.bf16.msra.mxu0 0
        %1575 = vmatprep.subr.bf16.mxu0 0
        %1576 = vmatpush1.bf16.msra.mxu0 0
        %1577 = vmatprep.subr.bf16.mxu0 0
        %1578 = vmatpush1.bf16.msra.mxu0 0
        %1579 = vmatprep.mubr.bf16.mxu0 0
        %1580 = vmatmul.mubr.bf16.gmra.mrb[0].mxu0 %v1542
        %v1581 = vpop.f32.mrb[0].mxu0
        %v1582 = vadd.f32 0.0, %v1581
        %v1583 = vpop.f32.mrb[0].mxu0
        %v1584 = vpop.f32.mrb[0].mxu0
        %v1585 = vadd.f32 0.0, %v1584
        %v1586 = vpop.f32.mrb[0].mxu0
        %1587 = vdwg.mxu0
        %v1588 = vadd.f32 %v1314, %v1582
        %v1589 = vadd.f32 %v1317, %v1585
        %1590 = vrot.lane.b32.xlu0 %v782, 104
        %v1591 = vpop.permute.xlu0 %1590
        %1592 = vrot.lane.b32.xlu0 %v782, 72
        %v1593 = vpop.permute.xlu0 %1592
        %v1595 = vsel %vm787, %v1591, 0
        %v1598 = vsel %vm787, %v1593, 0
        %1600 = vmatprep.subr.bf16.mxu0 0
        %1601 = vmatpush1.bf16.xpose.msra.mxu0 %v1598
        %1602 = vmatprep.subr.bf16.mxu0 0
        %1603 = vmatpush1.bf16.xpose.msra.mxu0 0
        %1604 = vmatprep.subr.bf16.mxu0 0
        %1605 = vmatpush1.bf16.xpose.msra.mxu0 0
        %1606 = vmatprep.subr.bf16.mxu0 0
        %1607 = vmatpush1.bf16.xpose.msra.mxu0 0
        %1608 = vmatprep.subr.bf16.mxu0 0
        %1609 = vmatpush1.bf16.xpose.msra.mxu0 0
        %1610 = vmatprep.subr.bf16.mxu0 0
        %1611 = vmatpush1.bf16.xpose.msra.mxu0 0
        %1612 = vmatprep.subr.bf16.mxu0 0
        %1613 = vmatpush1.bf16.xpose.msra.mxu0 0
        %1614 = vmatprep.subr.bf16.mxu0 0
        %1615 = vmatpush1.bf16.xpose.msra.mxu0 0
        %1616 = vmatprep.subr.bf16.mxu0 0
        %1617 = vmatpush1.bf16.xpose.msra.mxu0 0
        %1618 = vmatprep.subr.bf16.mxu0 0
        %1619 = vmatpush1.bf16.xpose.msra.mxu0 0
        %1620 = vmatprep.subr.bf16.mxu0 0
        %1621 = vmatpush1.bf16.xpose.msra.mxu0 0
        %1622 = vmatprep.subr.bf16.mxu0 0
        %1623 = vmatpush1.bf16.xpose.msra.mxu0 0
        %1624 = vmatprep.subr.bf16.mxu0 0
        %1625 = vmatpush1.bf16.xpose.msra.mxu0 0
        %1626 = vmatprep.subr.bf16.mxu0 0
        %1627 = vmatpush1.bf16.xpose.msra.mxu0 0
        %1628 = vmatprep.subr.bf16.mxu0 0
        %1629 = vmatpush1.bf16.xpose.msra.mxu0 0
        %1630 = vmatprep.subr.bf16.mxu0 0
        %1631 = vmatpush1.bf16.xpose.msra.mxu0 0
        %1632 = vmatprep.mubr.bf16.mxu0 0
        %1633 = vmatmul.mubr.bf16.gmra.mrb[0].mxu0 %v1595
        %v1634 = vpop.f32.mrb[0].mxu0
        %v1635 = vadd.f32 %v647, %v1634
        %v1636 = vpop.f32.mrb[0].mxu0
        %v1637 = vpop.f32.mrb[0].mxu0
        %v1638 = vpop.f32.mrb[0].mxu0
        %1639 = vdwg.mxu0
        %1640 = vrot.lane.b32.xlu0 %v783, 104
        %v1641 = vpop.permute.xlu0 %1640
        %1642 = vrot.lane.b32.xlu0 %v783, 72
        %v1643 = vpop.permute.xlu0 %1642
        %v1645 = vsel %vm787, %v1641, 0
        %v1648 = vsel %vm787, %v1643, 0
        %1650 = vmatprep.subr.bf16.mxu0 0
        %1651 = vmatpush1.bf16.xpose.msra.mxu0 %v1648
        %1652 = vmatprep.subr.bf16.mxu0 0
        %1653 = vmatpush1.bf16.xpose.msra.mxu0 0
        %1654 = vmatprep.subr.bf16.mxu0 0
        %1655 = vmatpush1.bf16.xpose.msra.mxu0 0
        %1656 = vmatprep.subr.bf16.mxu0 0
        %1657 = vmatpush1.bf16.xpose.msra.mxu0 0
        %1658 = vmatprep.subr.bf16.mxu0 0
        %1659 = vmatpush1.bf16.xpose.msra.mxu0 0
        %1660 = vmatprep.subr.bf16.mxu0 0
        %1661 = vmatpush1.bf16.xpose.msra.mxu0 0
        %1662 = vmatprep.subr.bf16.mxu0 0
        %1663 = vmatpush1.bf16.xpose.msra.mxu0 0
        %1664 = vmatprep.subr.bf16.mxu0 0
        %1665 = vmatpush1.bf16.xpose.msra.mxu0 0
        %1666 = vmatprep.subr.bf16.mxu0 0
        %1667 = vmatpush1.bf16.xpose.msra.mxu0 0
        %1668 = vmatprep.subr.bf16.mxu0 0
        %1669 = vmatpush1.bf16.xpose.msra.mxu0 0
        %1670 = vmatprep.subr.bf16.mxu0 0
        %1671 = vmatpush1.bf16.xpose.msra.mxu0 0
        %1672 = vmatprep.subr.bf16.mxu0 0
        %1673 = vmatpush1.bf16.xpose.msra.mxu0 0
        %1674 = vmatprep.subr.bf16.mxu0 0
        %1675 = vmatpush1.bf16.xpose.msra.mxu0 0
        %1676 = vmatprep.subr.bf16.mxu0 0
        %1677 = vmatpush1.bf16.xpose.msra.mxu0 0
        %1678 = vmatprep.subr.bf16.mxu0 0
        %1679 = vmatpush1.bf16.xpose.msra.mxu0 0
        %1680 = vmatprep.subr.bf16.mxu0 0
        %1681 = vmatpush1.bf16.xpose.msra.mxu0 0
        %1682 = vmatprep.mubr.bf16.mxu0 0
        %1683 = vmatmul.mubr.bf16.gmra.mrb[0].mxu0 %v1645
        %v1684 = vpop.f32.mrb[0].mxu0
        %v1685 = vadd.f32 %v647, %v1684
        %v1686 = vpop.f32.mrb[0].mxu0
        %v1687 = vpop.f32.mrb[0].mxu0
        %v1688 = vpop.f32.mrb[0].mxu0
        %1689 = vdwg.mxu0
        %v1690 = vsel %vm787, %v1635, -inf
        %1691 = vmax.xlane.f32.xlu0 %v1690
        %v1692 = vpop.xlane.xlu0 %1691
        %v1693 = vsel %vm787, %v1685, -inf
        %1694 = vmax.xlane.f32.xlu0 %v1693
        %v1695 = vpop.xlane.xlu0 %1694
        %v1696 = vsub.f32 %v1635, %v1692
        %v1697 = vsub.f32 %v1685, %v1695
        %v1698 = vmul.f32 %v1696, 1.442695
        %v1699 = vpow.pop %v1698
        %v1700 = vmul.f32 %v1697, 1.442695
        %v1701 = vpow.pop %v1700
        %v1702 = vsel %vm787, %v1699, 0.0
        %1703 = vadd.xlane.f32.xlu0 %v1702
        %v1704 = vpop.xlane.xlu0 %1703
        %v1705 = vsel %vm787, %v1701, 0.0
        %1706 = vadd.xlane.f32.xlu0 %v1705
        %v1707 = vpop.xlane.xlu0 %1706
        %v1708 = vrcp.pop %v1704
        %v1709 = vmul.f32 %v1699, %v1708
        %v1710 = vrcp.pop %v1707
        %v1711 = vmul.f32 %v1701, %v1710
        %v1712 = vpack.c.bf16 %v1709, %v1709
        %v1713 = vpack.c.bf16 %v1711, %v1711
        %1714 = vrot.lane.b32.xlu0 %v782, 40
        %v1715 = vpop.permute.xlu0 %1714
        %v1717 = vsel %vm787, %v1712, 0
        %v1720 = vsel %vm912, %v1715, 0
        %1722 = vmatprep.subr.bf16.mxu0 0
        %1723 = vmatpush1.bf16.msra.mxu0 %v1720
        %1724 = vmatprep.subr.bf16.mxu0 0
        %1725 = vmatpush1.bf16.msra.mxu0 0
        %1726 = vmatprep.subr.bf16.mxu0 0
        %1727 = vmatpush1.bf16.msra.mxu0 0
        %1728 = vmatprep.subr.bf16.mxu0 0
        %1729 = vmatpush1.bf16.msra.mxu0 0
        %1730 = vmatprep.subr.bf16.mxu0 0
        %1731 = vmatpush1.bf16.msra.mxu0 0
        %1732 = vmatprep.subr.bf16.mxu0 0
        %1733 = vmatpush1.bf16.msra.mxu0 0
        %1734 = vmatprep.subr.bf16.mxu0 0
        %1735 = vmatpush1.bf16.msra.mxu0 0
        %1736 = vmatprep.subr.bf16.mxu0 0
        %1737 = vmatpush1.bf16.msra.mxu0 0
        %1738 = vmatprep.subr.bf16.mxu0 0
        %1739 = vmatpush1.bf16.msra.mxu0 0
        %1740 = vmatprep.subr.bf16.mxu0 0
        %1741 = vmatpush1.bf16.msra.mxu0 0
        %1742 = vmatprep.subr.bf16.mxu0 0
        %1743 = vmatpush1.bf16.msra.mxu0 0
        %1744 = vmatprep.subr.bf16.mxu0 0
        %1745 = vmatpush1.bf16.msra.mxu0 0
        %1746 = vmatprep.subr.bf16.mxu0 0
        %1747 = vmatpush1.bf16.msra.mxu0 0
        %1748 = vmatprep.subr.bf16.mxu0 0
        %1749 = vmatpush1.bf16.msra.mxu0 0
        %1750 = vmatprep.subr.bf16.mxu0 0
        %1751 = vmatpush1.bf16.msra.mxu0 0
        %1752 = vmatprep.subr.bf16.mxu0 0
        %1753 = vmatpush1.bf16.msra.mxu0 0
        %1754 = vmatprep.mubr.bf16.mxu0 0
        %1755 = vmatmul.mubr.bf16.gmra.mrb[0].mxu0 %v1717
        %v1756 = vpop.f32.mrb[0].mxu0
        %v1757 = vadd.f32 0.0, %v1756
        %v1758 = vpop.f32.mrb[0].mxu0
        %v1759 = vpop.f32.mrb[0].mxu0
        %v1760 = vpop.f32.mrb[0].mxu0
        %1761 = vdwg.mxu0
        %1762 = vrot.lane.b32.xlu0 %v783, 40
        %v1763 = vpop.permute.xlu0 %1762
        %v1765 = vsel %vm787, %v1713, 0
        %v1768 = vsel %vm912, %v1763, 0
        %1770 = vmatprep.subr.bf16.mxu0 0
        %1771 = vmatpush1.bf16.msra.mxu0 %v1768
        %1772 = vmatprep.subr.bf16.mxu0 0
        %1773 = vmatpush1.bf16.msra.mxu0 0
        %1774 = vmatprep.subr.bf16.mxu0 0
        %1775 = vmatpush1.bf16.msra.mxu0 0
        %1776 = vmatprep.subr.bf16.mxu0 0
        %1777 = vmatpush1.bf16.msra.mxu0 0
        %1778 = vmatprep.subr.bf16.mxu0 0
        %1779 = vmatpush1.bf16.msra.mxu0 0
        %1780 = vmatprep.subr.bf16.mxu0 0
        %1781 = vmatpush1.bf16.msra.mxu0 0
        %1782 = vmatprep.subr.bf16.mxu0 0
        %1783 = vmatpush1.bf16.msra.mxu0 0
        %1784 = vmatprep.subr.bf16.mxu0 0
        %1785 = vmatpush1.bf16.msra.mxu0 0
        %1786 = vmatprep.subr.bf16.mxu0 0
        %1787 = vmatpush1.bf16.msra.mxu0 0
        %1788 = vmatprep.subr.bf16.mxu0 0
        %1789 = vmatpush1.bf16.msra.mxu0 0
        %1790 = vmatprep.subr.bf16.mxu0 0
        %1791 = vmatpush1.bf16.msra.mxu0 0
        %1792 = vmatprep.subr.bf16.mxu0 0
        %1793 = vmatpush1.bf16.msra.mxu0 0
        %1794 = vmatprep.subr.bf16.mxu0 0
        %1795 = vmatpush1.bf16.msra.mxu0 0
        %1796 = vmatprep.subr.bf16.mxu0 0
        %1797 = vmatpush1.bf16.msra.mxu0 0
        %1798 = vmatprep.subr.bf16.mxu0 0
        %1799 = vmatpush1.bf16.msra.mxu0 0
        %1800 = vmatprep.subr.bf16.mxu0 0
        %1801 = vmatpush1.bf16.msra.mxu0 0
        %1802 = vmatprep.mubr.bf16.mxu0 0
        %1803 = vmatmul.mubr.bf16.gmra.mrb[0].mxu0 %v1765
        %v1804 = vpop.f32.mrb[0].mxu0
        %v1805 = vadd.f32 0.0, %v1804
        %v1806 = vpop.f32.mrb[0].mxu0
        %v1807 = vpop.f32.mrb[0].mxu0
        %v1808 = vpop.f32.mrb[0].mxu0
        %1809 = vdwg.mxu0
        %v1810 = vpack.c.bf16 %v1805, %v1757
        %v1812 = vsel %vm787, %v1810, 0
        %v1815 = vsel %vm912, %v657, 0
        %1817 = vmatprep.subr.bf16.mxu0 0
        %1818 = vmatpush1.bf16.msra.mxu0 %v1815
        %1819 = vmatprep.subr.bf16.mxu0 0
        %1820 = vmatpush1.bf16.msra.mxu0 0
        %1821 = vmatprep.subr.bf16.mxu0 0
        %1822 = vmatpush1.bf16.msra.mxu0 0
        %1823 = vmatprep.subr.bf16.mxu0 0
        %1824 = vmatpush1.bf16.msra.mxu0 0
        %1825 = vmatprep.subr.bf16.mxu0 0
        %1826 = vmatpush1.bf16.msra.mxu0 0
        %1827 = vmatprep.subr.bf16.mxu0 0
        %1828 = vmatpush1.bf16.msra.mxu0 0
        %1829 = vmatprep.subr.bf16.mxu0 0
        %1830 = vmatpush1.bf16.msra.mxu0 0
        %1831 = vmatprep.subr.bf16.mxu0 0
        %1832 = vmatpush1.bf16.msra.mxu0 0
        %1833 = vmatprep.subr.bf16.mxu0 0
        %1834 = vmatpush1.bf16.msra.mxu0 0
        %1835 = vmatprep.subr.bf16.mxu0 0
        %1836 = vmatpush1.bf16.msra.mxu0 0
        %1837 = vmatprep.subr.bf16.mxu0 0
        %1838 = vmatpush1.bf16.msra.mxu0 0
        %1839 = vmatprep.subr.bf16.mxu0 0
        %1840 = vmatpush1.bf16.msra.mxu0 0
        %1841 = vmatprep.subr.bf16.mxu0 0
        %1842 = vmatpush1.bf16.msra.mxu0 0
        %1843 = vmatprep.subr.bf16.mxu0 0
        %1844 = vmatpush1.bf16.msra.mxu0 0
        %1845 = vmatprep.subr.bf16.mxu0 0
        %1846 = vmatpush1.bf16.msra.mxu0 0
        %1847 = vmatprep.subr.bf16.mxu0 0
        %1848 = vmatpush1.bf16.msra.mxu0 0
        %1849 = vmatprep.mubr.bf16.mxu0 0
        %1850 = vmatmul.mubr.bf16.gmra.mrb[0].mxu0 %v1812
        %v1851 = vpop.f32.mrb[0].mxu0
        %v1852 = vadd.f32 0.0, %v1851
        %v1853 = vpop.f32.mrb[0].mxu0
        %v1854 = vpop.f32.mrb[0].mxu0
        %v1855 = vadd.f32 0.0, %v1854
        %v1856 = vpop.f32.mrb[0].mxu0
        %1857 = vdwg.mxu0
        %v1858 = vadd.f32 %v1588, %v1852
        %v1859 = vadd.f32 %v1589, %v1855
        %v1860 = vlaneseq
        %v1861 = vshrl.u32 %v1860, 7
        %v1862 = vsub.s32 2, %v1861
        %v1863 = vrot.slane %v648, %v1862
        %v1864 = vadd.f32 %v1858, %v1863
        %v1865 = vadd.f32 %v1859, %v1863
        %v1866 = vadd.f32 %v640, %v1864
        %v1867 = vadd.f32 %v641, %v1865
        %v1868 = vsel %vm679, %v1866, 0.0
        %1869 = vadd.xlane.f32.xlu0 %v1868
        %v1870 = vpop.xlane.xlu0 %1869
        %v1871 = vsel %vm679, %v1867, 0.0
        %1872 = vadd.xlane.f32.xlu0 %v1871
        %v1873 = vpop.xlane.xlu0 %1872
        %v1874 = vmul.f32 %v1870, %v686
        %v1875 = vmul.f32 %v1873, %v686
        %v1876 = vsub.f32 %v1866, %v1874
        %v1877 = vsub.f32 %v1867, %v1875
        %v1878 = vmul.f32 %v1876, %v1876
        %v1879 = vmul.f32 %v1877, %v1877
        %v1880 = vsel %vm679, %v1878, 0.0
        %1881 = vadd.xlane.f32.xlu0 %v1880
        %v1882 = vpop.xlane.xlu0 %1881
        %v1883 = vsel %vm679, %v1879, 0.0
        %1884 = vadd.xlane.f32.xlu0 %v1883
        %v1885 = vpop.xlane.xlu0 %1884
        %v1886 = vmul.f32 %v1882, %v686
        %v1887 = vmul.f32 %v1885, %v686
        %v1888 = vadd.f32 %v1886, 1e-05
        %v1889 = vadd.f32 %v1887, 1e-05
        %v1890 = vrsqrt.pop %v1888
        %v1891 = vrsqrt.pop %v1889
        %v1892 = vmul.f32 %v1876, %v1890
        %v1893 = vmul.f32 %v1877, %v1891
        %v1894 = vlaneseq
        %v1895 = vshrl.u32 %v1894, 7
        %v1896 = vsub.s32 3, %v1895
        %v1897 = vrot.slane %v648, %v1896
        %v1898 = vmul.f32 %v1892, %v1897
        %v1899 = vmul.f32 %v1893, %v1897
        %v1900 = vlaneseq
        %v1901 = vshrl.u32 %v1900, 7
        %v1902 = vsub.s32 4, %v1901
        %v1903 = vrot.slane %v648, %v1902
        %v1904 = vadd.f32 %v1898, %v1903
        %v1905 = vadd.f32 %v1899, %v1903
        %v1906 = vpack.c.bf16 %v1905, %v1904
        %v1908 = vlaneseq
        %v1909 = vshrl.u32 %v1908, 7
        %v1910 = vsub.s32 0, %v1909
        %v1911 = vrot.slane %v662, %v1910
        %v1917 = vunpack.c.l.b16 %v658
        %v1918 = vunpack.c.l.b16 %v659
        %v1919 = vunpack.c.l.b16 %v660
        %v1920 = vunpack.c.l.b16 %v661
        %v1921 = vpack.c.b16 %v1918, %v1917
        %v1922 = vpack.c.b16 %v1920, %v1919
        %v1926 = vsel %vm679, %v1906, 0
        %1928 = vmatprep.subr.bf16.mxu0 0
        %1929 = vmatpush1.bf16.msra.mxu0 %v1921
        %1930 = vmatprep.subr.bf16.mxu0 0
        %1931 = vmatpush1.bf16.msra.mxu0 %v1922
        %1932 = vmatprep.subr.bf16.mxu0 0
        %1933 = vmatpush1.bf16.msra.mxu0 0
        %1934 = vmatprep.subr.bf16.mxu0 0
        %1935 = vmatpush1.bf16.msra.mxu0 0
        %1936 = vmatprep.subr.bf16.mxu0 0
        %1937 = vmatpush1.bf16.msra.mxu0 0
        %1938 = vmatprep.subr.bf16.mxu0 0
        %1939 = vmatpush1.bf16.msra.mxu0 0
        %1940 = vmatprep.subr.bf16.mxu0 0
        %1941 = vmatpush1.bf16.msra.mxu0 0
        %1942 = vmatprep.subr.bf16.mxu0 0
        %1943 = vmatpush1.bf16.msra.mxu0 0
        %1944 = vmatprep.subr.bf16.mxu0 0
        %1945 = vmatpush1.bf16.msra.mxu0 0
        %1946 = vmatprep.subr.bf16.mxu0 0
        %1947 = vmatpush1.bf16.msra.mxu0 0
        %1948 = vmatprep.subr.bf16.mxu0 0
        %1949 = vmatpush1.bf16.msra.mxu0 0
        %1950 = vmatprep.subr.bf16.mxu0 0
        %1951 = vmatpush1.bf16.msra.mxu0 0
        %1952 = vmatprep.subr.bf16.mxu0 0
        %1953 = vmatpush1.bf16.msra.mxu0 0
        %1954 = vmatprep.subr.bf16.mxu0 0
        %1955 = vmatpush1.bf16.msra.mxu0 0
        %1956 = vmatprep.subr.bf16.mxu0 0
        %1957 = vmatpush1.bf16.msra.mxu0 0
        %1958 = vmatprep.subr.bf16.mxu0 0
        %1959 = vmatpush1.bf16.msra.mxu0 0
        %1960 = vmatprep.mubr.bf16.mxu0 0
        %1961 = vmatmul.mubr.bf16.gmra.mrb[0].mxu0 %v1926
        %v1962 = vpop.f32.mrb[0].mxu0
        %v1963 = vadd.f32 %v1911, %v1962
        %v1964 = vpop.f32.mrb[0].mxu0
        %v1965 = vpop.f32.mrb[0].mxu0
        %v1966 = vadd.f32 %v1911, %v1965
        %v1967 = vpop.f32.mrb[0].mxu0
        %1968 = vdwg.mxu0
        %v1969 = vmul.f32 %v1963, 1.702
        %v1970 = vmul.f32 %v1966, 1.702
        %v1971 = vxor.u32 %v1969, 2147483648
        %v1972 = vxor.u32 %v1970, 2147483648
        %v1973 = vmul.f32 %v1971, 1.442695
        %v1974 = vpow.pop %v1973
        %v1975 = vmul.f32 %v1972, 1.442695
        %v1976 = vpow.pop %v1975
        %v1977 = vadd.f32 %v1974, 1.0
        %v1978 = vadd.f32 %v1976, 1.0
        %v1979 = vrcp.pop %v1977
        %v1980 = vmul.f32 1.0, %v1979
        %v1981 = vrcp.pop %v1978
        %v1982 = vmul.f32 1.0, %v1981
        %v1983 = vmul.f32 %v1963, %v1980
        %v1984 = vmul.f32 %v1966, %v1982
        %v1985 = vpack.c.bf16 %v1984, %v1983
        %v1986 = vlaneseq
        %v1987 = vshrl.u32 %v1986, 7
        %v1988 = vsub.s32 5, %v1987
        %v1989 = vrot.slane %v648, %v1988
        %v2006 = vunpack.c.l.b16 %v663
        %v2007 = vunpack.c.l.b16 %v664
        %v2008 = vunpack.c.l.b16 %v665
        %v2009 = vunpack.c.l.b16 %v666
        %v2010 = vunpack.c.l.b16 %v667
        %v2011 = vunpack.c.l.b16 %v668
        %v2012 = vunpack.c.l.b16 %v669
        %v2013 = vunpack.c.l.b16 %v670
        %v2014 = vunpack.c.l.b16 %v671
        %v2015 = vunpack.c.l.b16 %v672
        %v2016 = vunpack.c.l.b16 %v673
        %v2017 = vunpack.c.l.b16 %v674
        %v2018 = vunpack.c.l.b16 %v675
        %v2019 = vunpack.c.l.b16 %v676
        %v2020 = vunpack.c.l.b16 %v677
        %v2021 = vunpack.c.l.b16 %v678
        %v2022 = vpack.c.b16 %v2007, %v2006
        %v2023 = vpack.c.b16 %v2009, %v2008
        %v2024 = vpack.c.b16 %v2011, %v2010
        %v2025 = vpack.c.b16 %v2013, %v2012
        %v2026 = vpack.c.b16 %v2015, %v2014
        %v2027 = vpack.c.b16 %v2017, %v2016
        %v2028 = vpack.c.b16 %v2019, %v2018
        %v2029 = vpack.c.b16 %v2021, %v2020
        %2038 = vmatprep.subr.bf16.mxu0 0
        %2039 = vmatpush1.bf16.msra.mxu0 %v2022
        %2040 = vmatprep.subr.bf16.mxu0 0
        %2041 = vmatpush1.bf16.msra.mxu0 %v2023
        %2042 = vmatprep.subr.bf16.mxu0 0
        %2043 = vmatpush1.bf16.msra.mxu0 %v2024
        %2044 = vmatprep.subr.bf16.mxu0 0
        %2045 = vmatpush1.bf16.msra.mxu0 %v2025
        %2046 = vmatprep.subr.bf16.mxu0 0
        %2047 = vmatpush1.bf16.msra.mxu0 %v2026
        %2048 = vmatprep.subr.bf16.mxu0 0
        %2049 = vmatpush1.bf16.msra.mxu0 %v2027
        %2050 = vmatprep.subr.bf16.mxu0 0
        %2051 = vmatpush1.bf16.msra.mxu0 %v2028
        %2052 = vmatprep.subr.bf16.mxu0 0
        %2053 = vmatpush1.bf16.msra.mxu0 %v2029
        %2054 = vmatprep.subr.bf16.mxu0 0
        %2055 = vmatpush1.bf16.msra.mxu0 0
        %2056 = vmatprep.subr.bf16.mxu0 0
        %2057 = vmatpush1.bf16.msra.mxu0 0
        %2058 = vmatprep.subr.bf16.mxu0 0
        %2059 = vmatpush1.bf16.msra.mxu0 0
        %2060 = vmatprep.subr.bf16.mxu0 0
        %2061 = vmatpush1.bf16.msra.mxu0 0
        %2062 = vmatprep.subr.bf16.mxu0 0
        %2063 = vmatpush1.bf16.msra.mxu0 0
        %2064 = vmatprep.subr.bf16.mxu0 0
        %2065 = vmatpush1.bf16.msra.mxu0 0
        %2066 = vmatprep.subr.bf16.mxu0 0
        %2067 = vmatpush1.bf16.msra.mxu0 0
        %2068 = vmatprep.subr.bf16.mxu0 0
        %2069 = vmatpush1.bf16.msra.mxu0 0
        %2070 = vmatprep.mubr.bf16.mxu0 0
        %2071 = vmatmul.mubr.bf16.gmra.mrb[0].mxu0 %v1985
        %v2072 = vpop.f32.mrb[0].mxu0
        %v2073 = vadd.f32 %v1989, %v2072
        %v2074 = vpop.f32.mrb[0].mxu0
        %v2075 = vpop.f32.mrb[0].mxu0
        %v2076 = vadd.f32 %v1989, %v2075
        %v2077 = vpop.f32.mrb[0].mxu0
        %2078 = vdwg.mxu0
        %v2079 = vadd.f32 %v1866, %v2073
        %v2080 = vadd.f32 %v1867, %v2076
        %s2081 = scalar_lea.vmem %s5, 8
        %v2082 = vld [vmem:[%s2081] sm:$0x3f]
        %s2083 = scalar_lea.vmem %s2, 16
        %v2084 = vld [vmem:[%s2083] sm:$0xf]
        %v2085 = vld [vmem:[%s2083 + $0x4] sm:$0xf]
        %v2086 = vld [vmem:[%s2083 + $0x8] sm:$0xf]
        %v2087 = vld [vmem:[%s2083 + $0xc] sm:$0xf]
        %s2088 = scalar_lea.vmem %s3, 1
        %v2089 = vld [vmem:[%s2088] sm:$0x1]
        %s2090 = scalar_lea.vmem %s4, 16
        %v2091 = vld [vmem:[%s2090] sm:$0xf]
        %v2092 = vld [vmem:[%s2090 + $0x4] sm:$0xf]
        %v2093 = vld [vmem:[%s2090 + $0x8] sm:$0xf]
        %v2094 = vld [vmem:[%s2090 + $0xc] sm:$0xf]
        %s2095 = scalar_lea.vmem %s6, 16
        %v2096 = vld [vmem:[%s2095] sm:$0xf]
        %v2097 = vld [vmem:[%s2095 + $0x4] sm:$0xf]
        %v2098 = vld [vmem:[%s2095 + $0x8] sm:$0xf]
        %v2099 = vld [vmem:[%s2095 + $0xc] sm:$0xf]
        %s2100 = scalar_lea.vmem %s7, 1
        %v2101 = vld [vmem:[%s2100] sm:$0x1]
        %s2102 = scalar_lea.vmem %s8, 64
        %v2103 = vld [vmem:[%s2102] sm:$0xf]
        %v2104 = vld [vmem:[%s2102 + $0x4] sm:$0xf]
        %v2105 = vld [vmem:[%s2102 + $0x8] sm:$0xf]
        %v2106 = vld [vmem:[%s2102 + $0xc] sm:$0xf]
        %v2107 = vld [vmem:[%s2102 + $0x10] sm:$0xf]
        %v2108 = vld [vmem:[%s2102 + $0x14] sm:$0xf]
        %v2109 = vld [vmem:[%s2102 + $0x18] sm:$0xf]
        %v2110 = vld [vmem:[%s2102 + $0x1c] sm:$0xf]
        %v2111 = vld [vmem:[%s2102 + $0x20] sm:$0xf]
        %v2112 = vld [vmem:[%s2102 + $0x24] sm:$0xf]
        %v2113 = vld [vmem:[%s2102 + $0x28] sm:$0xf]
        %v2114 = vld [vmem:[%s2102 + $0x2c] sm:$0xf]
        %v2115 = vld [vmem:[%s2102 + $0x30] sm:$0xf]
        %v2116 = vld [vmem:[%s2102 + $0x34] sm:$0xf]
        %v2117 = vld [vmem:[%s2102 + $0x38] sm:$0xf]
        %v2118 = vld [vmem:[%s2102 + $0x3c] sm:$0xf]
        %v2119 = vsel %vm679, %v2079, 0.0
        %2120 = vadd.xlane.f32.xlu0 %v2119
        %v2121 = vpop.xlane.xlu0 %2120
        %v2122 = vsel %vm679, %v2080, 0.0
        %2123 = vadd.xlane.f32.xlu0 %v2122
        %v2124 = vpop.xlane.xlu0 %2123
        %v2125 = vmul.f32 %v2121, %v686
        %v2126 = vmul.f32 %v2124, %v686
        %v2127 = vsub.f32 %v2079, %v2125
        %v2128 = vsub.f32 %v2080, %v2126
        %v2129 = vmul.f32 %v2127, %v2127
        %v2130 = vmul.f32 %v2128, %v2128
        %v2131 = vsel %vm679, %v2129, 0.0
        %2132 = vadd.xlane.f32.xlu0 %v2131
        %v2133 = vpop.xlane.xlu0 %2132
        %v2134 = vsel %vm679, %v2130, 0.0
        %2135 = vadd.xlane.f32.xlu0 %v2134
        %v2136 = vpop.xlane.xlu0 %2135
        %v2137 = vmul.f32 %v2133, %v686
        %v2138 = vmul.f32 %v2136, %v686
        %v2139 = vadd.f32 %v2137, 1e-05
        %v2140 = vadd.f32 %v2138, 1e-05
        %v2141 = vrsqrt.pop %v2139
        %v2142 = vrsqrt.pop %v2140
        %v2143 = vmul.f32 %v2127, %v2141
        %v2144 = vmul.f32 %v2128, %v2142
        %v2145 = vlaneseq
        %v2146 = vshrl.u32 %v2145, 7
        %v2147 = vsub.s32 0, %v2146
        %v2148 = vrot.slane %v2082, %v2147
        %v2149 = vmul.f32 %v2143, %v2148
        %v2150 = vmul.f32 %v2144, %v2148
        %v2151 = vlaneseq
        %v2152 = vshrl.u32 %v2151, 7
        %v2153 = vsub.s32 1, %v2152
        %v2154 = vrot.slane %v2082, %v2153
        %v2155 = vadd.f32 %v2149, %v2154
        %v2156 = vadd.f32 %v2150, %v2154
        %v2157 = vpack.c.bf16 %v2156, %v2155
        %v2159 = vlaneseq
        %v2160 = vshrl.u32 %v2159, 7
        %v2161 = vsub.s32 0, %v2160
        %v2162 = vrot.slane %v2089, %v2161
        %v2168 = vunpack.c.l.b16 %v2084
        %v2169 = vunpack.c.l.b16 %v2085
        %v2170 = vunpack.c.l.b16 %v2086
        %v2171 = vunpack.c.l.b16 %v2087
        %v2172 = vpack.c.b16 %v2169, %v2168
        %v2173 = vpack.c.b16 %v2171, %v2170
        %v2177 = vsel %vm679, %v2157, 0
        %2179 = vmatprep.subr.bf16.mxu0 0
        %2180 = vmatpush1.bf16.msra.mxu0 %v2172
        %2181 = vmatprep.subr.bf16.mxu0 0
        %2182 = vmatpush1.bf16.msra.mxu0 %v2173
        %2183 = vmatprep.subr.bf16.mxu0 0
        %2184 = vmatpush1.bf16.msra.mxu0 0
        %2185 = vmatprep.subr.bf16.mxu0 0
        %2186 = vmatpush1.bf16.msra.mxu0 0
        %2187 = vmatprep.subr.bf16.mxu0 0
        %2188 = vmatpush1.bf16.msra.mxu0 0
        %2189 = vmatprep.subr.bf16.mxu0 0
        %2190 = vmatpush1.bf16.msra.mxu0 0
        %2191 = vmatprep.subr.bf16.mxu0 0
        %2192 = vmatpush1.bf16.msra.mxu0 0
        %2193 = vmatprep.subr.bf16.mxu0 0
        %2194 = vmatpush1.bf16.msra.mxu0 0
        %2195 = vmatprep.subr.bf16.mxu0 0
        %2196 = vmatpush1.bf16.msra.mxu0 0
        %2197 = vmatprep.subr.bf16.mxu0 0
        %2198 = vmatpush1.bf16.msra.mxu0 0
        %2199 = vmatprep.subr.bf16.mxu0 0
        %2200 = vmatpush1.bf16.msra.mxu0 0
        %2201 = vmatprep.subr.bf16.mxu0 0
        %2202 = vmatpush1.bf16.msra.mxu0 0
        %2203 = vmatprep.subr.bf16.mxu0 0
        %2204 = vmatpush1.bf16.msra.mxu0 0
        %2205 = vmatprep.subr.bf16.mxu0 0
        %2206 = vmatpush1.bf16.msra.mxu0 0
        %2207 = vmatprep.subr.bf16.mxu0 0
        %2208 = vmatpush1.bf16.msra.mxu0 0
        %2209 = vmatprep.subr.bf16.mxu0 0
        %2210 = vmatpush1.bf16.msra.mxu0 0
        %2211 = vmatprep.mubr.bf16.mxu0 0
        %2212 = vmatmul.mubr.bf16.gmra.mrb[0].mxu0 %v2177
        %v2213 = vpop.f32.mrb[0].mxu0
        %v2214 = vadd.f32 %v2162, %v2213
        %v2215 = vpop.f32.mrb[0].mxu0
        %v2216 = vpop.f32.mrb[0].mxu0
        %v2217 = vadd.f32 %v2162, %v2216
        %v2218 = vpop.f32.mrb[0].mxu0
        %2219 = vdwg.mxu0
        %v2220 = vpack.c.bf16 %v2214, %v2214
        %v2221 = vpack.c.bf16 %v2217, %v2217
        %2223 = vrot.lane.b32.xlu0 %v2220, 96
        %v2224 = vpop.permute.xlu0 %2223
        %v2226 = vsel %vm787, %v2220, 0
        %v2229 = vsel %vm787, %v2224, 0
        %2231 = vmatprep.subr.bf16.mxu0 0
        %2232 = vmatpush1.bf16.xpose.msra.mxu0 %v2229
        %2233 = vmatprep.subr.bf16.mxu0 0
        %2234 = vmatpush1.bf16.xpose.msra.mxu0 0
        %2235 = vmatprep.subr.bf16.mxu0 0
        %2236 = vmatpush1.bf16.xpose.msra.mxu0 0
        %2237 = vmatprep.subr.bf16.mxu0 0
        %2238 = vmatpush1.bf16.xpose.msra.mxu0 0
        %2239 = vmatprep.subr.bf16.mxu0 0
        %2240 = vmatpush1.bf16.xpose.msra.mxu0 0
        %2241 = vmatprep.subr.bf16.mxu0 0
        %2242 = vmatpush1.bf16.xpose.msra.mxu0 0
        %2243 = vmatprep.subr.bf16.mxu0 0
        %2244 = vmatpush1.bf16.xpose.msra.mxu0 0
        %2245 = vmatprep.subr.bf16.mxu0 0
        %2246 = vmatpush1.bf16.xpose.msra.mxu0 0
        %2247 = vmatprep.subr.bf16.mxu0 0
        %2248 = vmatpush1.bf16.xpose.msra.mxu0 0
        %2249 = vmatprep.subr.bf16.mxu0 0
        %2250 = vmatpush1.bf16.xpose.msra.mxu0 0
        %2251 = vmatprep.subr.bf16.mxu0 0
        %2252 = vmatpush1.bf16.xpose.msra.mxu0 0
        %2253 = vmatprep.subr.bf16.mxu0 0
        %2254 = vmatpush1.bf16.xpose.msra.mxu0 0
        %2255 = vmatprep.subr.bf16.mxu0 0
        %2256 = vmatpush1.bf16.xpose.msra.mxu0 0
        %2257 = vmatprep.subr.bf16.mxu0 0
        %2258 = vmatpush1.bf16.xpose.msra.mxu0 0
        %2259 = vmatprep.subr.bf16.mxu0 0
        %2260 = vmatpush1.bf16.xpose.msra.mxu0 0
        %2261 = vmatprep.subr.bf16.mxu0 0
        %2262 = vmatpush1.bf16.xpose.msra.mxu0 0
        %2263 = vmatprep.mubr.bf16.mxu0 0
        %2264 = vmatmul.mubr.bf16.gmra.mrb[0].mxu0 %v2226
        %v2265 = vpop.f32.mrb[0].mxu0
        %v2266 = vadd.f32 %v647, %v2265
        %v2267 = vpop.f32.mrb[0].mxu0
        %v2268 = vpop.f32.mrb[0].mxu0
        %v2269 = vpop.f32.mrb[0].mxu0
        %2270 = vdwg.mxu0
        %2272 = vrot.lane.b32.xlu0 %v2221, 96
        %v2273 = vpop.permute.xlu0 %2272
        %v2275 = vsel %vm787, %v2221, 0
        %v2278 = vsel %vm787, %v2273, 0
        %2280 = vmatprep.subr.bf16.mxu0 0
        %2281 = vmatpush1.bf16.xpose.msra.mxu0 %v2278
        %2282 = vmatprep.subr.bf16.mxu0 0
        %2283 = vmatpush1.bf16.xpose.msra.mxu0 0
        %2284 = vmatprep.subr.bf16.mxu0 0
        %2285 = vmatpush1.bf16.xpose.msra.mxu0 0
        %2286 = vmatprep.subr.bf16.mxu0 0
        %2287 = vmatpush1.bf16.xpose.msra.mxu0 0
        %2288 = vmatprep.subr.bf16.mxu0 0
        %2289 = vmatpush1.bf16.xpose.msra.mxu0 0
        %2290 = vmatprep.subr.bf16.mxu0 0
        %2291 = vmatpush1.bf16.xpose.msra.mxu0 0
        %2292 = vmatprep.subr.bf16.mxu0 0
        %2293 = vmatpush1.bf16.xpose.msra.mxu0 0
        %2294 = vmatprep.subr.bf16.mxu0 0
        %2295 = vmatpush1.bf16.xpose.msra.mxu0 0
        %2296 = vmatprep.subr.bf16.mxu0 0
        %2297 = vmatpush1.bf16.xpose.msra.mxu0 0
        %2298 = vmatprep.subr.bf16.mxu0 0
        %2299 = vmatpush1.bf16.xpose.msra.mxu0 0
        %2300 = vmatprep.subr.bf16.mxu0 0
        %2301 = vmatpush1.bf16.xpose.msra.mxu0 0
        %2302 = vmatprep.subr.bf16.mxu0 0
        %2303 = vmatpush1.bf16.xpose.msra.mxu0 0
        %2304 = vmatprep.subr.bf16.mxu0 0
        %2305 = vmatpush1.bf16.xpose.msra.mxu0 0
        %2306 = vmatprep.subr.bf16.mxu0 0
        %2307 = vmatpush1.bf16.xpose.msra.mxu0 0
        %2308 = vmatprep.subr.bf16.mxu0 0
        %2309 = vmatpush1.bf16.xpose.msra.mxu0 0
        %2310 = vmatprep.subr.bf16.mxu0 0
        %2311 = vmatpush1.bf16.xpose.msra.mxu0 0
        %2312 = vmatprep.mubr.bf16.mxu0 0
        %2313 = vmatmul.mubr.bf16.gmra.mrb[0].mxu0 %v2275
        %v2314 = vpop.f32.mrb[0].mxu0
        %v2315 = vadd.f32 %v647, %v2314
        %v2316 = vpop.f32.mrb[0].mxu0
        %v2317 = vpop.f32.mrb[0].mxu0
        %v2318 = vpop.f32.mrb[0].mxu0
        %2319 = vdwg.mxu0
        %v2320 = vsel %vm787, %v2266, -inf
        %2321 = vmax.xlane.f32.xlu0 %v2320
        %v2322 = vpop.xlane.xlu0 %2321
        %v2323 = vsel %vm787, %v2315, -inf
        %2324 = vmax.xlane.f32.xlu0 %v2323
        %v2325 = vpop.xlane.xlu0 %2324
        %v2326 = vsub.f32 %v2266, %v2322
        %v2327 = vsub.f32 %v2315, %v2325
        %v2328 = vmul.f32 %v2326, 1.442695
        %v2329 = vpow.pop %v2328
        %v2330 = vmul.f32 %v2327, 1.442695
        %v2331 = vpow.pop %v2330
        %v2332 = vsel %vm787, %v2329, 0.0
        %2333 = vadd.xlane.f32.xlu0 %v2332
        %v2334 = vpop.xlane.xlu0 %2333
        %v2335 = vsel %vm787, %v2331, 0.0
        %2336 = vadd.xlane.f32.xlu0 %v2335
        %v2337 = vpop.xlane.xlu0 %2336
        %v2338 = vrcp.pop %v2334
        %v2339 = vmul.f32 %v2329, %v2338
        %v2340 = vrcp.pop %v2337
        %v2341 = vmul.f32 %v2331, %v2340
        %v2342 = vpack.c.bf16 %v2339, %v2339
        %v2343 = vpack.c.bf16 %v2341, %v2341
        %2344 = vrot.lane.b32.xlu0 %v2220, 64
        %v2345 = vpop.permute.xlu0 %2344
        %v2347 = vsel %vm787, %v2342, 0
        %v2350 = vsel %vm912, %v2345, 0
        %2352 = vmatprep.subr.bf16.mxu0 0
        %2353 = vmatpush1.bf16.msra.mxu0 %v2350
        %2354 = vmatprep.subr.bf16.mxu0 0
        %2355 = vmatpush1.bf16.msra.mxu0 0
        %2356 = vmatprep.subr.bf16.mxu0 0
        %2357 = vmatpush1.bf16.msra.mxu0 0
        %2358 = vmatprep.subr.bf16.mxu0 0
        %2359 = vmatpush1.bf16.msra.mxu0 0
        %2360 = vmatprep.subr.bf16.mxu0 0
        %2361 = vmatpush1.bf16.msra.mxu0 0
        %2362 = vmatprep.subr.bf16.mxu0 0
        %2363 = vmatpush1.bf16.msra.mxu0 0
        %2364 = vmatprep.subr.bf16.mxu0 0
        %2365 = vmatpush1.bf16.msra.mxu0 0
        %2366 = vmatprep.subr.bf16.mxu0 0
        %2367 = vmatpush1.bf16.msra.mxu0 0
        %2368 = vmatprep.subr.bf16.mxu0 0
        %2369 = vmatpush1.bf16.msra.mxu0 0
        %2370 = vmatprep.subr.bf16.mxu0 0
        %2371 = vmatpush1.bf16.msra.mxu0 0
        %2372 = vmatprep.subr.bf16.mxu0 0
        %2373 = vmatpush1.bf16.msra.mxu0 0
        %2374 = vmatprep.subr.bf16.mxu0 0
        %2375 = vmatpush1.bf16.msra.mxu0 0
        %2376 = vmatprep.subr.bf16.mxu0 0
        %2377 = vmatpush1.bf16.msra.mxu0 0
        %2378 = vmatprep.subr.bf16.mxu0 0
        %2379 = vmatpush1.bf16.msra.mxu0 0
        %2380 = vmatprep.subr.bf16.mxu0 0
        %2381 = vmatpush1.bf16.msra.mxu0 0
        %2382 = vmatprep.subr.bf16.mxu0 0
        %2383 = vmatpush1.bf16.msra.mxu0 0
        %2384 = vmatprep.mubr.bf16.mxu0 0
        %2385 = vmatmul.mubr.bf16.gmra.mrb[0].mxu0 %v2347
        %v2386 = vpop.f32.mrb[0].mxu0
        %v2387 = vadd.f32 0.0, %v2386
        %v2388 = vpop.f32.mrb[0].mxu0
        %v2389 = vpop.f32.mrb[0].mxu0
        %v2390 = vpop.f32.mrb[0].mxu0
        %2391 = vdwg.mxu0
        %2392 = vrot.lane.b32.xlu0 %v2221, 64
        %v2393 = vpop.permute.xlu0 %2392
        %v2395 = vsel %vm787, %v2343, 0
        %v2398 = vsel %vm912, %v2393, 0
        %2400 = vmatprep.subr.bf16.mxu0 0
        %2401 = vmatpush1.bf16.msra.mxu0 %v2398
        %2402 = vmatprep.subr.bf16.mxu0 0
        %2403 = vmatpush1.bf16.msra.mxu0 0
        %2404 = vmatprep.subr.bf16.mxu0 0
        %2405 = vmatpush1.bf16.msra.mxu0 0
        %2406 = vmatprep.subr.bf16.mxu0 0
        %2407 = vmatpush1.bf16.msra.mxu0 0
        %2408 = vmatprep.subr.bf16.mxu0 0
        %2409 = vmatpush1.bf16.msra.mxu0 0
        %2410 = vmatprep.subr.bf16.mxu0 0
        %2411 = vmatpush1.bf16.msra.mxu0 0
        %2412 = vmatprep.subr.bf16.mxu0 0
        %2413 = vmatpush1.bf16.msra.mxu0 0
        %2414 = vmatprep.subr.bf16.mxu0 0
        %2415 = vmatpush1.bf16.msra.mxu0 0
        %2416 = vmatprep.subr.bf16.mxu0 0
        %2417 = vmatpush1.bf16.msra.mxu0 0
        %2418 = vmatprep.subr.bf16.mxu0 0
        %2419 = vmatpush1.bf16.msra.mxu0 0
        %2420 = vmatprep.subr.bf16.mxu0 0
        %2421 = vmatpush1.bf16.msra.mxu0 0
        %2422 = vmatprep.subr.bf16.mxu0 0
        %2423 = vmatpush1.bf16.msra.mxu0 0
        %2424 = vmatprep.subr.bf16.mxu0 0
        %2425 = vmatpush1.bf16.msra.mxu0 0
        %2426 = vmatprep.subr.bf16.mxu0 0
        %2427 = vmatpush1.bf16.msra.mxu0 0
        %2428 = vmatprep.subr.bf16.mxu0 0
        %2429 = vmatpush1.bf16.msra.mxu0 0
        %2430 = vmatprep.subr.bf16.mxu0 0
        %2431 = vmatpush1.bf16.msra.mxu0 0
        %2432 = vmatprep.mubr.bf16.mxu0 0
        %2433 = vmatmul.mubr.bf16.gmra.mrb[0].mxu0 %v2395
        %v2434 = vpop.f32.mrb[0].mxu0
        %v2435 = vadd.f32 0.0, %v2434
        %v2436 = vpop.f32.mrb[0].mxu0
        %v2437 = vpop.f32.mrb[0].mxu0
        %v2438 = vpop.f32.mrb[0].mxu0
        %2439 = vdwg.mxu0
        %v2440 = vpack.c.bf16 %v2435, %v2387
        %2441 = vrot.lane.b32.xlu0 %v2220, 120
        %v2442 = vpop.permute.xlu0 %2441
        %2443 = vrot.lane.b32.xlu0 %v2220, 88
        %v2444 = vpop.permute.xlu0 %2443
        %v2446 = vsel %vm787, %v2442, 0
        %v2449 = vsel %vm787, %v2444, 0
        %2451 = vmatprep.subr.bf16.mxu0 0
        %2452 = vmatpush1.bf16.xpose.msra.mxu0 %v2449
        %2453 = vmatprep.subr.bf16.mxu0 0
        %2454 = vmatpush1.bf16.xpose.msra.mxu0 0
        %2455 = vmatprep.subr.bf16.mxu0 0
        %2456 = vmatpush1.bf16.xpose.msra.mxu0 0
        %2457 = vmatprep.subr.bf16.mxu0 0
        %2458 = vmatpush1.bf16.xpose.msra.mxu0 0
        %2459 = vmatprep.subr.bf16.mxu0 0
        %2460 = vmatpush1.bf16.xpose.msra.mxu0 0
        %2461 = vmatprep.subr.bf16.mxu0 0
        %2462 = vmatpush1.bf16.xpose.msra.mxu0 0
        %2463 = vmatprep.subr.bf16.mxu0 0
        %2464 = vmatpush1.bf16.xpose.msra.mxu0 0
        %2465 = vmatprep.subr.bf16.mxu0 0
        %2466 = vmatpush1.bf16.xpose.msra.mxu0 0
        %2467 = vmatprep.subr.bf16.mxu0 0
        %2468 = vmatpush1.bf16.xpose.msra.mxu0 0
        %2469 = vmatprep.subr.bf16.mxu0 0
        %2470 = vmatpush1.bf16.xpose.msra.mxu0 0
        %2471 = vmatprep.subr.bf16.mxu0 0
        %2472 = vmatpush1.bf16.xpose.msra.mxu0 0
        %2473 = vmatprep.subr.bf16.mxu0 0
        %2474 = vmatpush1.bf16.xpose.msra.mxu0 0
        %2475 = vmatprep.subr.bf16.mxu0 0
        %2476 = vmatpush1.bf16.xpose.msra.mxu0 0
        %2477 = vmatprep.subr.bf16.mxu0 0
        %2478 = vmatpush1.bf16.xpose.msra.mxu0 0
        %2479 = vmatprep.subr.bf16.mxu0 0
        %2480 = vmatpush1.bf16.xpose.msra.mxu0 0
        %2481 = vmatprep.subr.bf16.mxu0 0
        %2482 = vmatpush1.bf16.xpose.msra.mxu0 0
        %2483 = vmatprep.mubr.bf16.mxu0 0
        %2484 = vmatmul.mubr.bf16.gmra.mrb[0].mxu0 %v2446
        %v2485 = vpop.f32.mrb[0].mxu0
        %v2486 = vadd.f32 %v647, %v2485
        %v2487 = vpop.f32.mrb[0].mxu0
        %v2488 = vpop.f32.mrb[0].mxu0
        %v2489 = vpop.f32.mrb[0].mxu0
        %2490 = vdwg.mxu0
        %2491 = vrot.lane.b32.xlu0 %v2221, 120
        %v2492 = vpop.permute.xlu0 %2491
        %2493 = vrot.lane.b32.xlu0 %v2221, 88
        %v2494 = vpop.permute.xlu0 %2493
        %v2496 = vsel %vm787, %v2492, 0
        %v2499 = vsel %vm787, %v2494, 0
        %2501 = vmatprep.subr.bf16.mxu0 0
        %2502 = vmatpush1.bf16.xpose.msra.mxu0 %v2499
        %2503 = vmatprep.subr.bf16.mxu0 0
        %2504 = vmatpush1.bf16.xpose.msra.mxu0 0
        %2505 = vmatprep.subr.bf16.mxu0 0
        %2506 = vmatpush1.bf16.xpose.msra.mxu0 0
        %2507 = vmatprep.subr.bf16.mxu0 0
        %2508 = vmatpush1.bf16.xpose.msra.mxu0 0
        %2509 = vmatprep.subr.bf16.mxu0 0
        %2510 = vmatpush1.bf16.xpose.msra.mxu0 0
        %2511 = vmatprep.subr.bf16.mxu0 0
        %2512 = vmatpush1.bf16.xpose.msra.mxu0 0
        %2513 = vmatprep.subr.bf16.mxu0 0
        %2514 = vmatpush1.bf16.xpose.msra.mxu0 0
        %2515 = vmatprep.subr.bf16.mxu0 0
        %2516 = vmatpush1.bf16.xpose.msra.mxu0 0
        %2517 = vmatprep.subr.bf16.mxu0 0
        %2518 = vmatpush1.bf16.xpose.msra.mxu0 0
        %2519 = vmatprep.subr.bf16.mxu0 0
        %2520 = vmatpush1.bf16.xpose.msra.mxu0 0
        %2521 = vmatprep.subr.bf16.mxu0 0
        %2522 = vmatpush1.bf16.xpose.msra.mxu0 0
        %2523 = vmatprep.subr.bf16.mxu0 0
        %2524 = vmatpush1.bf16.xpose.msra.mxu0 0
        %2525 = vmatprep.subr.bf16.mxu0 0
        %2526 = vmatpush1.bf16.xpose.msra.mxu0 0
        %2527 = vmatprep.subr.bf16.mxu0 0
        %2528 = vmatpush1.bf16.xpose.msra.mxu0 0
        %2529 = vmatprep.subr.bf16.mxu0 0
        %2530 = vmatpush1.bf16.xpose.msra.mxu0 0
        %2531 = vmatprep.subr.bf16.mxu0 0
        %2532 = vmatpush1.bf16.xpose.msra.mxu0 0
        %2533 = vmatprep.mubr.bf16.mxu0 0
        %2534 = vmatmul.mubr.bf16.gmra.mrb[0].mxu0 %v2496
        %v2535 = vpop.f32.mrb[0].mxu0
        %v2536 = vadd.f32 %v647, %v2535
        %v2537 = vpop.f32.mrb[0].mxu0
        %v2538 = vpop.f32.mrb[0].mxu0
        %v2539 = vpop.f32.mrb[0].mxu0
        %2540 = vdwg.mxu0
        %v2541 = vsel %vm787, %v2486, -inf
        %2542 = vmax.xlane.f32.xlu0 %v2541
        %v2543 = vpop.xlane.xlu0 %2542
        %v2544 = vsel %vm787, %v2536, -inf
        %2545 = vmax.xlane.f32.xlu0 %v2544
        %v2546 = vpop.xlane.xlu0 %2545
        %v2547 = vsub.f32 %v2486, %v2543
        %v2548 = vsub.f32 %v2536, %v2546
        %v2549 = vmul.f32 %v2547, 1.442695
        %v2550 = vpow.pop %v2549
        %v2551 = vmul.f32 %v2548, 1.442695
        %v2552 = vpow.pop %v2551
        %v2553 = vsel %vm787, %v2550, 0.0
        %2554 = vadd.xlane.f32.xlu0 %v2553
        %v2555 = vpop.xlane.xlu0 %2554
        %v2556 = vsel %vm787, %v2552, 0.0
        %2557 = vadd.xlane.f32.xlu0 %v2556
        %v2558 = vpop.xlane.xlu0 %2557
        %v2559 = vrcp.pop %v2555
        %v2560 = vmul.f32 %v2550, %v2559
        %v2561 = vrcp.pop %v2558
        %v2562 = vmul.f32 %v2552, %v2561
        %v2563 = vpack.c.bf16 %v2560, %v2560
        %v2564 = vpack.c.bf16 %v2562, %v2562
        %2565 = vrot.lane.b32.xlu0 %v2220, 56
        %v2566 = vpop.permute.xlu0 %2565
        %v2568 = vsel %vm787, %v2563, 0
        %v2571 = vsel %vm912, %v2566, 0
        %2573 = vmatprep.subr.bf16.mxu0 0
        %2574 = vmatpush1.bf16.msra.mxu0 %v2571
        %2575 = vmatprep.subr.bf16.mxu0 0
        %2576 = vmatpush1.bf16.msra.mxu0 0
        %2577 = vmatprep.subr.bf16.mxu0 0
        %2578 = vmatpush1.bf16.msra.mxu0 0
        %2579 = vmatprep.subr.bf16.mxu0 0
        %2580 = vmatpush1.bf16.msra.mxu0 0
        %2581 = vmatprep.subr.bf16.mxu0 0
        %2582 = vmatpush1.bf16.msra.mxu0 0
        %2583 = vmatprep.subr.bf16.mxu0 0
        %2584 = vmatpush1.bf16.msra.mxu0 0
        %2585 = vmatprep.subr.bf16.mxu0 0
        %2586 = vmatpush1.bf16.msra.mxu0 0
        %2587 = vmatprep.subr.bf16.mxu0 0
        %2588 = vmatpush1.bf16.msra.mxu0 0
        %2589 = vmatprep.subr.bf16.mxu0 0
        %2590 = vmatpush1.bf16.msra.mxu0 0
        %2591 = vmatprep.subr.bf16.mxu0 0
        %2592 = vmatpush1.bf16.msra.mxu0 0
        %2593 = vmatprep.subr.bf16.mxu0 0
        %2594 = vmatpush1.bf16.msra.mxu0 0
        %2595 = vmatprep.subr.bf16.mxu0 0
        %2596 = vmatpush1.bf16.msra.mxu0 0
        %2597 = vmatprep.subr.bf16.mxu0 0
        %2598 = vmatpush1.bf16.msra.mxu0 0
        %2599 = vmatprep.subr.bf16.mxu0 0
        %2600 = vmatpush1.bf16.msra.mxu0 0
        %2601 = vmatprep.subr.bf16.mxu0 0
        %2602 = vmatpush1.bf16.msra.mxu0 0
        %2603 = vmatprep.subr.bf16.mxu0 0
        %2604 = vmatpush1.bf16.msra.mxu0 0
        %2605 = vmatprep.mubr.bf16.mxu0 0
        %2606 = vmatmul.mubr.bf16.gmra.mrb[0].mxu0 %v2568
        %v2607 = vpop.f32.mrb[0].mxu0
        %v2608 = vadd.f32 0.0, %v2607
        %v2609 = vpop.f32.mrb[0].mxu0
        %v2610 = vpop.f32.mrb[0].mxu0
        %v2611 = vpop.f32.mrb[0].mxu0
        %2612 = vdwg.mxu0
        %2613 = vrot.lane.b32.xlu0 %v2221, 56
        %v2614 = vpop.permute.xlu0 %2613
        %v2616 = vsel %vm787, %v2564, 0
        %v2619 = vsel %vm912, %v2614, 0
        %2621 = vmatprep.subr.bf16.mxu0 0
        %2622 = vmatpush1.bf16.msra.mxu0 %v2619
        %2623 = vmatprep.subr.bf16.mxu0 0
        %2624 = vmatpush1.bf16.msra.mxu0 0
        %2625 = vmatprep.subr.bf16.mxu0 0
        %2626 = vmatpush1.bf16.msra.mxu0 0
        %2627 = vmatprep.subr.bf16.mxu0 0
        %2628 = vmatpush1.bf16.msra.mxu0 0
        %2629 = vmatprep.subr.bf16.mxu0 0
        %2630 = vmatpush1.bf16.msra.mxu0 0
        %2631 = vmatprep.subr.bf16.mxu0 0
        %2632 = vmatpush1.bf16.msra.mxu0 0
        %2633 = vmatprep.subr.bf16.mxu0 0
        %2634 = vmatpush1.bf16.msra.mxu0 0
        %2635 = vmatprep.subr.bf16.mxu0 0
        %2636 = vmatpush1.bf16.msra.mxu0 0
        %2637 = vmatprep.subr.bf16.mxu0 0
        %2638 = vmatpush1.bf16.msra.mxu0 0
        %2639 = vmatprep.subr.bf16.mxu0 0
        %2640 = vmatpush1.bf16.msra.mxu0 0
        %2641 = vmatprep.subr.bf16.mxu0 0
        %2642 = vmatpush1.bf16.msra.mxu0 0
        %2643 = vmatprep.subr.bf16.mxu0 0
        %2644 = vmatpush1.bf16.msra.mxu0 0
        %2645 = vmatprep.subr.bf16.mxu0 0
        %2646 = vmatpush1.bf16.msra.mxu0 0
        %2647 = vmatprep.subr.bf16.mxu0 0
        %2648 = vmatpush1.bf16.msra.mxu0 0
        %2649 = vmatprep.subr.bf16.mxu0 0
        %2650 = vmatpush1.bf16.msra.mxu0 0
        %2651 = vmatprep.subr.bf16.mxu0 0
        %2652 = vmatpush1.bf16.msra.mxu0 0
        %2653 = vmatprep.mubr.bf16.mxu0 0
        %2654 = vmatmul.mubr.bf16.gmra.mrb[0].mxu0 %v2616
        %v2655 = vpop.f32.mrb[0].mxu0
        %v2656 = vadd.f32 0.0, %v2655
        %v2657 = vpop.f32.mrb[0].mxu0
        %v2658 = vpop.f32.mrb[0].mxu0
        %v2659 = vpop.f32.mrb[0].mxu0
        %2660 = vdwg.mxu0
        %v2661 = vpack.c.bf16 %v2656, %v2608
        %v2663 = vsel %vm787, %v2661, 0
        %v2666 = vsel %vm912, %v2092, 0
        %2668 = vmatprep.subr.bf16.mxu0 0
        %2669 = vmatpush1.bf16.msra.mxu0 %v2666
        %2670 = vmatprep.subr.bf16.mxu0 0
        %2671 = vmatpush1.bf16.msra.mxu0 0
        %2672 = vmatprep.subr.bf16.mxu0 0
        %2673 = vmatpush1.bf16.msra.mxu0 0
        %2674 = vmatprep.subr.bf16.mxu0 0
        %2675 = vmatpush1.bf16.msra.mxu0 0
        %2676 = vmatprep.subr.bf16.mxu0 0
        %2677 = vmatpush1.bf16.msra.mxu0 0
        %2678 = vmatprep.subr.bf16.mxu0 0
        %2679 = vmatpush1.bf16.msra.mxu0 0
        %2680 = vmatprep.subr.bf16.mxu0 0
        %2681 = vmatpush1.bf16.msra.mxu0 0
        %2682 = vmatprep.subr.bf16.mxu0 0
        %2683 = vmatpush1.bf16.msra.mxu0 0
        %2684 = vmatprep.subr.bf16.mxu0 0
        %2685 = vmatpush1.bf16.msra.mxu0 0
        %2686 = vmatprep.subr.bf16.mxu0 0
        %2687 = vmatpush1.bf16.msra.mxu0 0
        %2688 = vmatprep.subr.bf16.mxu0 0
        %2689 = vmatpush1.bf16.msra.mxu0 0
        %2690 = vmatprep.subr.bf16.mxu0 0
        %2691 = vmatpush1.bf16.msra.mxu0 0
        %2692 = vmatprep.subr.bf16.mxu0 0
        %2693 = vmatpush1.bf16.msra.mxu0 0
        %2694 = vmatprep.subr.bf16.mxu0 0
        %2695 = vmatpush1.bf16.msra.mxu0 0
        %2696 = vmatprep.subr.bf16.mxu0 0
        %2697 = vmatpush1.bf16.msra.mxu0 0
        %2698 = vmatprep.subr.bf16.mxu0 0
        %2699 = vmatpush1.bf16.msra.mxu0 0
        %2700 = vmatprep.mubr.bf16.mxu0 0
        %2701 = vmatmul.mubr.bf16.gmra.mrb[0].mxu0 %v2663
        %v2702 = vpop.f32.mrb[0].mxu0
        %v2703 = vadd.f32 0.0, %v2702
        %v2704 = vpop.f32.mrb[0].mxu0
        %v2705 = vpop.f32.mrb[0].mxu0
        %v2706 = vadd.f32 0.0, %v2705
        %v2707 = vpop.f32.mrb[0].mxu0
        %2708 = vdwg.mxu0
        %v2710 = vsel %vm787, %v2440, 0
        %v2713 = vsel %vm912, %v2091, 0
        %2715 = vmatprep.subr.bf16.mxu0 0
        %2716 = vmatpush1.bf16.msra.mxu0 %v2713
        %2717 = vmatprep.subr.bf16.mxu0 0
        %2718 = vmatpush1.bf16.msra.mxu0 0
        %2719 = vmatprep.subr.bf16.mxu0 0
        %2720 = vmatpush1.bf16.msra.mxu0 0
        %2721 = vmatprep.subr.bf16.mxu0 0
        %2722 = vmatpush1.bf16.msra.mxu0 0
        %2723 = vmatprep.subr.bf16.mxu0 0
        %2724 = vmatpush1.bf16.msra.mxu0 0
        %2725 = vmatprep.subr.bf16.mxu0 0
        %2726 = vmatpush1.bf16.msra.mxu0 0
        %2727 = vmatprep.subr.bf16.mxu0 0
        %2728 = vmatpush1.bf16.msra.mxu0 0
        %2729 = vmatprep.subr.bf16.mxu0 0
        %2730 = vmatpush1.bf16.msra.mxu0 0
        %2731 = vmatprep.subr.bf16.mxu0 0
        %2732 = vmatpush1.bf16.msra.mxu0 0
        %2733 = vmatprep.subr.bf16.mxu0 0
        %2734 = vmatpush1.bf16.msra.mxu0 0
        %2735 = vmatprep.subr.bf16.mxu0 0
        %2736 = vmatpush1.bf16.msra.mxu0 0
        %2737 = vmatprep.subr.bf16.mxu0 0
        %2738 = vmatpush1.bf16.msra.mxu0 0
        %2739 = vmatprep.subr.bf16.mxu0 0
        %2740 = vmatpush1.bf16.msra.mxu0 0
        %2741 = vmatprep.subr.bf16.mxu0 0
        %2742 = vmatpush1.bf16.msra.mxu0 0
        %2743 = vmatprep.subr.bf16.mxu0 0
        %2744 = vmatpush1.bf16.msra.mxu0 0
        %2745 = vmatprep.subr.bf16.mxu0 0
        %2746 = vmatpush1.bf16.msra.mxu0 0
        %2747 = vmatprep.mubr.bf16.mxu0 0
        %2748 = vmatmul.mubr.bf16.gmra.mrb[0].mxu0 %v2710
        %v2749 = vpop.f32.mrb[0].mxu0
        %v2750 = vadd.f32 %v2703, %v2749
        %v2751 = vpop.f32.mrb[0].mxu0
        %v2752 = vpop.f32.mrb[0].mxu0
        %v2753 = vadd.f32 %v2706, %v2752
        %v2754 = vpop.f32.mrb[0].mxu0
        %2755 = vdwg.mxu0
        %2756 = vrot.lane.b32.xlu0 %v2220, 112
        %v2757 = vpop.permute.xlu0 %2756
        %2758 = vrot.lane.b32.xlu0 %v2220, 80
        %v2759 = vpop.permute.xlu0 %2758
        %v2761 = vsel %vm787, %v2757, 0
        %v2764 = vsel %vm787, %v2759, 0
        %2766 = vmatprep.subr.bf16.mxu0 0
        %2767 = vmatpush1.bf16.xpose.msra.mxu0 %v2764
        %2768 = vmatprep.subr.bf16.mxu0 0
        %2769 = vmatpush1.bf16.xpose.msra.mxu0 0
        %2770 = vmatprep.subr.bf16.mxu0 0
        %2771 = vmatpush1.bf16.xpose.msra.mxu0 0
        %2772 = vmatprep.subr.bf16.mxu0 0
        %2773 = vmatpush1.bf16.xpose.msra.mxu0 0
        %2774 = vmatprep.subr.bf16.mxu0 0
        %2775 = vmatpush1.bf16.xpose.msra.mxu0 0
        %2776 = vmatprep.subr.bf16.mxu0 0
        %2777 = vmatpush1.bf16.xpose.msra.mxu0 0
        %2778 = vmatprep.subr.bf16.mxu0 0
        %2779 = vmatpush1.bf16.xpose.msra.mxu0 0
        %2780 = vmatprep.subr.bf16.mxu0 0
        %2781 = vmatpush1.bf16.xpose.msra.mxu0 0
        %2782 = vmatprep.subr.bf16.mxu0 0
        %2783 = vmatpush1.bf16.xpose.msra.mxu0 0
        %2784 = vmatprep.subr.bf16.mxu0 0
        %2785 = vmatpush1.bf16.xpose.msra.mxu0 0
        %2786 = vmatprep.subr.bf16.mxu0 0
        %2787 = vmatpush1.bf16.xpose.msra.mxu0 0
        %2788 = vmatprep.subr.bf16.mxu0 0
        %2789 = vmatpush1.bf16.xpose.msra.mxu0 0
        %2790 = vmatprep.subr.bf16.mxu0 0
        %2791 = vmatpush1.bf16.xpose.msra.mxu0 0
        %2792 = vmatprep.subr.bf16.mxu0 0
        %2793 = vmatpush1.bf16.xpose.msra.mxu0 0
        %2794 = vmatprep.subr.bf16.mxu0 0
        %2795 = vmatpush1.bf16.xpose.msra.mxu0 0
        %2796 = vmatprep.subr.bf16.mxu0 0
        %2797 = vmatpush1.bf16.xpose.msra.mxu0 0
        %2798 = vmatprep.mubr.bf16.mxu0 0
        %2799 = vmatmul.mubr.bf16.gmra.mrb[0].mxu0 %v2761
        %v2800 = vpop.f32.mrb[0].mxu0
        %v2801 = vadd.f32 %v647, %v2800
        %v2802 = vpop.f32.mrb[0].mxu0
        %v2803 = vpop.f32.mrb[0].mxu0
        %v2804 = vpop.f32.mrb[0].mxu0
        %2805 = vdwg.mxu0
        %2806 = vrot.lane.b32.xlu0 %v2221, 112
        %v2807 = vpop.permute.xlu0 %2806
        %2808 = vrot.lane.b32.xlu0 %v2221, 80
        %v2809 = vpop.permute.xlu0 %2808
        %v2811 = vsel %vm787, %v2807, 0
        %v2814 = vsel %vm787, %v2809, 0
        %2816 = vmatprep.subr.bf16.mxu0 0
        %2817 = vmatpush1.bf16.xpose.msra.mxu0 %v2814
        %2818 = vmatprep.subr.bf16.mxu0 0
        %2819 = vmatpush1.bf16.xpose.msra.mxu0 0
        %2820 = vmatprep.subr.bf16.mxu0 0
        %2821 = vmatpush1.bf16.xpose.msra.mxu0 0
        %2822 = vmatprep.subr.bf16.mxu0 0
        %2823 = vmatpush1.bf16.xpose.msra.mxu0 0
        %2824 = vmatprep.subr.bf16.mxu0 0
        %2825 = vmatpush1.bf16.xpose.msra.mxu0 0
        %2826 = vmatprep.subr.bf16.mxu0 0
        %2827 = vmatpush1.bf16.xpose.msra.mxu0 0
        %2828 = vmatprep.subr.bf16.mxu0 0
        %2829 = vmatpush1.bf16.xpose.msra.mxu0 0
        %2830 = vmatprep.subr.bf16.mxu0 0
        %2831 = vmatpush1.bf16.xpose.msra.mxu0 0
        %2832 = vmatprep.subr.bf16.mxu0 0
        %2833 = vmatpush1.bf16.xpose.msra.mxu0 0
        %2834 = vmatprep.subr.bf16.mxu0 0
        %2835 = vmatpush1.bf16.xpose.msra.mxu0 0
        %2836 = vmatprep.subr.bf16.mxu0 0
        %2837 = vmatpush1.bf16.xpose.msra.mxu0 0
        %2838 = vmatprep.subr.bf16.mxu0 0
        %2839 = vmatpush1.bf16.xpose.msra.mxu0 0
        %2840 = vmatprep.subr.bf16.mxu0 0
        %2841 = vmatpush1.bf16.xpose.msra.mxu0 0
        %2842 = vmatprep.subr.bf16.mxu0 0
        %2843 = vmatpush1.bf16.xpose.msra.mxu0 0
        %2844 = vmatprep.subr.bf16.mxu0 0
        %2845 = vmatpush1.bf16.xpose.msra.mxu0 0
        %2846 = vmatprep.subr.bf16.mxu0 0
        %2847 = vmatpush1.bf16.xpose.msra.mxu0 0
        %2848 = vmatprep.mubr.bf16.mxu0 0
        %2849 = vmatmul.mubr.bf16.gmra.mrb[0].mxu0 %v2811
        %v2850 = vpop.f32.mrb[0].mxu0
        %v2851 = vadd.f32 %v647, %v2850
        %v2852 = vpop.f32.mrb[0].mxu0
        %v2853 = vpop.f32.mrb[0].mxu0
        %v2854 = vpop.f32.mrb[0].mxu0
        %2855 = vdwg.mxu0
        %v2856 = vsel %vm787, %v2801, -inf
        %2857 = vmax.xlane.f32.xlu0 %v2856
        %v2858 = vpop.xlane.xlu0 %2857
        %v2859 = vsel %vm787, %v2851, -inf
        %2860 = vmax.xlane.f32.xlu0 %v2859
        %v2861 = vpop.xlane.xlu0 %2860
        %v2862 = vsub.f32 %v2801, %v2858
        %v2863 = vsub.f32 %v2851, %v2861
        %v2864 = vmul.f32 %v2862, 1.442695
        %v2865 = vpow.pop %v2864
        %v2866 = vmul.f32 %v2863, 1.442695
        %v2867 = vpow.pop %v2866
        %v2868 = vsel %vm787, %v2865, 0.0
        %2869 = vadd.xlane.f32.xlu0 %v2868
        %v2870 = vpop.xlane.xlu0 %2869
        %v2871 = vsel %vm787, %v2867, 0.0
        %2872 = vadd.xlane.f32.xlu0 %v2871
        %v2873 = vpop.xlane.xlu0 %2872
        %v2874 = vrcp.pop %v2870
        %v2875 = vmul.f32 %v2865, %v2874
        %v2876 = vrcp.pop %v2873
        %v2877 = vmul.f32 %v2867, %v2876
        %v2878 = vpack.c.bf16 %v2875, %v2875
        %v2879 = vpack.c.bf16 %v2877, %v2877
        %2880 = vrot.lane.b32.xlu0 %v2220, 48
        %v2881 = vpop.permute.xlu0 %2880
        %v2883 = vsel %vm787, %v2878, 0
        %v2886 = vsel %vm912, %v2881, 0
        %2888 = vmatprep.subr.bf16.mxu0 0
        %2889 = vmatpush1.bf16.msra.mxu0 %v2886
        %2890 = vmatprep.subr.bf16.mxu0 0
        %2891 = vmatpush1.bf16.msra.mxu0 0
        %2892 = vmatprep.subr.bf16.mxu0 0
        %2893 = vmatpush1.bf16.msra.mxu0 0
        %2894 = vmatprep.subr.bf16.mxu0 0
        %2895 = vmatpush1.bf16.msra.mxu0 0
        %2896 = vmatprep.subr.bf16.mxu0 0
        %2897 = vmatpush1.bf16.msra.mxu0 0
        %2898 = vmatprep.subr.bf16.mxu0 0
        %2899 = vmatpush1.bf16.msra.mxu0 0
        %2900 = vmatprep.subr.bf16.mxu0 0
        %2901 = vmatpush1.bf16.msra.mxu0 0
        %2902 = vmatprep.subr.bf16.mxu0 0
        %2903 = vmatpush1.bf16.msra.mxu0 0
        %2904 = vmatprep.subr.bf16.mxu0 0
        %2905 = vmatpush1.bf16.msra.mxu0 0
        %2906 = vmatprep.subr.bf16.mxu0 0
        %2907 = vmatpush1.bf16.msra.mxu0 0
        %2908 = vmatprep.subr.bf16.mxu0 0
        %2909 = vmatpush1.bf16.msra.mxu0 0
        %2910 = vmatprep.subr.bf16.mxu0 0
        %2911 = vmatpush1.bf16.msra.mxu0 0
        %2912 = vmatprep.subr.bf16.mxu0 0
        %2913 = vmatpush1.bf16.msra.mxu0 0
        %2914 = vmatprep.subr.bf16.mxu0 0
        %2915 = vmatpush1.bf16.msra.mxu0 0
        %2916 = vmatprep.subr.bf16.mxu0 0
        %2917 = vmatpush1.bf16.msra.mxu0 0
        %2918 = vmatprep.subr.bf16.mxu0 0
        %2919 = vmatpush1.bf16.msra.mxu0 0
        %2920 = vmatprep.mubr.bf16.mxu0 0
        %2921 = vmatmul.mubr.bf16.gmra.mrb[0].mxu0 %v2883
        %v2922 = vpop.f32.mrb[0].mxu0
        %v2923 = vadd.f32 0.0, %v2922
        %v2924 = vpop.f32.mrb[0].mxu0
        %v2925 = vpop.f32.mrb[0].mxu0
        %v2926 = vpop.f32.mrb[0].mxu0
        %2927 = vdwg.mxu0
        %2928 = vrot.lane.b32.xlu0 %v2221, 48
        %v2929 = vpop.permute.xlu0 %2928
        %v2931 = vsel %vm787, %v2879, 0
        %v2934 = vsel %vm912, %v2929, 0
        %2936 = vmatprep.subr.bf16.mxu0 0
        %2937 = vmatpush1.bf16.msra.mxu0 %v2934
        %2938 = vmatprep.subr.bf16.mxu0 0
        %2939 = vmatpush1.bf16.msra.mxu0 0
        %2940 = vmatprep.subr.bf16.mxu0 0
        %2941 = vmatpush1.bf16.msra.mxu0 0
        %2942 = vmatprep.subr.bf16.mxu0 0
        %2943 = vmatpush1.bf16.msra.mxu0 0
        %2944 = vmatprep.subr.bf16.mxu0 0
        %2945 = vmatpush1.bf16.msra.mxu0 0
        %2946 = vmatprep.subr.bf16.mxu0 0
        %2947 = vmatpush1.bf16.msra.mxu0 0
        %2948 = vmatprep.subr.bf16.mxu0 0
        %2949 = vmatpush1.bf16.msra.mxu0 0
        %2950 = vmatprep.subr.bf16.mxu0 0
        %2951 = vmatpush1.bf16.msra.mxu0 0
        %2952 = vmatprep.subr.bf16.mxu0 0
        %2953 = vmatpush1.bf16.msra.mxu0 0
        %2954 = vmatprep.subr.bf16.mxu0 0
        %2955 = vmatpush1.bf16.msra.mxu0 0
        %2956 = vmatprep.subr.bf16.mxu0 0
        %2957 = vmatpush1.bf16.msra.mxu0 0
        %2958 = vmatprep.subr.bf16.mxu0 0
        %2959 = vmatpush1.bf16.msra.mxu0 0
        %2960 = vmatprep.subr.bf16.mxu0 0
        %2961 = vmatpush1.bf16.msra.mxu0 0
        %2962 = vmatprep.subr.bf16.mxu0 0
        %2963 = vmatpush1.bf16.msra.mxu0 0
        %2964 = vmatprep.subr.bf16.mxu0 0
        %2965 = vmatpush1.bf16.msra.mxu0 0
        %2966 = vmatprep.subr.bf16.mxu0 0
        %2967 = vmatpush1.bf16.msra.mxu0 0
        %2968 = vmatprep.mubr.bf16.mxu0 0
        %2969 = vmatmul.mubr.bf16.gmra.mrb[0].mxu0 %v2931
        %v2970 = vpop.f32.mrb[0].mxu0
        %v2971 = vadd.f32 0.0, %v2970
        %v2972 = vpop.f32.mrb[0].mxu0
        %v2973 = vpop.f32.mrb[0].mxu0
        %v2974 = vpop.f32.mrb[0].mxu0
        %2975 = vdwg.mxu0
        %v2976 = vpack.c.bf16 %v2971, %v2923
        %v2978 = vsel %vm787, %v2976, 0
        %v2981 = vsel %vm912, %v2093, 0
        %2983 = vmatprep.subr.bf16.mxu0 0
        %2984 = vmatpush1.bf16.msra.mxu0 %v2981
        %2985 = vmatprep.subr.bf16.mxu0 0
        %2986 = vmatpush1.bf16.msra.mxu0 0
        %2987 = vmatprep.subr.bf16.mxu0 0
        %2988 = vmatpush1.bf16.msra.mxu0 0
        %2989 = vmatprep.subr.bf16.mxu0 0
        %2990 = vmatpush1.bf16.msra.mxu0 0
        %2991 = vmatprep.subr.bf16.mxu0 0
        %2992 = vmatpush1.bf16.msra.mxu0 0
        %2993 = vmatprep.subr.bf16.mxu0 0
        %2994 = vmatpush1.bf16.msra.mxu0 0
        %2995 = vmatprep.subr.bf16.mxu0 0
        %2996 = vmatpush1.bf16.msra.mxu0 0
        %2997 = vmatprep.subr.bf16.mxu0 0
        %2998 = vmatpush1.bf16.msra.mxu0 0
        %2999 = vmatprep.subr.bf16.mxu0 0
        %3000 = vmatpush1.bf16.msra.mxu0 0
        %3001 = vmatprep.subr.bf16.mxu0 0
        %3002 = vmatpush1.bf16.msra.mxu0 0
        %3003 = vmatprep.subr.bf16.mxu0 0
        %3004 = vmatpush1.bf16.msra.mxu0 0
        %3005 = vmatprep.subr.bf16.mxu0 0
        %3006 = vmatpush1.bf16.msra.mxu0 0
        %3007 = vmatprep.subr.bf16.mxu0 0
        %3008 = vmatpush1.bf16.msra.mxu0 0
        %3009 = vmatprep.subr.bf16.mxu0 0
        %3010 = vmatpush1.bf16.msra.mxu0 0
        %3011 = vmatprep.subr.bf16.mxu0 0
        %3012 = vmatpush1.bf16.msra.mxu0 0
        %3013 = vmatprep.subr.bf16.mxu0 0
        %3014 = vmatpush1.bf16.msra.mxu0 0
        %3015 = vmatprep.mubr.bf16.mxu0 0
        %3016 = vmatmul.mubr.bf16.gmra.mrb[0].mxu0 %v2978
        %v3017 = vpop.f32.mrb[0].mxu0
        %v3018 = vadd.f32 0.0, %v3017
        %v3019 = vpop.f32.mrb[0].mxu0
        %v3020 = vpop.f32.mrb[0].mxu0
        %v3021 = vadd.f32 0.0, %v3020
        %v3022 = vpop.f32.mrb[0].mxu0
        %3023 = vdwg.mxu0
        %v3024 = vadd.f32 %v2750, %v3018
        %v3025 = vadd.f32 %v2753, %v3021
        %3026 = vrot.lane.b32.xlu0 %v2220, 104
        %v3027 = vpop.permute.xlu0 %3026
        %3028 = vrot.lane.b32.xlu0 %v2220, 72
        %v3029 = vpop.permute.xlu0 %3028
        %v3031 = vsel %vm787, %v3027, 0
        %v3034 = vsel %vm787, %v3029, 0
        %3036 = vmatprep.subr.bf16.mxu0 0
        %3037 = vmatpush1.bf16.xpose.msra.mxu0 %v3034
        %3038 = vmatprep.subr.bf16.mxu0 0
        %3039 = vmatpush1.bf16.xpose.msra.mxu0 0
        %3040 = vmatprep.subr.bf16.mxu0 0
        %3041 = vmatpush1.bf16.xpose.msra.mxu0 0
        %3042 = vmatprep.subr.bf16.mxu0 0
        %3043 = vmatpush1.bf16.xpose.msra.mxu0 0
        %3044 = vmatprep.subr.bf16.mxu0 0
        %3045 = vmatpush1.bf16.xpose.msra.mxu0 0
        %3046 = vmatprep.subr.bf16.mxu0 0
        %3047 = vmatpush1.bf16.xpose.msra.mxu0 0
        %3048 = vmatprep.subr.bf16.mxu0 0
        %3049 = vmatpush1.bf16.xpose.msra.mxu0 0
        %3050 = vmatprep.subr.bf16.mxu0 0
        %3051 = vmatpush1.bf16.xpose.msra.mxu0 0
        %3052 = vmatprep.subr.bf16.mxu0 0
        %3053 = vmatpush1.bf16.xpose.msra.mxu0 0
        %3054 = vmatprep.subr.bf16.mxu0 0
        %3055 = vmatpush1.bf16.xpose.msra.mxu0 0
        %3056 = vmatprep.subr.bf16.mxu0 0
        %3057 = vmatpush1.bf16.xpose.msra.mxu0 0
        %3058 = vmatprep.subr.bf16.mxu0 0
        %3059 = vmatpush1.bf16.xpose.msra.mxu0 0
        %3060 = vmatprep.subr.bf16.mxu0 0
        %3061 = vmatpush1.bf16.xpose.msra.mxu0 0
        %3062 = vmatprep.subr.bf16.mxu0 0
        %3063 = vmatpush1.bf16.xpose.msra.mxu0 0
        %3064 = vmatprep.subr.bf16.mxu0 0
        %3065 = vmatpush1.bf16.xpose.msra.mxu0 0
        %3066 = vmatprep.subr.bf16.mxu0 0
        %3067 = vmatpush1.bf16.xpose.msra.mxu0 0
        %3068 = vmatprep.mubr.bf16.mxu0 0
        %3069 = vmatmul.mubr.bf16.gmra.mrb[0].mxu0 %v3031
        %v3070 = vpop.f32.mrb[0].mxu0
        %v3071 = vadd.f32 %v647, %v3070
        %v3072 = vpop.f32.mrb[0].mxu0
        %v3073 = vpop.f32.mrb[0].mxu0
        %v3074 = vpop.f32.mrb[0].mxu0
        %3075 = vdwg.mxu0
        %3076 = vrot.lane.b32.xlu0 %v2221, 104
        %v3077 = vpop.permute.xlu0 %3076
        %3078 = vrot.lane.b32.xlu0 %v2221, 72
        %v3079 = vpop.permute.xlu0 %3078
        %v3081 = vsel %vm787, %v3077, 0
        %v3084 = vsel %vm787, %v3079, 0
        %3086 = vmatprep.subr.bf16.mxu0 0
        %3087 = vmatpush1.bf16.xpose.msra.mxu0 %v3084
        %3088 = vmatprep.subr.bf16.mxu0 0
        %3089 = vmatpush1.bf16.xpose.msra.mxu0 0
        %3090 = vmatprep.subr.bf16.mxu0 0
        %3091 = vmatpush1.bf16.xpose.msra.mxu0 0
        %3092 = vmatprep.subr.bf16.mxu0 0
        %3093 = vmatpush1.bf16.xpose.msra.mxu0 0
        %3094 = vmatprep.subr.bf16.mxu0 0
        %3095 = vmatpush1.bf16.xpose.msra.mxu0 0
        %3096 = vmatprep.subr.bf16.mxu0 0
        %3097 = vmatpush1.bf16.xpose.msra.mxu0 0
        %3098 = vmatprep.subr.bf16.mxu0 0
        %3099 = vmatpush1.bf16.xpose.msra.mxu0 0
        %3100 = vmatprep.subr.bf16.mxu0 0
        %3101 = vmatpush1.bf16.xpose.msra.mxu0 0
        %3102 = vmatprep.subr.bf16.mxu0 0
        %3103 = vmatpush1.bf16.xpose.msra.mxu0 0
        %3104 = vmatprep.subr.bf16.mxu0 0
        %3105 = vmatpush1.bf16.xpose.msra.mxu0 0
        %3106 = vmatprep.subr.bf16.mxu0 0
        %3107 = vmatpush1.bf16.xpose.msra.mxu0 0
        %3108 = vmatprep.subr.bf16.mxu0 0
        %3109 = vmatpush1.bf16.xpose.msra.mxu0 0
        %3110 = vmatprep.subr.bf16.mxu0 0
        %3111 = vmatpush1.bf16.xpose.msra.mxu0 0
        %3112 = vmatprep.subr.bf16.mxu0 0
        %3113 = vmatpush1.bf16.xpose.msra.mxu0 0
        %3114 = vmatprep.subr.bf16.mxu0 0
        %3115 = vmatpush1.bf16.xpose.msra.mxu0 0
        %3116 = vmatprep.subr.bf16.mxu0 0
        %3117 = vmatpush1.bf16.xpose.msra.mxu0 0
        %3118 = vmatprep.mubr.bf16.mxu0 0
        %3119 = vmatmul.mubr.bf16.gmra.mrb[0].mxu0 %v3081
        %v3120 = vpop.f32.mrb[0].mxu0
        %v3121 = vadd.f32 %v647, %v3120
        %v3122 = vpop.f32.mrb[0].mxu0
        %v3123 = vpop.f32.mrb[0].mxu0
        %v3124 = vpop.f32.mrb[0].mxu0
        %3125 = vdwg.mxu0
        %v3126 = vsel %vm787, %v3071, -inf
        %3127 = vmax.xlane.f32.xlu0 %v3126
        %v3128 = vpop.xlane.xlu0 %3127
        %v3129 = vsel %vm787, %v3121, -inf
        %3130 = vmax.xlane.f32.xlu0 %v3129
        %v3131 = vpop.xlane.xlu0 %3130
        %v3132 = vsub.f32 %v3071, %v3128
        %v3133 = vsub.f32 %v3121, %v3131
        %v3134 = vmul.f32 %v3132, 1.442695
        %v3135 = vpow.pop %v3134
        %v3136 = vmul.f32 %v3133, 1.442695
        %v3137 = vpow.pop %v3136
        %v3138 = vsel %vm787, %v3135, 0.0
        %3139 = vadd.xlane.f32.xlu0 %v3138
        %v3140 = vpop.xlane.xlu0 %3139
        %v3141 = vsel %vm787, %v3137, 0.0
        %3142 = vadd.xlane.f32.xlu0 %v3141
        %v3143 = vpop.xlane.xlu0 %3142
        %v3144 = vrcp.pop %v3140
        %v3145 = vmul.f32 %v3135, %v3144
        %v3146 = vrcp.pop %v3143
        %v3147 = vmul.f32 %v3137, %v3146
        %v3148 = vpack.c.bf16 %v3145, %v3145
        %v3149 = vpack.c.bf16 %v3147, %v3147
        %3150 = vrot.lane.b32.xlu0 %v2220, 40
        %v3151 = vpop.permute.xlu0 %3150
        %v3153 = vsel %vm787, %v3148, 0
        %v3156 = vsel %vm912, %v3151, 0
        %3158 = vmatprep.subr.bf16.mxu0 0
        %3159 = vmatpush1.bf16.msra.mxu0 %v3156
        %3160 = vmatprep.subr.bf16.mxu0 0
        %3161 = vmatpush1.bf16.msra.mxu0 0
        %3162 = vmatprep.subr.bf16.mxu0 0
        %3163 = vmatpush1.bf16.msra.mxu0 0
        %3164 = vmatprep.subr.bf16.mxu0 0
        %3165 = vmatpush1.bf16.msra.mxu0 0
        %3166 = vmatprep.subr.bf16.mxu0 0
        %3167 = vmatpush1.bf16.msra.mxu0 0
        %3168 = vmatprep.subr.bf16.mxu0 0
        %3169 = vmatpush1.bf16.msra.mxu0 0
        %3170 = vmatprep.subr.bf16.mxu0 0
        %3171 = vmatpush1.bf16.msra.mxu0 0
        %3172 = vmatprep.subr.bf16.mxu0 0
        %3173 = vmatpush1.bf16.msra.mxu0 0
        %3174 = vmatprep.subr.bf16.mxu0 0
        %3175 = vmatpush1.bf16.msra.mxu0 0
        %3176 = vmatprep.subr.bf16.mxu0 0
        %3177 = vmatpush1.bf16.msra.mxu0 0
        %3178 = vmatprep.subr.bf16.mxu0 0
        %3179 = vmatpush1.bf16.msra.mxu0 0
        %3180 = vmatprep.subr.bf16.mxu0 0
        %3181 = vmatpush1.bf16.msra.mxu0 0
        %3182 = vmatprep.subr.bf16.mxu0 0
        %3183 = vmatpush1.bf16.msra.mxu0 0
        %3184 = vmatprep.subr.bf16.mxu0 0
        %3185 = vmatpush1.bf16.msra.mxu0 0
        %3186 = vmatprep.subr.bf16.mxu0 0
        %3187 = vmatpush1.bf16.msra.mxu0 0
        %3188 = vmatprep.subr.bf16.mxu0 0
        %3189 = vmatpush1.bf16.msra.mxu0 0
        %3190 = vmatprep.mubr.bf16.mxu0 0
        %3191 = vmatmul.mubr.bf16.gmra.mrb[0].mxu0 %v3153
        %v3192 = vpop.f32.mrb[0].mxu0
        %v3193 = vadd.f32 0.0, %v3192
        %v3194 = vpop.f32.mrb[0].mxu0
        %v3195 = vpop.f32.mrb[0].mxu0
        %v3196 = vpop.f32.mrb[0].mxu0
        %3197 = vdwg.mxu0
        %3198 = vrot.lane.b32.xlu0 %v2221, 40
        %v3199 = vpop.permute.xlu0 %3198
        %v3201 = vsel %vm787, %v3149, 0
        %v3204 = vsel %vm912, %v3199, 0
        %3206 = vmatprep.subr.bf16.mxu0 0
        %3207 = vmatpush1.bf16.msra.mxu0 %v3204
        %3208 = vmatprep.subr.bf16.mxu0 0
        %3209 = vmatpush1.bf16.msra.mxu0 0
        %3210 = vmatprep.subr.bf16.mxu0 0
        %3211 = vmatpush1.bf16.msra.mxu0 0
        %3212 = vmatprep.subr.bf16.mxu0 0
        %3213 = vmatpush1.bf16.msra.mxu0 0
        %3214 = vmatprep.subr.bf16.mxu0 0
        %3215 = vmatpush1.bf16.msra.mxu0 0
        %3216 = vmatprep.subr.bf16.mxu0 0
        %3217 = vmatpush1.bf16.msra.mxu0 0
        %3218 = vmatprep.subr.bf16.mxu0 0
        %3219 = vmatpush1.bf16.msra.mxu0 0
        %3220 = vmatprep.subr.bf16.mxu0 0
        %3221 = vmatpush1.bf16.msra.mxu0 0
        %3222 = vmatprep.subr.bf16.mxu0 0
        %3223 = vmatpush1.bf16.msra.mxu0 0
        %3224 = vmatprep.subr.bf16.mxu0 0
        %3225 = vmatpush1.bf16.msra.mxu0 0
        %3226 = vmatprep.subr.bf16.mxu0 0
        %3227 = vmatpush1.bf16.msra.mxu0 0
        %3228 = vmatprep.subr.bf16.mxu0 0
        %3229 = vmatpush1.bf16.msra.mxu0 0
        %3230 = vmatprep.subr.bf16.mxu0 0
        %3231 = vmatpush1.bf16.msra.mxu0 0
        %3232 = vmatprep.subr.bf16.mxu0 0
        %3233 = vmatpush1.bf16.msra.mxu0 0
        %3234 = vmatprep.subr.bf16.mxu0 0
        %3235 = vmatpush1.bf16.msra.mxu0 0
        %3236 = vmatprep.subr.bf16.mxu0 0
        %3237 = vmatpush1.bf16.msra.mxu0 0
        %3238 = vmatprep.mubr.bf16.mxu0 0
        %3239 = vmatmul.mubr.bf16.gmra.mrb[0].mxu0 %v3201
        %v3240 = vpop.f32.mrb[0].mxu0
        %v3241 = vadd.f32 0.0, %v3240
        %v3242 = vpop.f32.mrb[0].mxu0
        %v3243 = vpop.f32.mrb[0].mxu0
        %v3244 = vpop.f32.mrb[0].mxu0
        %3245 = vdwg.mxu0
        %v3246 = vpack.c.bf16 %v3241, %v3193
        %v3248 = vsel %vm787, %v3246, 0
        %v3251 = vsel %vm912, %v2094, 0
        %3253 = vmatprep.subr.bf16.mxu0 0
        %3254 = vmatpush1.bf16.msra.mxu0 %v3251
        %3255 = vmatprep.subr.bf16.mxu0 0
        %3256 = vmatpush1.bf16.msra.mxu0 0
        %3257 = vmatprep.subr.bf16.mxu0 0
        %3258 = vmatpush1.bf16.msra.mxu0 0
        %3259 = vmatprep.subr.bf16.mxu0 0
        %3260 = vmatpush1.bf16.msra.mxu0 0
        %3261 = vmatprep.subr.bf16.mxu0 0
        %3262 = vmatpush1.bf16.msra.mxu0 0
        %3263 = vmatprep.subr.bf16.mxu0 0
        %3264 = vmatpush1.bf16.msra.mxu0 0
        %3265 = vmatprep.subr.bf16.mxu0 0
        %3266 = vmatpush1.bf16.msra.mxu0 0
        %3267 = vmatprep.subr.bf16.mxu0 0
        %3268 = vmatpush1.bf16.msra.mxu0 0
        %3269 = vmatprep.subr.bf16.mxu0 0
        %3270 = vmatpush1.bf16.msra.mxu0 0
        %3271 = vmatprep.subr.bf16.mxu0 0
        %3272 = vmatpush1.bf16.msra.mxu0 0
        %3273 = vmatprep.subr.bf16.mxu0 0
        %3274 = vmatpush1.bf16.msra.mxu0 0
        %3275 = vmatprep.subr.bf16.mxu0 0
        %3276 = vmatpush1.bf16.msra.mxu0 0
        %3277 = vmatprep.subr.bf16.mxu0 0
        %3278 = vmatpush1.bf16.msra.mxu0 0
        %3279 = vmatprep.subr.bf16.mxu0 0
        %3280 = vmatpush1.bf16.msra.mxu0 0
        %3281 = vmatprep.subr.bf16.mxu0 0
        %3282 = vmatpush1.bf16.msra.mxu0 0
        %3283 = vmatprep.subr.bf16.mxu0 0
        %3284 = vmatpush1.bf16.msra.mxu0 0
        %3285 = vmatprep.mubr.bf16.mxu0 0
        %3286 = vmatmul.mubr.bf16.gmra.mrb[0].mxu0 %v3248
        %v3287 = vpop.f32.mrb[0].mxu0
        %v3288 = vadd.f32 0.0, %v3287
        %v3289 = vpop.f32.mrb[0].mxu0
        %v3290 = vpop.f32.mrb[0].mxu0
        %v3291 = vadd.f32 0.0, %v3290
        %v3292 = vpop.f32.mrb[0].mxu0
        %3293 = vdwg.mxu0
        %v3294 = vadd.f32 %v3024, %v3288
        %v3295 = vadd.f32 %v3025, %v3291
        %v3296 = vlaneseq
        %v3297 = vshrl.u32 %v3296, 7
        %v3298 = vsub.s32 2, %v3297
        %v3299 = vrot.slane %v2082, %v3298
        %v3300 = vadd.f32 %v3294, %v3299
        %v3301 = vadd.f32 %v3295, %v3299
        %v3302 = vadd.f32 %v2079, %v3300
        %v3303 = vadd.f32 %v2080, %v3301
        %v3304 = vsel %vm679, %v3302, 0.0
        %3305 = vadd.xlane.f32.xlu0 %v3304
        %v3306 = vpop.xlane.xlu0 %3305
        %v3307 = vsel %vm679, %v3303, 0.0
        %3308 = vadd.xlane.f32.xlu0 %v3307
        %v3309 = vpop.xlane.xlu0 %3308
        %v3310 = vmul.f32 %v3306, %v686
        %v3311 = vmul.f32 %v3309, %v686
        %v3312 = vsub.f32 %v3302, %v3310
        %v3313 = vsub.f32 %v3303, %v3311
        %v3314 = vmul.f32 %v3312, %v3312
        %v3315 = vmul.f32 %v3313, %v3313
        %v3316 = vsel %vm679, %v3314, 0.0
        %3317 = vadd.xlane.f32.xlu0 %v3316
        %v3318 = vpop.xlane.xlu0 %3317
        %v3319 = vsel %vm679, %v3315, 0.0
        %3320 = vadd.xlane.f32.xlu0 %v3319
        %v3321 = vpop.xlane.xlu0 %3320
        %v3322 = vmul.f32 %v3318, %v686
        %v3323 = vmul.f32 %v3321, %v686
        %v3324 = vadd.f32 %v3322, 1e-05
        %v3325 = vadd.f32 %v3323, 1e-05
        %v3326 = vrsqrt.pop %v3324
        %v3327 = vrsqrt.pop %v3325
        %v3328 = vmul.f32 %v3312, %v3326
        %v3329 = vmul.f32 %v3313, %v3327
        %v3330 = vlaneseq
        %v3331 = vshrl.u32 %v3330, 7
        %v3332 = vsub.s32 3, %v3331
        %v3333 = vrot.slane %v2082, %v3332
        %v3334 = vmul.f32 %v3328, %v3333
        %v3335 = vmul.f32 %v3329, %v3333
        %v3336 = vlaneseq
        %v3337 = vshrl.u32 %v3336, 7
        %v3338 = vsub.s32 4, %v3337
        %v3339 = vrot.slane %v2082, %v3338
        %v3340 = vadd.f32 %v3334, %v3339
        %v3341 = vadd.f32 %v3335, %v3339
        %v3342 = vpack.c.bf16 %v3341, %v3340
        %v3344 = vlaneseq
        %v3345 = vshrl.u32 %v3344, 7
        %v3346 = vsub.s32 0, %v3345
        %v3347 = vrot.slane %v2101, %v3346
        %v3353 = vunpack.c.l.b16 %v2096
        %v3354 = vunpack.c.l.b16 %v2097
        %v3355 = vunpack.c.l.b16 %v2098
        %v3356 = vunpack.c.l.b16 %v2099
        %v3357 = vpack.c.b16 %v3354, %v3353
        %v3358 = vpack.c.b16 %v3356, %v3355
        %v3362 = vsel %vm679, %v3342, 0
        %3364 = vmatprep.subr.bf16.mxu0 0
        %3365 = vmatpush1.bf16.msra.mxu0 %v3357
        %3366 = vmatprep.subr.bf16.mxu0 0
        %3367 = vmatpush1.bf16.msra.mxu0 %v3358
        %3368 = vmatprep.subr.bf16.mxu0 0
        %3369 = vmatpush1.bf16.msra.mxu0 0
        %3370 = vmatprep.subr.bf16.mxu0 0
        %3371 = vmatpush1.bf16.msra.mxu0 0
        %3372 = vmatprep.subr.bf16.mxu0 0
        %3373 = vmatpush1.bf16.msra.mxu0 0
        %3374 = vmatprep.subr.bf16.mxu0 0
        %3375 = vmatpush1.bf16.msra.mxu0 0
        %3376 = vmatprep.subr.bf16.mxu0 0
        %3377 = vmatpush1.bf16.msra.mxu0 0
        %3378 = vmatprep.subr.bf16.mxu0 0
        %3379 = vmatpush1.bf16.msra.mxu0 0
        %3380 = vmatprep.subr.bf16.mxu0 0
        %3381 = vmatpush1.bf16.msra.mxu0 0
        %3382 = vmatprep.subr.bf16.mxu0 0
        %3383 = vmatpush1.bf16.msra.mxu0 0
        %3384 = vmatprep.subr.bf16.mxu0 0
        %3385 = vmatpush1.bf16.msra.mxu0 0
        %3386 = vmatprep.subr.bf16.mxu0 0
        %3387 = vmatpush1.bf16.msra.mxu0 0
        %3388 = vmatprep.subr.bf16.mxu0 0
        %3389 = vmatpush1.bf16.msra.mxu0 0
        %3390 = vmatprep.subr.bf16.mxu0 0
        %3391 = vmatpush1.bf16.msra.mxu0 0
        %3392 = vmatprep.subr.bf16.mxu0 0
        %3393 = vmatpush1.bf16.msra.mxu0 0
        %3394 = vmatprep.subr.bf16.mxu0 0
        %3395 = vmatpush1.bf16.msra.mxu0 0
        %3396 = vmatprep.mubr.bf16.mxu0 0
        %3397 = vmatmul.mubr.bf16.gmra.mrb[0].mxu0 %v3362
        %v3398 = vpop.f32.mrb[0].mxu0
        %v3399 = vadd.f32 %v3347, %v3398
        %v3400 = vpop.f32.mrb[0].mxu0
        %v3401 = vpop.f32.mrb[0].mxu0
        %v3402 = vadd.f32 %v3347, %v3401
        %v3403 = vpop.f32.mrb[0].mxu0
        %3404 = vdwg.mxu0
        %v3405 = vmul.f32 %v3399, 1.702
        %v3406 = vmul.f32 %v3402, 1.702
        %v3407 = vxor.u32 %v3405, 2147483648
        %v3408 = vxor.u32 %v3406, 2147483648
        %v3409 = vmul.f32 %v3407, 1.442695
        %v3410 = vpow.pop %v3409
        %v3411 = vmul.f32 %v3408, 1.442695
        %v3412 = vpow.pop %v3411
        %v3413 = vadd.f32 %v3410, 1.0
        %v3414 = vadd.f32 %v3412, 1.0
        %v3415 = vrcp.pop %v3413
        %v3416 = vmul.f32 1.0, %v3415
        %v3417 = vrcp.pop %v3414
        %v3418 = vmul.f32 1.0, %v3417
        %v3419 = vmul.f32 %v3399, %v3416
        %v3420 = vmul.f32 %v3402, %v3418
        %v3421 = vpack.c.bf16 %v3420, %v3419
        %v3422 = vlaneseq
        %v3423 = vshrl.u32 %v3422, 7
        %v3424 = vsub.s32 5, %v3423
        %v3425 = vrot.slane %v2082, %v3424
        %v3442 = vunpack.c.l.b16 %v2103
        %v3443 = vunpack.c.l.b16 %v2104
        %v3444 = vunpack.c.l.b16 %v2105
        %v3445 = vunpack.c.l.b16 %v2106
        %v3446 = vunpack.c.l.b16 %v2107
        %v3447 = vunpack.c.l.b16 %v2108
        %v3448 = vunpack.c.l.b16 %v2109
        %v3449 = vunpack.c.l.b16 %v2110
        %v3450 = vunpack.c.l.b16 %v2111
        %v3451 = vunpack.c.l.b16 %v2112
        %v3452 = vunpack.c.l.b16 %v2113
        %v3453 = vunpack.c.l.b16 %v2114
        %v3454 = vunpack.c.l.b16 %v2115
        %v3455 = vunpack.c.l.b16 %v2116
        %v3456 = vunpack.c.l.b16 %v2117
        %v3457 = vunpack.c.l.b16 %v2118
        %v3458 = vpack.c.b16 %v3443, %v3442
        %v3459 = vpack.c.b16 %v3445, %v3444
        %v3460 = vpack.c.b16 %v3447, %v3446
        %v3461 = vpack.c.b16 %v3449, %v3448
        %v3462 = vpack.c.b16 %v3451, %v3450
        %v3463 = vpack.c.b16 %v3453, %v3452
        %v3464 = vpack.c.b16 %v3455, %v3454
        %v3465 = vpack.c.b16 %v3457, %v3456
        %3474 = vmatprep.subr.bf16.mxu0 0
        %3475 = vmatpush1.bf16.msra.mxu0 %v3458
        %3476 = vmatprep.subr.bf16.mxu0 0
        %3477 = vmatpush1.bf16.msra.mxu0 %v3459
        %3478 = vmatprep.subr.bf16.mxu0 0
        %3479 = vmatpush1.bf16.msra.mxu0 %v3460
        %3480 = vmatprep.subr.bf16.mxu0 0
        %3481 = vmatpush1.bf16.msra.mxu0 %v3461
        %3482 = vmatprep.subr.bf16.mxu0 0
        %3483 = vmatpush1.bf16.msra.mxu0 %v3462
        %3484 = vmatprep.subr.bf16.mxu0 0
        %3485 = vmatpush1.bf16.msra.mxu0 %v3463
        %3486 = vmatprep.subr.bf16.mxu0 0
        %3487 = vmatpush1.bf16.msra.mxu0 %v3464
        %3488 = vmatprep.subr.bf16.mxu0 0
        %3489 = vmatpush1.bf16.msra.mxu0 %v3465
        %3490 = vmatprep.subr.bf16.mxu0 0
        %3491 = vmatpush1.bf16.msra.mxu0 0
        %3492 = vmatprep.subr.bf16.mxu0 0
        %3493 = vmatpush1.bf16.msra.mxu0 0
        %3494 = vmatprep.subr.bf16.mxu0 0
        %3495 = vmatpush1.bf16.msra.mxu0 0
        %3496 = vmatprep.subr.bf16.mxu0 0
        %3497 = vmatpush1.bf16.msra.mxu0 0
        %3498 = vmatprep.subr.bf16.mxu0 0
        %3499 = vmatpush1.bf16.msra.mxu0 0
        %3500 = vmatprep.subr.bf16.mxu0 0
        %3501 = vmatpush1.bf16.msra.mxu0 0
        %3502 = vmatprep.subr.bf16.mxu0 0
        %3503 = vmatpush1.bf16.msra.mxu0 0
        %3504 = vmatprep.subr.bf16.mxu0 0
        %3505 = vmatpush1.bf16.msra.mxu0 0
        %3506 = vmatprep.mubr.bf16.mxu0 0
        %3507 = vmatmul.mubr.bf16.gmra.mrb[0].mxu0 %v3421
        %v3508 = vpop.f32.mrb[0].mxu0
        %v3509 = vadd.f32 %v3425, %v3508
        %v3510 = vpop.f32.mrb[0].mxu0
        %v3511 = vpop.f32.mrb[0].mxu0
        %v3512 = vadd.f32 %v3425, %v3511
        %v3513 = vpop.f32.mrb[0].mxu0
        %3514 = vdwg.mxu0
        %v3515 = vadd.f32 %v3302, %v3509
        %v3516 = vadd.f32 %v3303, %v3512
        %v3517 = vld [vmem:[%s9] sm:$0x3]
        %v3518 = vsel %vm679, %v3515, 0.0
        %3519 = vadd.xlane.f32.xlu0 %v3518
        %v3520 = vpop.xlane.xlu0 %3519
        %v3521 = vsel %vm679, %v3516, 0.0
        %3522 = vadd.xlane.f32.xlu0 %v3521
        %v3523 = vpop.xlane.xlu0 %3522
        %v3524 = vmul.f32 %v3520, %v686
        %v3525 = vmul.f32 %v3523, %v686
        %v3526 = vsub.f32 %v3515, %v3524
        %v3527 = vsub.f32 %v3516, %v3525
        %v3528 = vmul.f32 %v3526, %v3526
        %v3529 = vmul.f32 %v3527, %v3527
        %v3530 = vsel %vm679, %v3528, 0.0
        %3531 = vadd.xlane.f32.xlu0 %v3530
        %v3532 = vpop.xlane.xlu0 %3531
        %v3533 = vsel %vm679, %v3529, 0.0
        %3534 = vadd.xlane.f32.xlu0 %v3533
        %v3535 = vpop.xlane.xlu0 %3534
        %v3536 = vmul.f32 %v3532, %v686
        %v3537 = vmul.f32 %v3535, %v686
        %v3538 = vadd.f32 %v3536, 1e-05
        %v3539 = vadd.f32 %v3537, 1e-05
        %v3540 = vrsqrt.pop %v3538
        %v3541 = vrsqrt.pop %v3539
        %v3542 = vmul.f32 %v3526, %v3540
        %v3543 = vmul.f32 %v3527, %v3541
        %v3544 = vlaneseq
        %v3545 = vshrl.u32 %v3544, 7
        %v3546 = vsub.s32 0, %v3545
        %v3547 = vrot.slane %v3517, %v3546
        %v3548 = vmul.f32 %v3542, %v3547
        %v3549 = vmul.f32 %v3543, %v3547
        %v3550 = vlaneseq
        %v3551 = vshrl.u32 %v3550, 7
        %v3552 = vsub.s32 1, %v3551
        %v3553 = vrot.slane %v3517, %v3552
        %v3554 = vadd.f32 %v3548, %v3553
        %v3555 = vadd.f32 %v3549, %v3553
        %v3556 = vld [vmem:[%s0] sm:$0x3]
        %3557 = vset.pattern.permute.xlu0 0
        %3558 = vperm.xlu0 %3557, %v3556
        %v3559 = vpop.permute.xlu0 %3558
        %vm3560 = vcmp.eq.s32.totalorder %v645, %v3559
        %v3561 = vsel %vm3560, 1, 0
        %v3562 = vcvt.s32.f32 %v3561
        %v3563 = vlaneseq
        %v3564 = vshrl.u32 %v3563, 7
        %v3565 = vsub.s32 0, %v3564
        %v3566 = vrot.slane %v3562, %v3565
        %3568 = vbcast.lane.b32.xlu0 %v3566, 256
        %v3569 = vpop.permute.xlu0 %3568
        %v3570 = vlaneseq
        %v3571 = vshrl.u32 %v3570, 7
        %v3572 = vsub.s32 1, %v3571
        %v3573 = vrot.slane %v3562, %v3572
        %3575 = vbcast.lane.b32.xlu0 %v3573, 256
        %v3576 = vpop.permute.xlu0 %3575
        %v3577 = vmul.f32 %v3554, %v3569
        %v3578 = vmul.f32 %v3555, %v3576
        %v3579 = vsel %vm679, %v3577, 0.0
        %v3580 = vrot.slane %v3579, 4
        %v3581 = vadd.f32 %v3579, %v3580
        %v3582 = vrot.slane %v3581, 2
        %v3583 = vadd.f32 %v3581, %v3582
        %v3584 = vrot.slane %v3583, 1
        %v3585 = vadd.f32 %v3583, %v3584
        %v3586 = vsel %vm679, %v3578, 0.0
        %v3587 = vrot.slane %v3586, 4
        %v3588 = vadd.f32 %v3586, %v3587
        %v3589 = vrot.slane %v3588, 2
        %v3590 = vadd.f32 %v3588, %v3589
        %v3591 = vrot.slane %v3590, 1
        %v3592 = vadd.f32 %v3590, %v3591
        %v3593 = vpack.c.bf16 %v3585, %v3585
        %v3594 = vpack.c.bf16 %v3592, %v3592
        %v3595 = vld [vmem:[%s10] sm:$0xf]
        %v3596 = vld [vmem:[%s10 + $0x4] sm:$0xf]
        %v3597 = vld [vmem:[%s10 + $0x8] sm:$0xf]
        %v3598 = vld [vmem:[%s10 + $0xc] sm:$0xf]
        %v3601 = vunpack.c.l.b16 %v3593
        %v3602 = vunpack.c.l.b16 %v3594
        %vm3603 = vcmask 1041409
        %v3604 = vsel %vm3603, %v3602, %v3601
        %v3605 = vpack.c.b16 %v3604, %v3604
        %v3610 = vunpack.c.l.b16 %v3595
        %v3611 = vunpack.c.l.b16 %v3596
        %v3612 = vunpack.c.l.b16 %v3597
        %v3613 = vunpack.c.l.b16 %v3598
        %v3614 = vpack.c.b16 %v3611, %v3610
        %v3615 = vpack.c.b16 %v3613, %v3612
        %v3619 = vsel %vm679, %v3605, 0
        %3621 = vmatprep.subr.bf16.mxu0 0
        %3622 = vmatpush1.bf16.msra.mxu0 %v3614
        %3623 = vmatprep.subr.bf16.mxu0 0
        %3624 = vmatpush1.bf16.msra.mxu0 %v3615
        %3625 = vmatprep.subr.bf16.mxu0 0
        %3626 = vmatpush1.bf16.msra.mxu0 0
        %3627 = vmatprep.subr.bf16.mxu0 0
        %3628 = vmatpush1.bf16.msra.mxu0 0
        %3629 = vmatprep.subr.bf16.mxu0 0
        %3630 = vmatpush1.bf16.msra.mxu0 0
        %3631 = vmatprep.subr.bf16.mxu0 0
        %3632 = vmatpush1.bf16.msra.mxu0 0
        %3633 = vmatprep.subr.bf16.mxu0 0
        %3634 = vmatpush1.bf16.msra.mxu0 0
        %3635 = vmatprep.subr.bf16.mxu0 0
        %3636 = vmatpush1.bf16.msra.mxu0 0
        %3637 = vmatprep.subr.bf16.mxu0 0
        %3638 = vmatpush1.bf16.msra.mxu0 0
        %3639 = vmatprep.subr.bf16.mxu0 0
        %3640 = vmatpush1.bf16.msra.mxu0 0
        %3641 = vmatprep.subr.bf16.mxu0 0
        %3642 = vmatpush1.bf16.msra.mxu0 0
        %3643 = vmatprep.subr.bf16.mxu0 0
        %3644 = vmatpush1.bf16.msra.mxu0 0
        %3645 = vmatprep.subr.bf16.mxu0 0
        %3646 = vmatpush1.bf16.msra.mxu0 0
        %3647 = vmatprep.subr.bf16.mxu0 0
        %3648 = vmatpush1.bf16.msra.mxu0 0
        %3649 = vmatprep.subr.bf16.mxu0 0
        %3650 = vmatpush1.bf16.msra.mxu0 0
        %3651 = vmatprep.subr.bf16.mxu0 0
        %3652 = vmatpush1.bf16.msra.mxu0 0
        %3653 = vmatprep.mubr.bf16.mxu0 0
        %3654 = vmatmul.mubr.bf16.gmra.mrb[0].mxu0 %v3619
        %v3655 = vpop.f32.mrb[0].mxu0
        %v3656 = vadd.f32 0.0, %v3655
        %v3657 = vpop.f32.mrb[0].mxu0
        %v3658 = vpop.f32.mrb[0].mxu0
        %v3659 = vpop.f32.mrb[0].mxu0
        %3660 = vdwg.mxu0
        %vm3661 = vcmask 1041408
        %v3662 = vsel %vm3661, %v3656, 0.0
        %vm3663 = vcmask 259072
        %3664 = vst.msk [vmem:[%s634] sm:$0x3f] %vm3663, %v3662
      $region108: #{slip_forward.1} parent=103 // pred_fallthru
        _
      %p3665 = scmp.eq.s32.totalorder %s32, 1
      // Predicated region
      $region109: #{slip_forward.1} parent=103 // pred_check
        %p3666 = pneg %p3665
      $region110: #{slip_forward.1} parent=103 // pred_check_branch
        %3668 = sbr.rel (%p3666) target = $region112
      $region111: #{slip_forward.1} parent=103 // pred_region
        %v3669 = vld [vmem:[%s14] sm:$0xf]
        %v3670 = vld [vmem:[%s14 + $0x4] sm:$0xf]
        %v3671 = vld [vmem:[%s14 + $0x8] sm:$0xf]
        %v3672 = vld [vmem:[%s14 + $0xc] sm:$0xf]
        %v3673 = vld [vmem:[%s14 + $0x10] sm:$0xf]
        %v3674 = vld [vmem:[%s14 + $0x14] sm:$0xf]
        %v3675 = vld [vmem:[%s14 + $0x18] sm:$0xf]
        %v3676 = vld [vmem:[%s14 + $0x1c] sm:$0xf]
        %v3677 = vld [vmem:[%s14 + $0x20] sm:$0xf]
        %v3678 = vld [vmem:[%s14 + $0x24] sm:$0xf]
        %v3679 = vld [vmem:[%s14 + $0x28] sm:$0xf]
        %v3680 = vld [vmem:[%s14 + $0x2c] sm:$0xf]
        %v3681 = vld [vmem:[%s14 + $0x30] sm:$0xf]
        %v3682 = vld [vmem:[%s14 + $0x34] sm:$0xf]
        %v3683 = vld [vmem:[%s14 + $0x38] sm:$0xf]
        %v3684 = vld [vmem:[%s14 + $0x3c] sm:$0xf]
        %v3685 = vld [vmem:[%s14 + $0x40] sm:$0xf]
        %v3686 = vld [vmem:[%s14 + $0x44] sm:$0xf]
        %v3687 = vld [vmem:[%s14 + $0x48] sm:$0xf]
        %v3688 = vld [vmem:[%s14 + $0x4c] sm:$0xf]
        %v3689 = vld [vmem:[%s14 + $0x50] sm:$0xf]
        %v3690 = vld [vmem:[%s14 + $0x54] sm:$0xf]
        %v3691 = vld [vmem:[%s14 + $0x58] sm:$0xf]
        %v3692 = vld [vmem:[%s14 + $0x5c] sm:$0xf]
        %v3693 = vld [vmem:[%s14 + $0x60] sm:$0xf]
        %v3694 = vld [vmem:[%s14 + $0x64] sm:$0xf]
        %v3695 = vld [vmem:[%s14 + $0x68] sm:$0xf]
        %v3696 = vld [vmem:[%s14 + $0x6c] sm:$0xf]
        %v3697 = vld [vmem:[%s14 + $0x70] sm:$0xf]
        %v3698 = vld [vmem:[%s14 + $0x74] sm:$0xf]
        %v3699 = vld [vmem:[%s14 + $0x78] sm:$0xf]
        %v3700 = vld [vmem:[%s14 + $0x7c] sm:$0xf]
        %v3701 = vld [vmem:[%s14 + $0x80] sm:$0xf]
        %v3702 = vld [vmem:[%s14 + $0x84] sm:$0xf]
        %v3703 = vld [vmem:[%s14 + $0x88] sm:$0xf]
        %v3704 = vld [vmem:[%s14 + $0x8c] sm:$0xf]
        %v3705 = vld [vmem:[%s14 + $0x90] sm:$0xf]
        %v3706 = vld [vmem:[%s14 + $0x94] sm:$0xf]
        %v3707 = vld [vmem:[%s14 + $0x98] sm:$0xf]
        %v3708 = vld [vmem:[%s14 + $0x9c] sm:$0xf]
        %v3709 = vld [vmem:[%s14 + $0xa0] sm:$0xf]
        %v3710 = vld [vmem:[%s14 + $0xa4] sm:$0xf]
        %v3711 = vld [vmem:[%s14 + $0xa8] sm:$0xf]
        %v3712 = vld [vmem:[%s14 + $0xac] sm:$0xf]
        %v3713 = vld [vmem:[%s14 + $0xb0] sm:$0xf]
        %v3714 = vld [vmem:[%s14 + $0xb4] sm:$0xf]
        %v3715 = vld [vmem:[%s14 + $0xb8] sm:$0xf]
        %v3716 = vld [vmem:[%s14 + $0xbc] sm:$0xf]
        %v3717 = vld [vmem:[%s14 + $0xc0] sm:$0xf]
        %v3718 = vld [vmem:[%s14 + $0xc4] sm:$0xf]
        %v3719 = vld [vmem:[%s14 + $0xc8] sm:$0xf]
        %v3720 = vld [vmem:[%s14 + $0xcc] sm:$0xf]
        %v3721 = vld [vmem:[%s14 + $0xd0] sm:$0xf]
        %v3722 = vld [vmem:[%s14 + $0xd4] sm:$0xf]
        %v3723 = vld [vmem:[%s14 + $0xd8] sm:$0xf]
        %v3724 = vld [vmem:[%s14 + $0xdc] sm:$0xf]
        %v3725 = vld [vmem:[%s14 + $0xe0] sm:$0xf]
        %v3726 = vld [vmem:[%s14 + $0xe4] sm:$0xf]
        %v3727 = vld [vmem:[%s14 + $0xe8] sm:$0xf]
        %v3728 = vld [vmem:[%s14 + $0xec] sm:$0xf]
        %v3729 = vld [vmem:[%s14 + $0xf0] sm:$0xf]
        %v3730 = vld [vmem:[%s14 + $0xf4] sm:$0xf]
        %v3731 = vld [vmem:[%s14 + $0xf8] sm:$0xf]
        %v3732 = vld [vmem:[%s14 + $0xfc] sm:$0xf]
        %v3733 = vld [vmem:[%s14 + $0x100] sm:$0xf]
        %v3734 = vld [vmem:[%s14 + $0x104] sm:$0xf]
        %v3735 = vld [vmem:[%s14 + $0x108] sm:$0xf]
        %v3736 = vld [vmem:[%s14 + $0x10c] sm:$0xf]
        %v3737 = vld [vmem:[%s14 + $0x110] sm:$0xf]
        %v3738 = vld [vmem:[%s14 + $0x114] sm:$0xf]
        %v3739 = vld [vmem:[%s14 + $0x118] sm:$0xf]
        %v3740 = vld [vmem:[%s14 + $0x11c] sm:$0xf]
        %v3741 = vld [vmem:[%s14 + $0x120] sm:$0xf]
        %v3742 = vld [vmem:[%s14 + $0x124] sm:$0xf]
        %v3743 = vld [vmem:[%s14 + $0x128] sm:$0xf]
        %v3744 = vld [vmem:[%s14 + $0x12c] sm:$0xf]
        %v3745 = vld [vmem:[%s14 + $0x130] sm:$0xf]
        %v3746 = vld [vmem:[%s14 + $0x134] sm:$0xf]
        %v3747 = vld [vmem:[%s14 + $0x138] sm:$0xf]
        %v3748 = vld [vmem:[%s14 + $0x13c] sm:$0xf]
        %v3749 = vld [vmem:[%s14 + $0x140] sm:$0xf]
        %v3750 = vld [vmem:[%s14 + $0x144] sm:$0xf]
        %v3751 = vld [vmem:[%s14 + $0x148] sm:$0xf]
        %v3752 = vld [vmem:[%s14 + $0x14c] sm:$0xf]
        %v3753 = vld [vmem:[%s14 + $0x150] sm:$0xf]
        %v3754 = vld [vmem:[%s14 + $0x154] sm:$0xf]
        %v3755 = vld [vmem:[%s14 + $0x158] sm:$0xf]
        %v3756 = vld [vmem:[%s14 + $0x15c] sm:$0xf]
        %v3757 = vld [vmem:[%s14 + $0x160] sm:$0xf]
        %v3758 = vld [vmem:[%s14 + $0x164] sm:$0xf]
        %v3759 = vld [vmem:[%s14 + $0x168] sm:$0xf]
        %v3760 = vld [vmem:[%s14 + $0x16c] sm:$0xf]
        %v3761 = vld [vmem:[%s14 + $0x170] sm:$0xf]
        %v3762 = vld [vmem:[%s14 + $0x174] sm:$0xf]
        %v3763 = vld [vmem:[%s14 + $0x178] sm:$0xf]
        %v3764 = vld [vmem:[%s14 + $0x17c] sm:$0xf]
        %v3765 = vld [vmem:[%s20] sm:$0x3]
        %v3766 = vld [vmem:[%s19] sm:$0x3f]
        %v3767 = vld [vmem:[%s11] sm:$0xff]
        %v3768 = vld [vmem:[%s11 + $0x8] sm:$0xf]
        %v3771 = vcombine.high %v3767, %v3767
        %v3773 = vunpack.c.l.s4 1983009808
        %v3774 = vunpack.c.0.s8 %v3773
        %v3775 = vlaneseq
        %v3776 = vshrl.u32 %v3775, 7
        %v3777 = vsub.s32 %v3774, %v3776
        %v3778 = vrot.slane %v3767, %v3777
        %v3780 = vunpack.c.l.s4 1983009808
        %v3781 = vunpack.c.0.s8 %v3780
        %v3782 = vlaneseq
        %v3783 = vshrl.u32 %v3782, 7
        %v3784 = vsub.s32 %v3781, %v3783
        %v3785 = vrot.slane %v3771, %v3784
        %v3786 = vcombine.high %v3778, %v3778
        %v3787 = vcombine.high %v3785, %v3785
        %v3789 = vunpack.c.l.s4 1983009808
        %v3790 = vunpack.c.0.s8 %v3789
        %v3791 = vlaneseq
        %v3792 = vshrl.u32 %v3791, 7
        %v3793 = vsub.s32 %v3790, %v3792
        %v3794 = vrot.slane %v3768, %v3793
        %v3795 = vcombine.high %v3794, %v3794
        %v3802 = vpack.c.bf16 %v3778, %v3778
        %v3803 = vpack.c.bf16 %v3786, %v3786
        %v3804 = vpack.c.bf16 %v3785, %v3785
        %v3805 = vpack.c.bf16 %v3787, %v3787
        %v3806 = vpack.c.bf16 %v3794, %v3794
        %v3807 = vpack.c.bf16 %v3795, %v3795
        %v3808 = vld [vmem:[%s12] sm:$0xff]
        %v3809 = vld [vmem:[%s12 + $0x8] sm:$0xf]
        %v3812 = vcombine.high %v3808, %v3808
        %v3814 = vunpack.c.l.s4 1983009808
        %v3815 = vunpack.c.0.s8 %v3814
        %v3816 = vlaneseq
        %v3817 = vshrl.u32 %v3816, 7
        %v3818 = vsub.s32 %v3815, %v3817
        %v3819 = vrot.slane %v3808, %v3818
        %v3821 = vunpack.c.l.s4 1983009808
        %v3822 = vunpack.c.0.s8 %v3821
        %v3823 = vlaneseq
        %v3824 = vshrl.u32 %v3823, 7
        %v3825 = vsub.s32 %v3822, %v3824
        %v3826 = vrot.slane %v3812, %v3825
        %v3827 = vcombine.high %v3819, %v3819
        %v3828 = vcombine.high %v3826, %v3826
        %v3830 = vunpack.c.l.s4 1983009808
        %v3831 = vunpack.c.0.s8 %v3830
        %v3832 = vlaneseq
        %v3833 = vshrl.u32 %v3832, 7
        %v3834 = vsub.s32 %v3831, %v3833
        %v3835 = vrot.slane %v3809, %v3834
        %v3836 = vcombine.high %v3835, %v3835
        %v3843 = vpack.c.bf16 %v3819, %v3819
        %v3844 = vpack.c.bf16 %v3827, %v3827
        %v3845 = vpack.c.bf16 %v3826, %v3826
        %v3846 = vpack.c.bf16 %v3828, %v3828
        %v3847 = vpack.c.bf16 %v3835, %v3835
        %v3848 = vpack.c.bf16 %v3836, %v3836
        %v3849 = vld [vmem:[%s13] sm:$0xff]
        %v3850 = vld [vmem:[%s13 + $0x8] sm:$0xf]
        %v3853 = vcombine.high %v3849, %v3849
        %v3855 = vunpack.c.l.s4 1983009808
        %v3856 = vunpack.c.0.s8 %v3855
        %v3857 = vlaneseq
        %v3858 = vshrl.u32 %v3857, 7
        %v3859 = vsub.s32 %v3856, %v3858
        %v3860 = vrot.slane %v3849, %v3859
        %v3862 = vunpack.c.l.s4 1983009808
        %v3863 = vunpack.c.0.s8 %v3862
        %v3864 = vlaneseq
        %v3865 = vshrl.u32 %v3864, 7
        %v3866 = vsub.s32 %v3863, %v3865
        %v3867 = vrot.slane %v3853, %v3866
        %v3868 = vcombine.high %v3860, %v3860
        %v3869 = vcombine.high %v3867, %v3867
        %v3871 = vunpack.c.l.s4 1983009808
        %v3872 = vunpack.c.0.s8 %v3871
        %v3873 = vlaneseq
        %v3874 = vshrl.u32 %v3873, 7
        %v3875 = vsub.s32 %v3872, %v3874
        %v3876 = vrot.slane %v3850, %v3875
        %v3877 = vcombine.high %v3876, %v3876
        %v3884 = vpack.c.bf16 %v3860, %v3860
        %v3885 = vpack.c.bf16 %v3868, %v3868
        %v3886 = vpack.c.bf16 %v3867, %v3867
        %v3887 = vpack.c.bf16 %v3869, %v3869
        %v3888 = vpack.c.bf16 %v3876, %v3876
        %v3889 = vpack.c.bf16 %v3877, %v3877
        %v3890 = vlaneseq
        %v3891 = vshrl.u32 %v3890, 7
        %v3892 = vsub.s32 0, %v3891
        %v3893 = vrot.slane %v3765, %v3892
        %v3990 = vunpack.c.l.b16 %v3669
        %v3991 = vunpack.c.l.b16 %v3670
        %v3992 = vunpack.c.l.b16 %v3671
        %v3993 = vunpack.c.l.b16 %v3672
        %v3994 = vunpack.c.l.b16 %v3673
        %v3995 = vunpack.c.l.b16 %v3674
        %v3996 = vunpack.c.l.b16 %v3675
        %v3997 = vunpack.c.l.b16 %v3676
        %v3998 = vunpack.c.l.b16 %v3677
        %v3999 = vunpack.c.l.b16 %v3678
        %v4000 = vunpack.c.l.b16 %v3679
        %v4001 = vunpack.c.l.b16 %v3680
        %v4002 = vunpack.c.l.b16 %v3681
        %v4003 = vunpack.c.l.b16 %v3682
        %v4004 = vunpack.c.l.b16 %v3683
        %v4005 = vunpack.c.l.b16 %v3684
        %v4006 = vunpack.c.l.b16 %v3685
        %v4007 = vunpack.c.l.b16 %v3686
        %v4008 = vunpack.c.l.b16 %v3687
        %v4009 = vunpack.c.l.b16 %v3688
        %v4010 = vunpack.c.l.b16 %v3689
        %v4011 = vunpack.c.l.b16 %v3690
        %v4012 = vunpack.c.l.b16 %v3691
        %v4013 = vunpack.c.l.b16 %v3692
        %v4014 = vunpack.c.l.b16 %v3693
        %v4015 = vunpack.c.l.b16 %v3694
        %v4016 = vunpack.c.l.b16 %v3695
        %v4017 = vunpack.c.l.b16 %v3696
        %v4018 = vunpack.c.l.b16 %v3697
        %v4019 = vunpack.c.l.b16 %v3698
        %v4020 = vunpack.c.l.b16 %v3699
        %v4021 = vunpack.c.l.b16 %v3700
        %v4022 = vunpack.c.l.b16 %v3701
        %v4023 = vunpack.c.l.b16 %v3702
        %v4024 = vunpack.c.l.b16 %v3703
        %v4025 = vunpack.c.l.b16 %v3704
        %v4026 = vunpack.c.l.b16 %v3705
        %v4027 = vunpack.c.l.b16 %v3706
        %v4028 = vunpack.c.l.b16 %v3707
        %v4029 = vunpack.c.l.b16 %v3708
        %v4030 = vunpack.c.l.b16 %v3709
        %v4031 = vunpack.c.l.b16 %v3710
        %v4032 = vunpack.c.l.b16 %v3711
        %v4033 = vunpack.c.l.b16 %v3712
        %v4034 = vunpack.c.l.b16 %v3713
        %v4035 = vunpack.c.l.b16 %v3714
        %v4036 = vunpack.c.l.b16 %v3715
        %v4037 = vunpack.c.l.b16 %v3716
        %v4038 = vunpack.c.l.b16 %v3717
        %v4039 = vunpack.c.l.b16 %v3718
        %v4040 = vunpack.c.l.b16 %v3719
        %v4041 = vunpack.c.l.b16 %v3720
        %v4042 = vunpack.c.l.b16 %v3721
        %v4043 = vunpack.c.l.b16 %v3722
        %v4044 = vunpack.c.l.b16 %v3723
        %v4045 = vunpack.c.l.b16 %v3724
        %v4046 = vunpack.c.l.b16 %v3725
        %v4047 = vunpack.c.l.b16 %v3726
        %v4048 = vunpack.c.l.b16 %v3727
        %v4049 = vunpack.c.l.b16 %v3728
        %v4050 = vunpack.c.l.b16 %v3729
        %v4051 = vunpack.c.l.b16 %v3730
        %v4052 = vunpack.c.l.b16 %v3731
        %v4053 = vunpack.c.l.b16 %v3732
        %v4054 = vunpack.c.l.b16 %v3733
        %v4055 = vunpack.c.l.b16 %v3734
        %v4056 = vunpack.c.l.b16 %v3735
        %v4057 = vunpack.c.l.b16 %v3736
        %v4058 = vunpack.c.l.b16 %v3737
        %v4059 = vunpack.c.l.b16 %v3738
        %v4060 = vunpack.c.l.b16 %v3739
        %v4061 = vunpack.c.l.b16 %v3740
        %v4062 = vunpack.c.l.b16 %v3741
        %v4063 = vunpack.c.l.b16 %v3742
        %v4064 = vunpack.c.l.b16 %v3743
        %v4065 = vunpack.c.l.b16 %v3744
        %v4066 = vunpack.c.l.b16 %v3745
        %v4067 = vunpack.c.l.b16 %v3746
        %v4068 = vunpack.c.l.b16 %v3747
        %v4069 = vunpack.c.l.b16 %v3748
        %v4070 = vunpack.c.l.b16 %v3749
        %v4071 = vunpack.c.l.b16 %v3750
        %v4072 = vunpack.c.l.b16 %v3751
        %v4073 = vunpack.c.l.b16 %v3752
        %v4074 = vunpack.c.l.b16 %v3753
        %v4075 = vunpack.c.l.b16 %v3754
        %v4076 = vunpack.c.l.b16 %v3755
        %v4077 = vunpack.c.l.b16 %v3756
        %v4078 = vunpack.c.l.b16 %v3757
        %v4079 = vunpack.c.l.b16 %v3758
        %v4080 = vunpack.c.l.b16 %v3759
        %v4081 = vunpack.c.l.b16 %v3760
        %v4082 = vunpack.c.l.b16 %v3761
        %v4083 = vunpack.c.l.b16 %v3762
        %v4084 = vunpack.c.l.b16 %v3763
        %v4085 = vunpack.c.l.b16 %v3764
        %v4086 = vpack.c.b16 %v3991, %v3990
        %v4087 = vpack.c.b16 %v3993, %v3992
        %v4088 = vpack.c.b16 %v3995, %v3994
        %v4089 = vpack.c.b16 %v3997, %v3996
        %v4090 = vpack.c.b16 %v3999, %v3998
        %v4091 = vpack.c.b16 %v4001, %v4000
        %v4092 = vpack.c.b16 %v4003, %v4002
        %v4093 = vpack.c.b16 %v4005, %v4004
        %v4094 = vpack.c.b16 %v4007, %v4006
        %v4095 = vpack.c.b16 %v4009, %v4008
        %v4096 = vpack.c.b16 %v4011, %v4010
        %v4097 = vpack.c.b16 %v4013, %v4012
        %v4098 = vpack.c.b16 %v4015, %v4014
        %v4099 = vpack.c.b16 %v4017, %v4016
        %v4100 = vpack.c.b16 %v4019, %v4018
        %v4101 = vpack.c.b16 %v4021, %v4020
        %v4102 = vpack.c.b16 %v4023, %v4022
        %v4103 = vpack.c.b16 %v4025, %v4024
        %v4104 = vpack.c.b16 %v4027, %v4026
        %v4105 = vpack.c.b16 %v4029, %v4028
        %v4106 = vpack.c.b16 %v4031, %v4030
        %v4107 = vpack.c.b16 %v4033, %v4032
        %v4108 = vpack.c.b16 %v4035, %v4034
        %v4109 = vpack.c.b16 %v4037, %v4036
        %v4110 = vpack.c.b16 %v4039, %v4038
        %v4111 = vpack.c.b16 %v4041, %v4040
        %v4112 = vpack.c.b16 %v4043, %v4042
        %v4113 = vpack.c.b16 %v4045, %v4044
        %v4114 = vpack.c.b16 %v4047, %v4046
        %v4115 = vpack.c.b16 %v4049, %v4048
        %v4116 = vpack.c.b16 %v4051, %v4050
        %v4117 = vpack.c.b16 %v4053, %v4052
        %v4118 = vpack.c.b16 %v4055, %v4054
        %v4119 = vpack.c.b16 %v4057, %v4056
        %v4120 = vpack.c.b16 %v4059, %v4058
        %v4121 = vpack.c.b16 %v4061, %v4060
        %v4122 = vpack.c.b16 %v4063, %v4062
        %v4123 = vpack.c.b16 %v4065, %v4064
        %v4124 = vpack.c.b16 %v4067, %v4066
        %v4125 = vpack.c.b16 %v4069, %v4068
        %v4126 = vpack.c.b16 %v4071, %v4070
        %v4127 = vpack.c.b16 %v4073, %v4072
        %v4128 = vpack.c.b16 %v4075, %v4074
        %v4129 = vpack.c.b16 %v4077, %v4076
        %v4130 = vpack.c.b16 %v4079, %v4078
        %v4131 = vpack.c.b16 %v4081, %v4080
        %v4132 = vpack.c.b16 %v4083, %v4082
        %v4133 = vpack.c.b16 %v4085, %v4084
        %4182 = vmatprep.subr.bf16.mxu0 0
        %4183 = vmatpush1.bf16.msra.mxu0 %v4086
        %4184 = vmatprep.subr.bf16.mxu0 0
        %4185 = vmatpush1.bf16.msra.mxu0 %v4087
        %4186 = vmatprep.subr.bf16.mxu0 0
        %4187 = vmatpush1.bf16.msra.mxu0 %v4088
        %4188 = vmatprep.subr.bf16.mxu0 0
        %4189 = vmatpush1.bf16.msra.mxu0 %v4089
        %4190 = vmatprep.subr.bf16.mxu0 0
        %4191 = vmatpush1.bf16.msra.mxu0 %v4090
        %4192 = vmatprep.subr.bf16.mxu0 0
        %4193 = vmatpush1.bf16.msra.mxu0 %v4091
        %4194 = vmatprep.subr.bf16.mxu0 0
        %4195 = vmatpush1.bf16.msra.mxu0 %v4092
        %4196 = vmatprep.subr.bf16.mxu0 0
        %4197 = vmatpush1.bf16.msra.mxu0 %v4093
        %4198 = vmatprep.subr.bf16.mxu0 0
        %4199 = vmatpush1.bf16.msra.mxu0 %v4094
        %4200 = vmatprep.subr.bf16.mxu0 0
        %4201 = vmatpush1.bf16.msra.mxu0 %v4095
        %4202 = vmatprep.subr.bf16.mxu0 0
        %4203 = vmatpush1.bf16.msra.mxu0 %v4096
        %4204 = vmatprep.subr.bf16.mxu0 0
        %4205 = vmatpush1.bf16.msra.mxu0 %v4097
        %4206 = vmatprep.subr.bf16.mxu0 0
        %4207 = vmatpush1.bf16.msra.mxu0 %v4098
        %4208 = vmatprep.subr.bf16.mxu0 0
        %4209 = vmatpush1.bf16.msra.mxu0 %v4099
        %4210 = vmatprep.subr.bf16.mxu0 0
        %4211 = vmatpush1.bf16.msra.mxu0 %v4100
        %4212 = vmatprep.subr.bf16.mxu0 0
        %4213 = vmatpush1.bf16.msra.mxu0 %v4101
        %4214 = vmatprep.mubr.bf16.mxu0 %v3803
        %4215 = vmatmul.mubr.bf16.gmra.mrb[0].mxu0 %v3802
        %v4216 = vpop.f32.mrb[0].mxu0
        %v4217 = vadd.f32 %v3893, %v4216
        %v4218 = vpop.f32.mrb[0].mxu0
        %v4219 = vpop.f32.mrb[0].mxu0
        %v4220 = vpop.f32.mrb[0].mxu0
        %4221 = vdwg.mxu0
        %4222 = vmatprep.subr.bf16.mxu0 0
        %4223 = vmatpush1.bf16.msra.mxu0 %v4102
        %4224 = vmatprep.subr.bf16.mxu0 0
        %4225 = vmatpush1.bf16.msra.mxu0 %v4103
        %4226 = vmatprep.subr.bf16.mxu0 0
        %4227 = vmatpush1.bf16.msra.mxu0 %v4104
        %4228 = vmatprep.subr.bf16.mxu0 0
        %4229 = vmatpush1.bf16.msra.mxu0 %v4105
        %4230 = vmatprep.subr.bf16.mxu0 0
        %4231 = vmatpush1.bf16.msra.mxu0 %v4106
        %4232 = vmatprep.subr.bf16.mxu0 0
        %4233 = vmatpush1.bf16.msra.mxu0 %v4107
        %4234 = vmatprep.subr.bf16.mxu0 0
        %4235 = vmatpush1.bf16.msra.mxu0 %v4108
        %4236 = vmatprep.subr.bf16.mxu0 0
        %4237 = vmatpush1.bf16.msra.mxu0 %v4109
        %4238 = vmatprep.subr.bf16.mxu0 0
        %4239 = vmatpush1.bf16.msra.mxu0 %v4110
        %4240 = vmatprep.subr.bf16.mxu0 0
        %4241 = vmatpush1.bf16.msra.mxu0 %v4111
        %4242 = vmatprep.subr.bf16.mxu0 0
        %4243 = vmatpush1.bf16.msra.mxu0 %v4112
        %4244 = vmatprep.subr.bf16.mxu0 0
        %4245 = vmatpush1.bf16.msra.mxu0 %v4113
        %4246 = vmatprep.subr.bf16.mxu0 0
        %4247 = vmatpush1.bf16.msra.mxu0 %v4114
        %4248 = vmatprep.subr.bf16.mxu0 0
        %4249 = vmatpush1.bf16.msra.mxu0 %v4115
        %4250 = vmatprep.subr.bf16.mxu0 0
        %4251 = vmatpush1.bf16.msra.mxu0 %v4116
        %4252 = vmatprep.subr.bf16.mxu0 0
        %4253 = vmatpush1.bf16.msra.mxu0 %v4117
        %4254 = vmatprep.mubr.bf16.mxu0 %v3805
        %4255 = vmatmul.mubr.bf16.gmra.mrb[0].mxu0 %v3804
        %v4256 = vpop.f32.mrb[0].mxu0
        %v4257 = vadd.f32 %v4217, %v4256
        %v4258 = vpop.f32.mrb[0].mxu0
        %v4259 = vpop.f32.mrb[0].mxu0
        %v4260 = vpop.f32.mrb[0].mxu0
        %4261 = vdwg.mxu0
        %4262 = vmatprep.subr.bf16.mxu0 0
        %4263 = vmatpush1.bf16.msra.mxu0 %v4118
        %4264 = vmatprep.subr.bf16.mxu0 0
        %4265 = vmatpush1.bf16.msra.mxu0 %v4119
        %4266 = vmatprep.subr.bf16.mxu0 0
        %4267 = vmatpush1.bf16.msra.mxu0 %v4120
        %4268 = vmatprep.subr.bf16.mxu0 0
        %4269 = vmatpush1.bf16.msra.mxu0 %v4121
        %4270 = vmatprep.subr.bf16.mxu0 0
        %4271 = vmatpush1.bf16.msra.mxu0 %v4122
        %4272 = vmatprep.subr.bf16.mxu0 0
        %4273 = vmatpush1.bf16.msra.mxu0 %v4123
        %4274 = vmatprep.subr.bf16.mxu0 0
        %4275 = vmatpush1.bf16.msra.mxu0 %v4124
        %4276 = vmatprep.subr.bf16.mxu0 0
        %4277 = vmatpush1.bf16.msra.mxu0 %v4125
        %4278 = vmatprep.subr.bf16.mxu0 0
        %4279 = vmatpush1.bf16.msra.mxu0 %v4126
        %4280 = vmatprep.subr.bf16.mxu0 0
        %4281 = vmatpush1.bf16.msra.mxu0 %v4127
        %4282 = vmatprep.subr.bf16.mxu0 0
        %4283 = vmatpush1.bf16.msra.mxu0 %v4128
        %4284 = vmatprep.subr.bf16.mxu0 0
        %4285 = vmatpush1.bf16.msra.mxu0 %v4129
        %4286 = vmatprep.subr.bf16.mxu0 0
        %4287 = vmatpush1.bf16.msra.mxu0 %v4130
        %4288 = vmatprep.subr.bf16.mxu0 0
        %4289 = vmatpush1.bf16.msra.mxu0 %v4131
        %4290 = vmatprep.subr.bf16.mxu0 0
        %4291 = vmatpush1.bf16.msra.mxu0 %v4132
        %4292 = vmatprep.subr.bf16.mxu0 0
        %4293 = vmatpush1.bf16.msra.mxu0 %v4133
        %4294 = vmatprep.mubr.bf16.mxu0 %v3807
        %4295 = vmatmul.mubr.bf16.gmra.mrb[0].mxu0 %v3806
        %v4296 = vpop.f32.mrb[0].mxu0
        %v4297 = vadd.f32 %v4257, %v4296
        %v4298 = vpop.f32.mrb[0].mxu0
        %v4299 = vpop.f32.mrb[0].mxu0
        %v4300 = vpop.f32.mrb[0].mxu0
        %4301 = vdwg.mxu0
        %v4302 = vpack.c.bf16 %v4297, %v4297
        %v4303 = vld [vmem:[%s15] sm:$0xf]
        %v4304 = vld [vmem:[%s15 + $0x4] sm:$0xf]
        %v4305 = vld [vmem:[%s15 + $0x8] sm:$0xf]
        %v4306 = vld [vmem:[%s15 + $0xc] sm:$0xf]
        %v4311 = vunpack.c.l.b16 %v4303
        %v4312 = vunpack.c.l.b16 %v4304
        %v4313 = vunpack.c.l.b16 %v4305
        %v4314 = vunpack.c.l.b16 %v4306
        %v4315 = vpack.c.b16 %v4312, %v4311
        %v4316 = vpack.c.b16 %v4314, %v4313
        %vm4319 = vcmask 261120
        %v4321 = vsel %vm4319, %v4302, 0
        %4323 = vmatprep.subr.bf16.mxu0 0
        %4324 = vmatpush1.bf16.msra.mxu0 %v4315
        %4325 = vmatprep.subr.bf16.mxu0 0
        %4326 = vmatpush1.bf16.msra.mxu0 %v4316
        %4327 = vmatprep.subr.bf16.mxu0 0
        %4328 = vmatpush1.bf16.msra.mxu0 0
        %4329 = vmatprep.subr.bf16.mxu0 0
        %4330 = vmatpush1.bf16.msra.mxu0 0
        %4331 = vmatprep.subr.bf16.mxu0 0
        %4332 = vmatpush1.bf16.msra.mxu0 0
        %4333 = vmatprep.subr.bf16.mxu0 0
        %4334 = vmatpush1.bf16.msra.mxu0 0
        %4335 = vmatprep.subr.bf16.mxu0 0
        %4336 = vmatpush1.bf16.msra.mxu0 0
        %4337 = vmatprep.subr.bf16.mxu0 0
        %4338 = vmatpush1.bf16.msra.mxu0 0
        %4339 = vmatprep.subr.bf16.mxu0 0
        %4340 = vmatpush1.bf16.msra.mxu0 0
        %4341 = vmatprep.subr.bf16.mxu0 0
        %4342 = vmatpush1.bf16.msra.mxu0 0
        %4343 = vmatprep.subr.bf16.mxu0 0
        %4344 = vmatpush1.bf16.msra.mxu0 0
        %4345 = vmatprep.subr.bf16.mxu0 0
        %4346 = vmatpush1.bf16.msra.mxu0 0
        %4347 = vmatprep.subr.bf16.mxu0 0
        %4348 = vmatpush1.bf16.msra.mxu0 0
        %4349 = vmatprep.subr.bf16.mxu0 0
        %4350 = vmatpush1.bf16.msra.mxu0 0
        %4351 = vmatprep.subr.bf16.mxu0 0
        %4352 = vmatpush1.bf16.msra.mxu0 0
        %4353 = vmatprep.subr.bf16.mxu0 0
        %4354 = vmatpush1.bf16.msra.mxu0 0
        %4355 = vmatprep.mubr.bf16.mxu0 0
        %4356 = vmatmul.mubr.bf16.gmra.mrb[0].mxu0 %v4321
        %v4357 = vpop.f32.mrb[0].mxu0
        %v4358 = vadd.f32 0.0, %v4357
        %v4359 = vpop.f32.mrb[0].mxu0
        %v4360 = vpop.f32.mrb[0].mxu0
        %v4361 = vpop.f32.mrb[0].mxu0
        %4362 = vdwg.mxu0
        %v4369 = vrot.slane %v3884, 7
        %v4370 = vrot.slane %v3885, 7
        %v4371 = vrot.slane %v3886, 7
        %v4372 = vrot.slane %v3887, 7
        %v4373 = vrot.slane %v3888, 7
        %v4374 = vrot.slane %v3889, 7
        %vm4375 = vcmask 1040384
        %v4378 = vsel %vm4375, %v3843, %v4369
        %v4382 = vsel %vm4375, %v3844, %v4370
        %v4386 = vsel %vm4375, %v3845, %v4371
        %v4390 = vsel %vm4375, %v3846, %v4372
        %v4394 = vsel %vm4375, %v3847, %v4373
        %v4398 = vsel %vm4375, %v3848, %v4374
        %4400 = vmatprep.subr.bf16.mxu0 0
        %4401 = vmatpush1.bf16.msra.mxu0 %v4086
        %4402 = vmatprep.subr.bf16.mxu0 0
        %4403 = vmatpush1.bf16.msra.mxu0 %v4087
        %4404 = vmatprep.subr.bf16.mxu0 0
        %4405 = vmatpush1.bf16.msra.mxu0 %v4088
        %4406 = vmatprep.subr.bf16.mxu0 0
        %4407 = vmatpush1.bf16.msra.mxu0 %v4089
        %4408 = vmatprep.subr.bf16.mxu0 0
        %4409 = vmatpush1.bf16.msra.mxu0 %v4090
        %4410 = vmatprep.subr.bf16.mxu0 0
        %4411 = vmatpush1.bf16.msra.mxu0 %v4091
        %4412 = vmatprep.subr.bf16.mxu0 0
        %4413 = vmatpush1.bf16.msra.mxu0 %v4092
        %4414 = vmatprep.subr.bf16.mxu0 0
        %4415 = vmatpush1.bf16.msra.mxu0 %v4093
        %4416 = vmatprep.subr.bf16.mxu0 0
        %4417 = vmatpush1.bf16.msra.mxu0 %v4094
        %4418 = vmatprep.subr.bf16.mxu0 0
        %4419 = vmatpush1.bf16.msra.mxu0 %v4095
        %4420 = vmatprep.subr.bf16.mxu0 0
        %4421 = vmatpush1.bf16.msra.mxu0 %v4096
        %4422 = vmatprep.subr.bf16.mxu0 0
        %4423 = vmatpush1.bf16.msra.mxu0 %v4097
        %4424 = vmatprep.subr.bf16.mxu0 0
        %4425 = vmatpush1.bf16.msra.mxu0 %v4098
        %4426 = vmatprep.subr.bf16.mxu0 0
        %4427 = vmatpush1.bf16.msra.mxu0 %v4099
        %4428 = vmatprep.subr.bf16.mxu0 0
        %4429 = vmatpush1.bf16.msra.mxu0 %v4100
        %4430 = vmatprep.subr.bf16.mxu0 0
        %4431 = vmatpush1.bf16.msra.mxu0 %v4101
        %4432 = vmatprep.mubr.bf16.mxu0 %v4382
        %4433 = vmatmul.mubr.bf16.gmra.mrb[0].mxu0 %v4378
        %v4434 = vpop.f32.mrb[0].mxu0
        %v4435 = vadd.f32 %v3893, %v4434
        %v4436 = vpop.f32.mrb[0].mxu0
        %v4437 = vpop.f32.mrb[0].mxu0
        %v4438 = vpop.f32.mrb[0].mxu0
        %4439 = vdwg.mxu0
        %4440 = vmatprep.subr.bf16.mxu0 0
        %4441 = vmatpush1.bf16.msra.mxu0 %v4102
        %4442 = vmatprep.subr.bf16.mxu0 0
        %4443 = vmatpush1.bf16.msra.mxu0 %v4103
        %4444 = vmatprep.subr.bf16.mxu0 0
        %4445 = vmatpush1.bf16.msra.mxu0 %v4104
        %4446 = vmatprep.subr.bf16.mxu0 0
        %4447 = vmatpush1.bf16.msra.mxu0 %v4105
        %4448 = vmatprep.subr.bf16.mxu0 0
        %4449 = vmatpush1.bf16.msra.mxu0 %v4106
        %4450 = vmatprep.subr.bf16.mxu0 0
        %4451 = vmatpush1.bf16.msra.mxu0 %v4107
        %4452 = vmatprep.subr.bf16.mxu0 0
        %4453 = vmatpush1.bf16.msra.mxu0 %v4108
        %4454 = vmatprep.subr.bf16.mxu0 0
        %4455 = vmatpush1.bf16.msra.mxu0 %v4109
        %4456 = vmatprep.subr.bf16.mxu0 0
        %4457 = vmatpush1.bf16.msra.mxu0 %v4110
        %4458 = vmatprep.subr.bf16.mxu0 0
        %4459 = vmatpush1.bf16.msra.mxu0 %v4111
        %4460 = vmatprep.subr.bf16.mxu0 0
        %4461 = vmatpush1.bf16.msra.mxu0 %v4112
        %4462 = vmatprep.subr.bf16.mxu0 0
        %4463 = vmatpush1.bf16.msra.mxu0 %v4113
        %4464 = vmatprep.subr.bf16.mxu0 0
        %4465 = vmatpush1.bf16.msra.mxu0 %v4114
        %4466 = vmatprep.subr.bf16.mxu0 0
        %4467 = vmatpush1.bf16.msra.mxu0 %v4115
        %4468 = vmatprep.subr.bf16.mxu0 0
        %4469 = vmatpush1.bf16.msra.mxu0 %v4116
        %4470 = vmatprep.subr.bf16.mxu0 0
        %4471 = vmatpush1.bf16.msra.mxu0 %v4117
        %4472 = vmatprep.mubr.bf16.mxu0 %v4390
        %4473 = vmatmul.mubr.bf16.gmra.mrb[0].mxu0 %v4386
        %v4474 = vpop.f32.mrb[0].mxu0
        %v4475 = vadd.f32 %v4435, %v4474
        %v4476 = vpop.f32.mrb[0].mxu0
        %v4477 = vpop.f32.mrb[0].mxu0
        %v4478 = vpop.f32.mrb[0].mxu0
        %4479 = vdwg.mxu0
        %4480 = vmatprep.subr.bf16.mxu0 0
        %4481 = vmatpush1.bf16.msra.mxu0 %v4118
        %4482 = vmatprep.subr.bf16.mxu0 0
        %4483 = vmatpush1.bf16.msra.mxu0 %v4119
        %4484 = vmatprep.subr.bf16.mxu0 0
        %4485 = vmatpush1.bf16.msra.mxu0 %v4120
        %4486 = vmatprep.subr.bf16.mxu0 0
        %4487 = vmatpush1.bf16.msra.mxu0 %v4121
        %4488 = vmatprep.subr.bf16.mxu0 0
        %4489 = vmatpush1.bf16.msra.mxu0 %v4122
        %4490 = vmatprep.subr.bf16.mxu0 0
        %4491 = vmatpush1.bf16.msra.mxu0 %v4123
        %4492 = vmatprep.subr.bf16.mxu0 0
        %4493 = vmatpush1.bf16.msra.mxu0 %v4124
        %4494 = vmatprep.subr.bf16.mxu0 0
        %4495 = vmatpush1.bf16.msra.mxu0 %v4125
        %4496 = vmatprep.subr.bf16.mxu0 0
        %4497 = vmatpush1.bf16.msra.mxu0 %v4126
        %4498 = vmatprep.subr.bf16.mxu0 0
        %4499 = vmatpush1.bf16.msra.mxu0 %v4127
        %4500 = vmatprep.subr.bf16.mxu0 0
        %4501 = vmatpush1.bf16.msra.mxu0 %v4128
        %4502 = vmatprep.subr.bf16.mxu0 0
        %4503 = vmatpush1.bf16.msra.mxu0 %v4129
        %4504 = vmatprep.subr.bf16.mxu0 0
        %4505 = vmatpush1.bf16.msra.mxu0 %v4130
        %4506 = vmatprep.subr.bf16.mxu0 0
        %4507 = vmatpush1.bf16.msra.mxu0 %v4131
        %4508 = vmatprep.subr.bf16.mxu0 0
        %4509 = vmatpush1.bf16.msra.mxu0 %v4132
        %4510 = vmatprep.subr.bf16.mxu0 0
        %4511 = vmatpush1.bf16.msra.mxu0 %v4133
        %4512 = vmatprep.mubr.bf16.mxu0 %v4398
        %4513 = vmatmul.mubr.bf16.gmra.mrb[0].mxu0 %v4394
        %v4514 = vpop.f32.mrb[0].mxu0
        %v4515 = vadd.f32 %v4475, %v4514
        %v4516 = vpop.f32.mrb[0].mxu0
        %v4517 = vpop.f32.mrb[0].mxu0
        %v4518 = vpop.f32.mrb[0].mxu0
        %4519 = vdwg.mxu0
        %v4520 = vpack.c.bf16 %v4515, %v4515
        %v4521 = vld [vmem:[%s16] sm:$0xf]
        %v4522 = vld [vmem:[%s16 + $0x4] sm:$0xf]
        %v4523 = vld [vmem:[%s16 + $0x8] sm:$0xf]
        %v4524 = vld [vmem:[%s16 + $0xc] sm:$0xf]
        %v4525 = vlaneseq
        %v4526 = vshrl.u32 %v4525, 7
        %v4527 = vsub.s32 0, %v4526
        %v4528 = vrot.slane %v3766, %v4527
        %v4533 = vunpack.c.l.b16 %v4521
        %v4534 = vunpack.c.l.b16 %v4522
        %v4535 = vunpack.c.l.b16 %v4523
        %v4536 = vunpack.c.l.b16 %v4524
        %v4537 = vpack.c.b16 %v4534, %v4533
        %v4538 = vpack.c.b16 %v4536, %v4535
        %v4542 = vsel %vm4319, %v4520, 0
        %4544 = vmatprep.subr.bf16.mxu0 0
        %4545 = vmatpush1.bf16.msra.mxu0 %v4537
        %4546 = vmatprep.subr.bf16.mxu0 0
        %4547 = vmatpush1.bf16.msra.mxu0 %v4538
        %4548 = vmatprep.subr.bf16.mxu0 0
        %4549 = vmatpush1.bf16.msra.mxu0 0
        %4550 = vmatprep.subr.bf16.mxu0 0
        %4551 = vmatpush1.bf16.msra.mxu0 0
        %4552 = vmatprep.subr.bf16.mxu0 0
        %4553 = vmatpush1.bf16.msra.mxu0 0
        %4554 = vmatprep.subr.bf16.mxu0 0
        %4555 = vmatpush1.bf16.msra.mxu0 0
        %4556 = vmatprep.subr.bf16.mxu0 0
        %4557 = vmatpush1.bf16.msra.mxu0 0
        %4558 = vmatprep.subr.bf16.mxu0 0
        %4559 = vmatpush1.bf16.msra.mxu0 0
        %4560 = vmatprep.subr.bf16.mxu0 0
        %4561 = vmatpush1.bf16.msra.mxu0 0
        %4562 = vmatprep.subr.bf16.mxu0 0
        %4563 = vmatpush1.bf16.msra.mxu0 0
        %4564 = vmatprep.subr.bf16.mxu0 0
        %4565 = vmatpush1.bf16.msra.mxu0 0
        %4566 = vmatprep.subr.bf16.mxu0 0
        %4567 = vmatpush1.bf16.msra.mxu0 0
        %4568 = vmatprep.subr.bf16.mxu0 0
        %4569 = vmatpush1.bf16.msra.mxu0 0
        %4570 = vmatprep.subr.bf16.mxu0 0
        %4571 = vmatpush1.bf16.msra.mxu0 0
        %4572 = vmatprep.subr.bf16.mxu0 0
        %4573 = vmatpush1.bf16.msra.mxu0 0
        %4574 = vmatprep.subr.bf16.mxu0 0
        %4575 = vmatpush1.bf16.msra.mxu0 0
        %4576 = vmatprep.mubr.bf16.mxu0 0
        %4577 = vmatmul.mubr.bf16.gmra.mrb[0].mxu0 %v4542
        %v4578 = vpop.f32.mrb[0].mxu0
        %v4579 = vadd.f32 %v4528, %v4578
        %v4580 = vpop.f32.mrb[0].mxu0
        %v4581 = vpop.f32.mrb[0].mxu0
        %v4582 = vpop.f32.mrb[0].mxu0
        %4583 = vdwg.mxu0
        %v4586 = vunpack.c.l.s4 1983009808
        %v4587 = vunpack.c.0.s8 %v4586
        %v4588 = vlaneseq
        %v4589 = vshrl.u32 %v4588, 7
        %v4590 = vsub.s32 %v4587, %v4589
        %v4591 = vrot.slane %v4579, %v4590
        %v4592 = vcombine.high %v4591, %v4591
        %vm4595 = vcmask 517120
        %v4596 = vsel %vm4595, %v4591, 0.0
        %v4597 = vrot.slane %v4596, 4
        %v4598 = vadd.f32 %v4596, %v4597
        %v4599 = vrot.slane %v4598, 2
        %v4600 = vadd.f32 %v4598, %v4599
        %v4601 = vrot.slane %v4600, 1
        %v4602 = vadd.f32 %v4600, %v4601
        %v4603 = vsel %vm4595, %v4592, 0.0
        %v4604 = vrot.slane %v4603, 4
        %v4605 = vadd.f32 %v4603, %v4604
        %v4606 = vrot.slane %v4605, 2
        %v4607 = vadd.f32 %v4605, %v4606
        %v4608 = vrot.slane %v4607, 1
        %v4609 = vadd.f32 %v4607, %v4608
        %v4610 = vrcp.pop 2.0
        %v4611 = vmul.f32 %v4602, %v4610
        %v4612 = vmul.f32 %v4609, %v4610
        %v4613 = vsub.f32 %v4591, %v4611
        %v4614 = vsub.f32 %v4592, %v4612
        %v4615 = vmul.f32 %v4613, %v4613
        %v4616 = vmul.f32 %v4614, %v4614
        %v4617 = vsel %vm4595, %v4615, 0.0
        %v4618 = vrot.slane %v4617, 4
        %v4619 = vadd.f32 %v4617, %v4618
        %v4620 = vrot.slane %v4619, 2
        %v4621 = vadd.f32 %v4619, %v4620
        %v4622 = vrot.slane %v4621, 1
        %v4623 = vadd.f32 %v4621, %v4622
        %v4624 = vsel %vm4595, %v4616, 0.0
        %v4625 = vrot.slane %v4624, 4
        %v4626 = vadd.f32 %v4624, %v4625
        %v4627 = vrot.slane %v4626, 2
        %v4628 = vadd.f32 %v4626, %v4627
        %v4629 = vrot.slane %v4628, 1
        %v4630 = vadd.f32 %v4628, %v4629
        %v4631 = vmul.f32 %v4623, %v4610
        %v4632 = vmul.f32 %v4630, %v4610
        %v4633 = vadd.f32 %v4631, 1e-05
        %v4634 = vadd.f32 %v4632, 1e-05
        %v4635 = vrsqrt.pop %v4633
        %v4636 = vrsqrt.pop %v4634
        %v4637 = vmul.f32 %v4613, %v4635
        %v4638 = vmul.f32 %v4614, %v4636
        %v4639 = vlaneseq
        %v4640 = vshrl.u32 %v4639, 7
        %v4641 = vsub.s32 1, %v4640
        %v4642 = vrot.slane %v3766, %v4641
        %v4643 = vmul.f32 %v4637, %v4642
        %v4644 = vmul.f32 %v4638, %v4642
        %v4645 = vlaneseq
        %v4646 = vshrl.u32 %v4645, 7
        %v4647 = vsub.s32 2, %v4646
        %v4648 = vrot.slane %v3766, %v4647
        %v4649 = vadd.f32 %v4643, %v4648
        %v4650 = vadd.f32 %v4644, %v4648
        %v4651 = vmax.f32 %v4649, 0.0
        %v4652 = vmax.f32 %v4650, 0.0
        %v4655 = vcombine.low %v4651, %v4652
        %v4657 = vunpack.c.l.s4 1983009808
        %v4658 = vunpack.c.0.s8 %v4657
        %v4659 = vlaneseq
        %v4660 = vshrl.u32 %v4659, 7
        %v4661 = vsub.s32 %v4658, %v4660
        %v4662 = vrot.slane %v4655, %v4661
        %v4664 = vpack.c.bf16 %v4662, %v4662
        %v4665 = vld [vmem:[%s17] sm:$0xf]
        %v4666 = vld [vmem:[%s17 + $0x4] sm:$0xf]
        %v4667 = vld [vmem:[%s17 + $0x8] sm:$0xf]
        %v4668 = vld [vmem:[%s17 + $0xc] sm:$0xf]
        %v4669 = vld [vmem:[%s17 + $0x10] sm:$0xf]
        %v4670 = vld [vmem:[%s17 + $0x14] sm:$0xf]
        %v4671 = vld [vmem:[%s17 + $0x18] sm:$0xf]
        %v4672 = vld [vmem:[%s17 + $0x1c] sm:$0xf]
        %v4673 = vlaneseq
        %v4674 = vshrl.u32 %v4673, 7
        %v4675 = vsub.s32 3, %v4674
        %v4676 = vrot.slane %v3766, %v4675
        %v4685 = vunpack.c.l.b16 %v4665
        %v4686 = vunpack.c.l.b16 %v4666
        %v4687 = vunpack.c.l.b16 %v4667
        %v4688 = vunpack.c.l.b16 %v4668
        %v4689 = vunpack.c.l.b16 %v4669
        %v4690 = vunpack.c.l.b16 %v4670
        %v4691 = vunpack.c.l.b16 %v4671
        %v4692 = vunpack.c.l.b16 %v4672
        %v4693 = vpack.c.b16 %v4686, %v4685
        %v4694 = vpack.c.b16 %v4688, %v4687
        %v4695 = vpack.c.b16 %v4690, %v4689
        %v4696 = vpack.c.b16 %v4692, %v4691
        %vm4701 = vcmask 523264
        %v4703 = vsel %vm4701, %v4664, 0
        %4705 = vmatprep.subr.bf16.mxu0 0
        %4706 = vmatpush1.bf16.msra.mxu0 %v4693
        %4707 = vmatprep.subr.bf16.mxu0 0
        %4708 = vmatpush1.bf16.msra.mxu0 %v4694
        %4709 = vmatprep.subr.bf16.mxu0 0
        %4710 = vmatpush1.bf16.msra.mxu0 %v4695
        %4711 = vmatprep.subr.bf16.mxu0 0
        %4712 = vmatpush1.bf16.msra.mxu0 %v4696
        %4713 = vmatprep.subr.bf16.mxu0 0
        %4714 = vmatpush1.bf16.msra.mxu0 0
        %4715 = vmatprep.subr.bf16.mxu0 0
        %4716 = vmatpush1.bf16.msra.mxu0 0
        %4717 = vmatprep.subr.bf16.mxu0 0
        %4718 = vmatpush1.bf16.msra.mxu0 0
        %4719 = vmatprep.subr.bf16.mxu0 0
        %4720 = vmatpush1.bf16.msra.mxu0 0
        %4721 = vmatprep.subr.bf16.mxu0 0
        %4722 = vmatpush1.bf16.msra.mxu0 0
        %4723 = vmatprep.subr.bf16.mxu0 0
        %4724 = vmatpush1.bf16.msra.mxu0 0
        %4725 = vmatprep.subr.bf16.mxu0 0
        %4726 = vmatpush1.bf16.msra.mxu0 0
        %4727 = vmatprep.subr.bf16.mxu0 0
        %4728 = vmatpush1.bf16.msra.mxu0 0
        %4729 = vmatprep.subr.bf16.mxu0 0
        %4730 = vmatpush1.bf16.msra.mxu0 0
        %4731 = vmatprep.subr.bf16.mxu0 0
        %4732 = vmatpush1.bf16.msra.mxu0 0
        %4733 = vmatprep.subr.bf16.mxu0 0
        %4734 = vmatpush1.bf16.msra.mxu0 0
        %4735 = vmatprep.subr.bf16.mxu0 0
        %4736 = vmatpush1.bf16.msra.mxu0 0
        %4737 = vmatprep.mubr.bf16.mxu0 0
        %4738 = vmatmul.mubr.bf16.gmra.mrb[0].mxu0 %v4703
        %v4739 = vpop.f32.mrb[0].mxu0
        %v4740 = vadd.f32 %v4676, %v4739
        %v4741 = vpop.f32.mrb[0].mxu0
        %v4742 = vpop.f32.mrb[0].mxu0
        %v4743 = vpop.f32.mrb[0].mxu0
        %4744 = vdwg.mxu0
        %v4747 = vunpack.c.l.s4 1983009808
        %v4748 = vunpack.c.0.s8 %v4747
        %v4749 = vlaneseq
        %v4750 = vshrl.u32 %v4749, 7
        %v4751 = vsub.s32 %v4748, %v4750
        %v4752 = vrot.slane %v4740, %v4751
        %v4753 = vcombine.high %v4752, %v4752
        %v4756 = vsel %vm4595, %v4752, 0.0
        %v4757 = vrot.slane %v4756, 4
        %v4758 = vadd.f32 %v4756, %v4757
        %v4759 = vrot.slane %v4758, 2
        %v4760 = vadd.f32 %v4758, %v4759
        %v4761 = vrot.slane %v4760, 1
        %v4762 = vadd.f32 %v4760, %v4761
        %v4763 = vsel %vm4595, %v4753, 0.0
        %v4764 = vrot.slane %v4763, 4
        %v4765 = vadd.f32 %v4763, %v4764
        %v4766 = vrot.slane %v4765, 2
        %v4767 = vadd.f32 %v4765, %v4766
        %v4768 = vrot.slane %v4767, 1
        %v4769 = vadd.f32 %v4767, %v4768
        %v4770 = vmul.f32 %v4762, %v4610
        %v4771 = vmul.f32 %v4769, %v4610
        %v4772 = vsub.f32 %v4752, %v4770
        %v4773 = vsub.f32 %v4753, %v4771
        %v4774 = vmul.f32 %v4772, %v4772
        %v4775 = vmul.f32 %v4773, %v4773
        %v4776 = vsel %vm4595, %v4774, 0.0
        %v4777 = vrot.slane %v4776, 4
        %v4778 = vadd.f32 %v4776, %v4777
        %v4779 = vrot.slane %v4778, 2
        %v4780 = vadd.f32 %v4778, %v4779
        %v4781 = vrot.slane %v4780, 1
        %v4782 = vadd.f32 %v4780, %v4781
        %v4783 = vsel %vm4595, %v4775, 0.0
        %v4784 = vrot.slane %v4783, 4
        %v4785 = vadd.f32 %v4783, %v4784
        %v4786 = vrot.slane %v4785, 2
        %v4787 = vadd.f32 %v4785, %v4786
        %v4788 = vrot.slane %v4787, 1
        %v4789 = vadd.f32 %v4787, %v4788
        %v4790 = vmul.f32 %v4782, %v4610
        %v4791 = vmul.f32 %v4789, %v4610
        %v4792 = vadd.f32 %v4790, 1e-05
        %v4793 = vadd.f32 %v4791, 1e-05
        %v4794 = vrsqrt.pop %v4792
        %v4795 = vrsqrt.pop %v4793
        %v4796 = vmul.f32 %v4772, %v4794
        %v4797 = vmul.f32 %v4773, %v4795
        %v4798 = vlaneseq
        %v4799 = vshrl.u32 %v4798, 7
        %v4800 = vsub.s32 4, %v4799
        %v4801 = vrot.slane %v3766, %v4800
        %v4802 = vmul.f32 %v4796, %v4801
        %v4803 = vmul.f32 %v4797, %v4801
        %v4804 = vlaneseq
        %v4805 = vshrl.u32 %v4804, 7
        %v4806 = vsub.s32 5, %v4805
        %v4807 = vrot.slane %v3766, %v4806
        %v4808 = vadd.f32 %v4802, %v4807
        %v4809 = vadd.f32 %v4803, %v4807
        %v4810 = vmax.f32 %v4808, 0.0
        %v4811 = vmax.f32 %v4809, 0.0
        %v4814 = vcombine.low %v4810, %v4811
        %v4816 = vunpack.c.l.s4 1983009808
        %v4817 = vunpack.c.0.s8 %v4816
        %v4818 = vlaneseq
        %v4819 = vshrl.u32 %v4818, 7
        %v4820 = vsub.s32 %v4817, %v4819
        %v4821 = vrot.slane %v4814, %v4820
        %v4823 = vpack.c.bf16 %v4821, %v4821
        %v4824 = vld [vmem:[%s18] sm:$0xf]
        %v4825 = vld [vmem:[%s18 + $0x4] sm:$0xf]
        %v4826 = vld [vmem:[%s18 + $0x8] sm:$0xf]
        %v4827 = vld [vmem:[%s18 + $0xc] sm:$0xf]
        %v4828 = vld [vmem:[%s18 + $0x10] sm:$0xf]
        %v4829 = vld [vmem:[%s18 + $0x14] sm:$0xf]
        %v4830 = vld [vmem:[%s18 + $0x18] sm:$0xf]
        %v4831 = vld [vmem:[%s18 + $0x1c] sm:$0xf]
        %v4832 = vlaneseq
        %v4833 = vshrl.u32 %v4832, 7
        %v4834 = vsub.s32 1, %v4833
        %v4835 = vrot.slane %v3765, %v4834
        %v4844 = vunpack.c.l.b16 %v4824
        %v4845 = vunpack.c.l.b16 %v4825
        %v4846 = vunpack.c.l.b16 %v4826
        %v4847 = vunpack.c.l.b16 %v4827
        %v4848 = vunpack.c.l.b16 %v4828
        %v4849 = vunpack.c.l.b16 %v4829
        %v4850 = vunpack.c.l.b16 %v4830
        %v4851 = vunpack.c.l.b16 %v4831
        %v4852 = vpack.c.b16 %v4845, %v4844
        %v4853 = vpack.c.b16 %v4847, %v4846
        %v4854 = vpack.c.b16 %v4849, %v4848
        %v4855 = vpack.c.b16 %v4851, %v4850
        %v4861 = vsel %vm4701, %v4823, 0
        %4863 = vmatprep.subr.bf16.mxu0 0
        %4864 = vmatpush1.bf16.msra.mxu0 %v4852
        %4865 = vmatprep.subr.bf16.mxu0 0
        %4866 = vmatpush1.bf16.msra.mxu0 %v4853
        %4867 = vmatprep.subr.bf16.mxu0 0
        %4868 = vmatpush1.bf16.msra.mxu0 %v4854
        %4869 = vmatprep.subr.bf16.mxu0 0
        %4870 = vmatpush1.bf16.msra.mxu0 %v4855
        %4871 = vmatprep.subr.bf16.mxu0 0
        %4872 = vmatpush1.bf16.msra.mxu0 0
        %4873 = vmatprep.subr.bf16.mxu0 0
        %4874 = vmatpush1.bf16.msra.mxu0 0
        %4875 = vmatprep.subr.bf16.mxu0 0
        %4876 = vmatpush1.bf16.msra.mxu0 0
        %4877 = vmatprep.subr.bf16.mxu0 0
        %4878 = vmatpush1.bf16.msra.mxu0 0
        %4879 = vmatprep.subr.bf16.mxu0 0
        %4880 = vmatpush1.bf16.msra.mxu0 0
        %4881 = vmatprep.subr.bf16.mxu0 0
        %4882 = vmatpush1.bf16.msra.mxu0 0
        %4883 = vmatprep.subr.bf16.mxu0 0
        %4884 = vmatpush1.bf16.msra.mxu0 0
        %4885 = vmatprep.subr.bf16.mxu0 0
        %4886 = vmatpush1.bf16.msra.mxu0 0
        %4887 = vmatprep.subr.bf16.mxu0 0
        %4888 = vmatpush1.bf16.msra.mxu0 0
        %4889 = vmatprep.subr.bf16.mxu0 0
        %4890 = vmatpush1.bf16.msra.mxu0 0
        %4891 = vmatprep.subr.bf16.mxu0 0
        %4892 = vmatpush1.bf16.msra.mxu0 0
        %4893 = vmatprep.subr.bf16.mxu0 0
        %4894 = vmatpush1.bf16.msra.mxu0 0
        %4895 = vmatprep.mubr.bf16.mxu0 0
        %4896 = vmatmul.mubr.bf16.gmra.mrb[0].mxu0 %v4861
        %v4897 = vpop.f32.mrb[0].mxu0
        %v4898 = vadd.f32 %v4835, %v4897
        %v4899 = vpop.f32.mrb[0].mxu0
        %v4900 = vpop.f32.mrb[0].mxu0
        %v4901 = vpop.f32.mrb[0].mxu0
        %4902 = vdwg.mxu0
        %v4904 = vrot.slane %v4898, 6
        %vm4906 = vcmask 1041408
        %v4907 = vsel %vm4906, %v4358, %v4904
        %vm4908 = vcmask 259072
        %4909 = vst.msk [vmem:[%s634] sm:$0x3f] %vm4908, %v4907
      $region112: #{slip_forward.1} parent=103 // pred_fallthru
        _
      %p4910 = scmp.lt.s32.totalorder %s32, 1
      %s4911 = scalar_select %p4910, %s32, 1
      %s4912 = smul.addr %s4911, 8
      %s4913 = scalar_lea.vmem %s21, %s4912
      // Predicated region
      $region113: #{slip_forward.1} parent=103 // pred_check
        %p4914 = pneg %p491
      $region114: #{slip_forward.1} parent=103 // pred_check_branch
        %4916 = sbr.rel (%p4914) target = $region116
      $region115: #{slip_forward.1} parent=103 // pred_region
        _
      $region116: #{slip_forward.1} parent=103 // pred_fallthru
        _
    $region104: #{slip_forward.1} parent=5 // pred_fallthru
      _
    %p4917 = scmp.le.s32.totalorder 2, %s27
    // Predicated region
    $region117: #{slip_forward.1} parent=5 // pred_check
      %p4918 = pneg %p4917
    $region118: #{slip_forward.1} parent=5 // pred_check_branch
      %4920 = sbr.rel (%p4918) target = $region120
    $region119: #{slip_forward.1} parent=5 // pred_region
      %s4921 = ssub.s32 %s27, 2
      // Predicated region
      $region121: #{slip_forward.1} parent=119 // pred_check
        %p4922 = pneg %p497
      $region122: #{slip_forward.1} parent=119 // pred_check_branch
        %4924 = sbr.rel (%p4922) target = $region124
      $region123: #{slip_forward.1} parent=119 // pred_region
        %p4925 = scmp.lt.s32.totalorder %s33, 1
        %s4926 = scalar_select %p4925, %s33, 1
        %s4927 = smul.addr %s4926, 8
        %s4928 = scalar_lea.vmem %s21, %s4927
      $region124: #{slip_forward.1} parent=119 // pred_fallthru
        _
    $region120: #{slip_forward.1} parent=5 // pred_fallthru
      _
  $region6: #{slip_forward.1} parent=0 // loop_footer
    %s31 = sadd.s32 1, %s27
  $region7: #{slip_forward.1} parent=0 // loop_footer_branch
    %26 = sbr.rel target = $region3
  $region8: #{slip_forward.1} parent=0 // loop_exit
    _

</llo_original>
